<compile_context>
chip_gen: v7x
topology: tpu7x:2x2x1
jax: 0.10.0
libtpu: 0.0.40
codegen_flags: <defaults>
</compile_context>

<pallas_src>
import functools

import jax
import jax.numpy as jnp
from jax.experimental import pallas as pl
from jax.experimental.pallas import tpu as pltpu


def _attn_kernel(x_ref, o_ref, *, n_heads, scale, exp_dtype):
    """x_ref / o_ref: (F, L, D) slab holding F independent frames."""
    x = x_ref[...]                                   # native dtype (bf16 stays bf16)
    F, L, D = x.shape
    Dh = D // n_heads

    # Hoisted Q scaling: one full-lane-width VPU multiply over D (matches the
    # PyTorch `queries = queries * self.scale` done in the query dtype).
    xq = x * jnp.asarray(scale, dtype=x.dtype)

    for h in range(n_heads):                         # static unroll, small n_heads
        lo, hi = h * Dh, (h + 1) * Dh
        kh = x[:, :, lo:hi]                          # (F, L, Dh) keys / values
        qh = xq[:, :, lo:hi]                         # (F, L, Dh) scaled queries

        # scores: (F, L, L), f32 accumulation on the MXU.
        s = jnp.einsum("fld,fsd->fls", qh, kh,
                       preferred_element_type=jnp.float32)

        # Numerically-stable, *un-normalized* softmax numerator.  exp runs in
        # exp_dtype (bf16 on v6e/v7x for bf16 inputs -> 2x EUP throughput).
        m = jnp.max(s, axis=-1, keepdims=True)
        p = jnp.exp((s - m).astype(exp_dtype))
        denom = jnp.sum(p, axis=-1, keepdims=True, dtype=jnp.float32)

        # PV matmul with un-normalized probabilities, f32 accumulation.
        o_h = jnp.einsum("fls,fsd->fld", p.astype(x.dtype), kh,
                         preferred_element_type=jnp.float32)

        # Deferred normalization: F*L*Dh multiplies (vs F*L*L), scaled on the
        # f32 accumulator; reciprocal goes to the EUP slot (approx vrcp).
        o_h = o_h * pl.reciprocal(denom, approx=True)

        # Output block doubles as the per-head accumulator (no concat, no extra
        # f32 (F, L, D) temp); HBM writeback DMAs the whole lane-dense block.
        o_ref[:, :, lo:hi] = o_h.astype(o_ref.dtype)


def _tpu_generation_info():
    """Returns (vmem_capacity_bytes, is_v7x, is_v5) with safe fallbacks."""
    vmem_bytes = None
    try:
        vmem_bytes = int(pltpu.get_tpu_info().vmem_capacity_bytes)
    except Exception:
        vmem_bytes = None

    kind = ""
    try:
        kind = jax.devices()[0].device_kind.lower()
    except Exception:
        kind = ""

    is_v5 = "v5" in kind
    is_v7 = "v7" in kind

    if vmem_bytes is None or vmem_bytes <= 0:
        if "v5" in kind or "v6" in kind:
            vmem_bytes = 128 * 1024 * 1024
        else:
            vmem_bytes = 64 * 1024 * 1024            # conservative (v7x per-TC)
    return vmem_bytes, is_v7, is_v5


def vision_transformer_attention_layer(x, n_heads: int = 4):
    """x: (B, T, H, W, D) -> (B, T, H, W, D)."""
    B, T, H, W, D = x.shape
    assert D % n_heads == 0, "dim should be divisible by num_heads"
    Dh = D // n_heads
    L = H * W
    BT = B * T
    scale = Dh ** (-0.5)

    # Pure reshape, no HBM transpose: tokens = H*W spatial positions.
    x2 = x.reshape(BT, L, D)

    itemsize = jnp.dtype(x.dtype).itemsize
    vmem_bytes, is_v7x, is_v5 = _tpu_generation_info()
    # ~40% of VMEM for the frame batch, ~75% as the scoped limit (headroom for
    # double-buffering + compiler temporaries).  128 MiB parts -> ~51/96 MiB,
    # 64 MiB (v7x per-TC) -> ~25/48 MiB.
    budget_bytes = int(vmem_bytes * 0.40)
    vmem_limit = int(vmem_bytes * 0.75)

    # Per-frame VMEM estimate: double-buffered in/out slabs, the scaled-x copy,
    # and ONE head's temporaries (scores + exp + dtype-cast, conservatively f32)
    # plus its f32 output accumulator — per-head temps are dead after the
    # per-head store, so they are not multiplied by n_heads.
    per_frame_bytes = (
        4 * L * D * itemsize        # in + out slabs, double-buffered
        + L * D * itemsize          # x * scale copy
        + 3 * L * L * 4             # one head's s / exp(s-m) / cast temp
        + L * Dh * 4                # one head's f32 output accumulator
    )
    f_cap = max(1, min(BT, budget_bytes // max(per_frame_bytes, 1)))

    # Decouple F from divisibility of BT: pick the number of grid steps, then
    # the smallest F that covers BT in that many steps (minimal padding).
    grid_len = pl.cdiv(BT, f_cap)
    if is_v7x and BT >= 8:
        # Keep the parallel axis even and >= 4 so both TensorCores stay busy
        # and each still has steps to double-buffer across.
        grid_len = max(grid_len, 4)
        if grid_len % 2:
            grid_len += 1
    grid_len = min(grid_len, BT)
    F = pl.cdiv(BT, grid_len)
    BT_pad = grid_len * F
    if BT_pad != BT:
        # Zero pad frames are harmless (softmax of zero scores -> zero output)
        # and are sliced off below.
        x2 = jnp.pad(x2, ((0, BT_pad - BT), (0, 0), (0, 0)))

    # bf16 exp is a win on v6e/v7x (packed EUP); v5e has no bf16 EUP/VPU.
    exp_dtype = jnp.float32
    if x.dtype == jnp.bfloat16 and not is_v5:
        exp_dtype = jnp.bfloat16

    kernel = functools.partial(_attn_kernel, n_heads=n_heads, scale=scale,
                               exp_dtype=exp_dtype)

    out = pl.pallas_call(
        kernel,
        out_shape=jax.ShapeDtypeStruct((BT_pad, L, D), x.dtype),
        grid=(grid_len,),
        in_specs=[pl.BlockSpec((F, L, D), lambda i: (i, 0, 0))],
        out_specs=pl.BlockSpec((F, L, D), lambda i: (i, 0, 0)),
        compiler_params=pltpu.CompilerParams(
            # Frame-batch axis is embarrassingly parallel -> v7x megacore.
            dimension_semantics=("parallel",),
            vmem_limit_bytes=vmem_limit,
        ),
    )(x2)

    if BT_pad != BT:
        out = out[:BT]
    return out.reshape(B, T, H, W, D)


def _reference(x, n_heads: int = 4):
    """Pure-JAX reference of the same semantics (FullAttention, q=k=v=x)."""
    B, T, H, W, D = x.shape
    Dh = D // n_heads
    L = H * W
    xq = x.reshape(B * T, L, n_heads, Dh).transpose(0, 2, 1, 3).astype(jnp.float32)
    scale = Dh ** (-0.5)
    s = jnp.einsum("bhld,bhsd->bhls", xq * scale, xq)
    p = jax.nn.softmax(s, axis=-1)
    o = jnp.einsum("bhls,bhsd->bhld", p, xq)
    return o.transpose(0, 2, 1, 3).reshape(B, T, H, W, D).astype(x.dtype)


if __name__ == "__main__":
    # Small, deterministic example: B=2, T=2, spatial 8x8, d_model=32, 4 heads.
    key = jax.random.PRNGKey(0)
    B, T, H, W, D = 2, 2, 8, 8, 32
    n_heads = 4
    x = jax.random.normal(key, (B, T, H, W, D), dtype=jnp.float32)

    y = vision_transformer_attention_layer(x, n_heads=n_heads)
    y = jax.block_until_ready(y)

    y_ref = _reference(x, n_heads=n_heads)
    assert y.shape == (B, T, H, W, D)
    # Tolerance relaxed vs exact f32 because the softmax denominator uses the
    # EUP approximate reciprocal (rel err ~1e-3).
    assert jnp.allclose(y, y_ref, atol=1e-2, rtol=1e-2), "mismatch vs reference"

    print("KERNEL_OK")
</pallas_src>

<mosaic_0001>
module attributes {stable_mosaic.version = 11 : i64} {
  func.func @_attn_kernel(%arg0: i32, %arg1: memref<4x64x32xf32, #tpu.memory_space<vmem>>, %arg2: memref<4x64x32xf32, #tpu.memory_space<vmem>>) attributes {dimension_semantics = [#tpu.dimension_semantics<parallel>], iteration_bounds = array<i64: 1>, scalar_prefetch = 0 : i64, scratch_operands = 0 : i64, tpu.core_type = #tpu.core_type<tc>, window_params = [{transform_indices = @transform_0, window_bounds = array<i64: 4, 64, 32>}, {transform_indices = @transform_1, window_bounds = array<i64: 4, 64, 32>}]} {
    %c0 = arith.constant 0 : index
    %c0_0 = arith.constant 0 : index
    %c0_1 = arith.constant 0 : index
    %0 = vector.load %arg1[%c0, %c0_0, %c0_1] : memref<4x64x32xf32, #tpu.memory_space<vmem>>, vector<4x64x32xf32>
    %cst = arith.constant 0.353553385 : f32
    %1 = vector.broadcast %cst : f32 to vector<4x64x32xf32>
    %2 = arith.mulf %0, %1 : vector<4x64x32xf32>
    %3 = vector.extract_strided_slice %0 {offsets = [0, 0, 0], sizes = [4, 64, 8], strides = [1, 1, 1]} : vector<4x64x32xf32> to vector<4x64x8xf32>
    %4 = vector.extract_strided_slice %2 {offsets = [0, 0, 0], sizes = [4, 64, 8], strides = [1, 1, 1]} : vector<4x64x32xf32> to vector<4x64x8xf32>
    "tpu.trace_start"() <{level = 10 : i32, message = "fld,fsd->fls"}> : () -> ()
    %cst_2 = arith.constant dense<0.000000e+00> : vector<4x64x64xf32>
    %5 = tpu.matmul %4, %3, %cst_2 {dimension_numbers = #tpu.dot_dimension_numbers<[2], [2], [1], [1], [0, 0, 0, 1, 1, 1], [0], [0]>} : vector<4x64x8xf32>, vector<4x64x8xf32>, vector<4x64x64xf32> -> vector<4x64x64xf32>
    "tpu.trace_stop"() : () -> ()
    %cst_3 = arith.constant dense<0xFF800000> : vector<4x64xf32>
    %6 = vector.multi_reduction <maximumf>, %5, %cst_3 [2] : vector<4x64x64xf32> to vector<4x64xf32>
    %7 = vector.shape_cast %6 : vector<4x64xf32> to vector<4x64x1xf32>
    %8 = vector.broadcast %7 : vector<4x64x1xf32> to vector<4x64x64xf32>
    %9 = arith.subf %5, %8 : vector<4x64x64xf32>
    %10 = math.exp %9 : vector<4x64x64xf32>
    %cst_4 = arith.constant dense<0.000000e+00> : vector<4x64xf32>
    %11 = vector.multi_reduction <add>, %10, %cst_4 [2] : vector<4x64x64xf32> to vector<4x64xf32>
    %12 = vector.shape_cast %11 : vector<4x64xf32> to vector<4x64x1xf32>
    "tpu.trace_start"() <{level = 10 : i32, message = "fls,fsd->fld"}> : () -> ()
    %cst_5 = arith.constant dense<0.000000e+00> : vector<4x64x8xf32>
    %13 = tpu.matmul %10, %3, %cst_5 {dimension_numbers = #tpu.dot_dimension_numbers<[2], [1], [1], [2], [0, 0, 0, 1, 1, 2], [0], [0]>} : vector<4x64x64xf32>, vector<4x64x8xf32>, vector<4x64x8xf32> -> vector<4x64x8xf32>
    "tpu.trace_stop"() : () -> ()
    %14 = tpu.reciprocal %12 {approx = true} : vector<4x64x1xf32> -> vector<4x64x1xf32>
    %15 = vector.broadcast %14 : vector<4x64x1xf32> to vector<4x64x8xf32>
    %16 = arith.mulf %13, %15 : vector<4x64x8xf32>
    %c0_6 = arith.constant 0 : index
    %c0_7 = arith.constant 0 : index
    %c0_8 = arith.constant 0 : index
    %17 = vector.load %arg2[%c0_6, %c0_7, %c0_8] : memref<4x64x32xf32, #tpu.memory_space<vmem>>, vector<4x64x8xf32>
    tpu.vector_store %arg2[%c0_6, %c0_7, %c0_8], %16 {strides = array<i32>} : memref<4x64x32xf32, #tpu.memory_space<vmem>>, vector<4x64x8xf32>,
    %18 = vector.extract_strided_slice %0 {offsets = [0, 0, 8], sizes = [4, 64, 8], strides = [1, 1, 1]} : vector<4x64x32xf32> to vector<4x64x8xf32>
    %19 = vector.extract_strided_slice %2 {offsets = [0, 0, 8], sizes = [4, 64, 8], strides = [1, 1, 1]} : vector<4x64x32xf32> to vector<4x64x8xf32>
    "tpu.trace_start"() <{level = 10 : i32, message = "fld,fsd->fls"}> : () -> ()
    %cst_9 = arith.constant dense<0.000000e+00> : vector<4x64x64xf32>
    %20 = tpu.matmul %19, %18, %cst_9 {dimension_numbers = #tpu.dot_dimension_numbers<[2], [2], [1], [1], [0, 0, 0, 1, 1, 1], [0], [0]>} : vector<4x64x8xf32>, vector<4x64x8xf32>, vector<4x64x64xf32> -> vector<4x64x64xf32>
    "tpu.trace_stop"() : () -> ()
    %cst_10 = arith.constant dense<0xFF800000> : vector<4x64xf32>
    %21 = vector.multi_reduction <maximumf>, %20, %cst_10 [2] : vector<4x64x64xf32> to vector<4x64xf32>
    %22 = vector.shape_cast %21 : vector<4x64xf32> to vector<4x64x1xf32>
    %23 = vector.broadcast %22 : vector<4x64x1xf32> to vector<4x64x64xf32>
    %24 = arith.subf %20, %23 : vector<4x64x64xf32>
    %25 = math.exp %24 : vector<4x64x64xf32>
    %cst_11 = arith.constant dense<0.000000e+00> : vector<4x64xf32>
    %26 = vector.multi_reduction <add>, %25, %cst_11 [2] : vector<4x64x64xf32> to vector<4x64xf32>
    %27 = vector.shape_cast %26 : vector<4x64xf32> to vector<4x64x1xf32>
    "tpu.trace_start"() <{level = 10 : i32, message = "fls,fsd->fld"}> : () -> ()
    %cst_12 = arith.constant dense<0.000000e+00> : vector<4x64x8xf32>
    %28 = tpu.matmul %25, %18, %cst_12 {dimension_numbers = #tpu.dot_dimension_numbers<[2], [1], [1], [2], [0, 0, 0, 1, 1, 2], [0], [0]>} : vector<4x64x64xf32>, vector<4x64x8xf32>, vector<4x64x8xf32> -> vector<4x64x8xf32>
    "tpu.trace_stop"() : () -> ()
    %29 = tpu.reciprocal %27 {approx = true} : vector<4x64x1xf32> -> vector<4x64x1xf32>
    %30 = vector.broadcast %29 : vector<4x64x1xf32> to vector<4x64x8xf32>
    %31 = arith.mulf %28, %30 : vector<4x64x8xf32>
    %c0_13 = arith.constant 0 : index
    %c0_14 = arith.constant 0 : index
    %c8 = arith.constant 8 : index
    %32 = vector.load %arg2[%c0_13, %c0_14, %c8] : memref<4x64x32xf32, #tpu.memory_space<vmem>>, vector<4x64x8xf32>
    tpu.vector_store %arg2[%c0_13, %c0_14, %c8], %31 {strides = array<i32>} : memref<4x64x32xf32, #tpu.memory_space<vmem>>, vector<4x64x8xf32>,
    %33 = vector.extract_strided_slice %0 {offsets = [0, 0, 16], sizes = [4, 64, 8], strides = [1, 1, 1]} : vector<4x64x32xf32> to vector<4x64x8xf32>
    %34 = vector.extract_strided_slice %2 {offsets = [0, 0, 16], sizes = [4, 64, 8], strides = [1, 1, 1]} : vector<4x64x32xf32> to vector<4x64x8xf32>
    "tpu.trace_start"() <{level = 10 : i32, message = "fld,fsd->fls"}> : () -> ()
    %cst_15 = arith.constant dense<0.000000e+00> : vector<4x64x64xf32>
    %35 = tpu.matmul %34, %33, %cst_15 {dimension_numbers = #tpu.dot_dimension_numbers<[2], [2], [1], [1], [0, 0, 0, 1, 1, 1], [0], [0]>} : vector<4x64x8xf32>, vector<4x64x8xf32>, vector<4x64x64xf32> -> vector<4x64x64xf32>
    "tpu.trace_stop"() : () -> ()
    %cst_16 = arith.constant dense<0xFF800000> : vector<4x64xf32>
    %36 = vector.multi_reduction <maximumf>, %35, %cst_16 [2] : vector<4x64x64xf32> to vector<4x64xf32>
    %37 = vector.shape_cast %36 : vector<4x64xf32> to vector<4x64x1xf32>
    %38 = vector.broadcast %37 : vector<4x64x1xf32> to vector<4x64x64xf32>
    %39 = arith.subf %35, %38 : vector<4x64x64xf32>
    %40 = math.exp %39 : vector<4x64x64xf32>
    %cst_17 = arith.constant dense<0.000000e+00> : vector<4x64xf32>
    %41 = vector.multi_reduction <add>, %40, %cst_17 [2] : vector<4x64x64xf32> to vector<4x64xf32>
    %42 = vector.shape_cast %41 : vector<4x64xf32> to vector<4x64x1xf32>
    "tpu.trace_start"() <{level = 10 : i32, message = "fls,fsd->fld"}> : () -> ()
    %cst_18 = arith.constant dense<0.000000e+00> : vector<4x64x8xf32>
    %43 = tpu.matmul %40, %33, %cst_18 {dimension_numbers = #tpu.dot_dimension_numbers<[2], [1], [1], [2], [0, 0, 0, 1, 1, 2], [0], [0]>} : vector<4x64x64xf32>, vector<4x64x8xf32>, vector<4x64x8xf32> -> vector<4x64x8xf32>
    "tpu.trace_stop"() : () -> ()
    %44 = tpu.reciprocal %42 {approx = true} : vector<4x64x1xf32> -> vector<4x64x1xf32>
    %45 = vector.broadcast %44 : vector<4x64x1xf32> to vector<4x64x8xf32>
    %46 = arith.mulf %43, %45 : vector<4x64x8xf32>
    %c0_19 = arith.constant 0 : index
    %c0_20 = arith.constant 0 : index
    %c16 = arith.constant 16 : index
    %47 = vector.load %arg2[%c0_19, %c0_20, %c16] : memref<4x64x32xf32, #tpu.memory_space<vmem>>, vector<4x64x8xf32>
    tpu.vector_store %arg2[%c0_19, %c0_20, %c16], %46 {strides = array<i32>} : memref<4x64x32xf32, #tpu.memory_space<vmem>>, vector<4x64x8xf32>,
    %48 = vector.extract_strided_slice %0 {offsets = [0, 0, 24], sizes = [4, 64, 8], strides = [1, 1, 1]} : vector<4x64x32xf32> to vector<4x64x8xf32>
    %49 = vector.extract_strided_slice %2 {offsets = [0, 0, 24], sizes = [4, 64, 8], strides = [1, 1, 1]} : vector<4x64x32xf32> to vector<4x64x8xf32>
    "tpu.trace_start"() <{level = 10 : i32, message = "fld,fsd->fls"}> : () -> ()
    %cst_21 = arith.constant dense<0.000000e+00> : vector<4x64x64xf32>
    %50 = tpu.matmul %49, %48, %cst_21 {dimension_numbers = #tpu.dot_dimension_numbers<[2], [2], [1], [1], [0, 0, 0, 1, 1, 1], [0], [0]>} : vector<4x64x8xf32>, vector<4x64x8xf32>, vector<4x64x64xf32> -> vector<4x64x64xf32>
    "tpu.trace_stop"() : () -> ()
    %cst_22 = arith.constant dense<0xFF800000> : vector<4x64xf32>
    %51 = vector.multi_reduction <maximumf>, %50, %cst_22 [2] : vector<4x64x64xf32> to vector<4x64xf32>
    %52 = vector.shape_cast %51 : vector<4x64xf32> to vector<4x64x1xf32>
    %53 = vector.broadcast %52 : vector<4x64x1xf32> to vector<4x64x64xf32>
    %54 = arith.subf %50, %53 : vector<4x64x64xf32>
    %55 = math.exp %54 : vector<4x64x64xf32>
    %cst_23 = arith.constant dense<0.000000e+00> : vector<4x64xf32>
    %56 = vector.multi_reduction <add>, %55, %cst_23 [2] : vector<4x64x64xf32> to vector<4x64xf32>
    %57 = vector.shape_cast %56 : vector<4x64xf32> to vector<4x64x1xf32>
    "tpu.trace_start"() <{level = 10 : i32, message = "fls,fsd->fld"}> : () -> ()
    %cst_24 = arith.constant dense<0.000000e+00> : vector<4x64x8xf32>
    %58 = tpu.matmul %55, %48, %cst_24 {dimension_numbers = #tpu.dot_dimension_numbers<[2], [1], [1], [2], [0, 0, 0, 1, 1, 2], [0], [0]>} : vector<4x64x64xf32>, vector<4x64x8xf32>, vector<4x64x8xf32> -> vector<4x64x8xf32>
    "tpu.trace_stop"() : () -> ()
    %59 = tpu.reciprocal %57 {approx = true} : vector<4x64x1xf32> -> vector<4x64x1xf32>
    %60 = vector.broadcast %59 : vector<4x64x1xf32> to vector<4x64x8xf32>
    %61 = arith.mulf %58, %60 : vector<4x64x8xf32>
    %c0_25 = arith.constant 0 : index
    %c0_26 = arith.constant 0 : index
    %c24 = arith.constant 24 : index
    %62 = vector.load %arg2[%c0_25, %c0_26, %c24] : memref<4x64x32xf32, #tpu.memory_space<vmem>>, vector<4x64x8xf32>
    tpu.vector_store %arg2[%c0_25, %c0_26, %c24], %61 {strides = array<i32>} : memref<4x64x32xf32, #tpu.memory_space<vmem>>, vector<4x64x8xf32>,
    return
  }
  func.func @transform_0(%arg0: i32) -> (i32, i32, i32) {
    %c0_i32 = arith.constant 0 : i32
    %c0_i32_0 = arith.constant 0 : i32
    %c0_i32_1 = arith.constant 0 : i32
    return %arg0, %c0_i32, %c0_i32_0 : i32, i32, i32
  }
  func.func @transform_1(%arg0: i32) -> (i32, i32, i32) {
    %c0_i32 = arith.constant 0 : i32
    %c0_i32_0 = arith.constant 0 : i32
    %c0_i32_1 = arith.constant 0 : i32
    return %arg0, %c0_i32, %c0_i32_0 : i32, i32, i32
  }
}

</mosaic_0001>

<llo_original>
// kernel: tpu_custom_call.1
$region0: #{tpu_custom_call.1}
  #allocation0 [shape = 'u32[]', space=smem, size = 0x4, offset = 0x4, fixed_abs, tag = 'smem constant byte address 0x4 - core index']
  #allocation1 [shape = 'u32[144,128]{1,0:T(1,128)}', space=vmem, size = 0x12000, scoped, tag = 'internal scratch']
  %s0 = inlined_call_operand.vmem [shape: f32[4,64,32], index: 0, kind: input, shape index: {}]
  %s1 = inlined_call_operand.vmem [shape: f32[4,64,32], index: 1, kind: output, shape index: {}]
  %s2 = sld [smem:[#allocation0]]
  $region14: #{tpu_custom_call.1} parent=0
    _
  %s4 = ssub.s32 1, %s2
  %s5 = scalar_select 0, %s4, %s2
  // Predicated region
  $region2: #{tpu_custom_call.1} parent=0 // pred_check
    _
  $region3: #{tpu_custom_call.1} parent=0 // pred_check_branch
    %7 = sbr.rel (0) target = $region5
  $region4: #{tpu_custom_call.1} parent=0 // pred_region
    _
  $region5: #{tpu_custom_call.1} parent=0 // pred_fallthru
    _
  %v8 = vld [vmem:[%s0] sm:$0xff]
  %v9 = vld [vmem:[%s0 + $0x8] sm:$0xff]
  %v10 = vld [vmem:[%s0 + $0x10] sm:$0xff]
  %v11 = vld [vmem:[%s0 + $0x18] sm:$0xff]
  %v12 = vld [vmem:[%s0 + $0x20] sm:$0xff]
  %v13 = vld [vmem:[%s0 + $0x28] sm:$0xff]
  %v14 = vld [vmem:[%s0 + $0x30] sm:$0xff]
  %v15 = vld [vmem:[%s0 + $0x38] sm:$0xff]
  %v16 = vld [vmem:[%s0 + $0x40] sm:$0xff]
  %v17 = vld [vmem:[%s0 + $0x48] sm:$0xff]
  %v18 = vld [vmem:[%s0 + $0x50] sm:$0xff]
  %v19 = vld [vmem:[%s0 + $0x58] sm:$0xff]
  %v20 = vld [vmem:[%s0 + $0x60] sm:$0xff]
  %v21 = vld [vmem:[%s0 + $0x68] sm:$0xff]
  %v22 = vld [vmem:[%s0 + $0x70] sm:$0xff]
  %v23 = vld [vmem:[%s0 + $0x78] sm:$0xff]
  %v24 = vld [vmem:[%s0 + $0x80] sm:$0xff]
  %v25 = vld [vmem:[%s0 + $0x88] sm:$0xff]
  %v26 = vld [vmem:[%s0 + $0x90] sm:$0xff]
  %v27 = vld [vmem:[%s0 + $0x98] sm:$0xff]
  %v28 = vld [vmem:[%s0 + $0xa0] sm:$0xff]
  %v29 = vld [vmem:[%s0 + $0xa8] sm:$0xff]
  %v30 = vld [vmem:[%s0 + $0xb0] sm:$0xff]
  %v31 = vld [vmem:[%s0 + $0xb8] sm:$0xff]
  %v32 = vld [vmem:[%s0 + $0xc0] sm:$0xff]
  %v33 = vld [vmem:[%s0 + $0xc8] sm:$0xff]
  %v34 = vld [vmem:[%s0 + $0xd0] sm:$0xff]
  %v35 = vld [vmem:[%s0 + $0xd8] sm:$0xff]
  %v36 = vld [vmem:[%s0 + $0xe0] sm:$0xff]
  %v37 = vld [vmem:[%s0 + $0xe8] sm:$0xff]
  %v38 = vld [vmem:[%s0 + $0xf0] sm:$0xff]
  %v39 = vld [vmem:[%s0 + $0xf8] sm:$0xff]
  %v40 = vmul.f32 %v8, 0.35355338
  %v41 = vmul.f32 %v9, 0.35355338
  %v42 = vmul.f32 %v10, 0.35355338
  %v43 = vmul.f32 %v11, 0.35355338
  %v44 = vmul.f32 %v12, 0.35355338
  %v45 = vmul.f32 %v13, 0.35355338
  %v46 = vmul.f32 %v14, 0.35355338
  %v47 = vmul.f32 %v15, 0.35355338
  %v48 = vmul.f32 %v16, 0.35355338
  %v49 = vmul.f32 %v17, 0.35355338
  %v50 = vmul.f32 %v18, 0.35355338
  %v51 = vmul.f32 %v19, 0.35355338
  %v52 = vmul.f32 %v20, 0.35355338
  %v53 = vmul.f32 %v21, 0.35355338
  %v54 = vmul.f32 %v22, 0.35355338
  %v55 = vmul.f32 %v23, 0.35355338
  %v56 = vmul.f32 %v24, 0.35355338
  %v57 = vmul.f32 %v25, 0.35355338
  %v58 = vmul.f32 %v26, 0.35355338
  %v59 = vmul.f32 %v27, 0.35355338
  %v60 = vmul.f32 %v28, 0.35355338
  %v61 = vmul.f32 %v29, 0.35355338
  %v62 = vmul.f32 %v30, 0.35355338
  %v63 = vmul.f32 %v31, 0.35355338
  %v64 = vmul.f32 %v32, 0.35355338
  %v65 = vmul.f32 %v33, 0.35355338
  %v66 = vmul.f32 %v34, 0.35355338
  %v67 = vmul.f32 %v35, 0.35355338
  %v68 = vmul.f32 %v36, 0.35355338
  %v69 = vmul.f32 %v37, 0.35355338
  %v70 = vmul.f32 %v38, 0.35355338
  %v71 = vmul.f32 %v39, 0.35355338
  %vm72 = vcmask 64512
  %v74 = vsel %vm72, %v40, 0
  %v77 = vsel %vm72, %v41, 0
  %v80 = vsel %vm72, %v42, 0
  %v83 = vsel %vm72, %v43, 0
  %v86 = vsel %vm72, %v44, 0
  %v89 = vsel %vm72, %v45, 0
  %v92 = vsel %vm72, %v46, 0
  %v95 = vsel %vm72, %v47, 0
  %v98 = vsel %vm72, %v8, 0
  %v101 = vsel %vm72, %v9, 0
  %v104 = vsel %vm72, %v10, 0
  %v107 = vsel %vm72, %v11, 0
  %v110 = vsel %vm72, %v12, 0
  %v113 = vsel %vm72, %v13, 0
  %v116 = vsel %vm72, %v14, 0
  %v119 = vsel %vm72, %v15, 0
  %121 = vmatprep.subr.mxu0 0.0
  %122 = vmatpush1.xpose.msra.mxu0 %v98
  %123 = vmatprep.subr.mxu0 0.0
  %124 = vmatpush1.xpose.msra.mxu0 %v101
  %125 = vmatprep.subr.mxu0 0.0
  %126 = vmatpush1.xpose.msra.mxu0 %v104
  %127 = vmatprep.subr.mxu0 0.0
  %128 = vmatpush1.xpose.msra.mxu0 %v107
  %129 = vmatprep.subr.mxu0 0.0
  %130 = vmatpush1.xpose.msra.mxu0 %v110
  %131 = vmatprep.subr.mxu0 0.0
  %132 = vmatpush1.xpose.msra.mxu0 %v113
  %133 = vmatprep.subr.mxu0 0.0
  %134 = vmatpush1.xpose.msra.mxu0 %v116
  %135 = vmatprep.subr.mxu0 0.0
  %136 = vmatpush1.xpose.msra.mxu0 %v119
  %137 = vmatprep.subr.mxu0 0.0
  %138 = vmatpush1.xpose.msra.mxu0 0.0
  %139 = vmatprep.subr.mxu0 0.0
  %140 = vmatpush1.xpose.msra.mxu0 0.0
  %141 = vmatprep.subr.mxu0 0.0
  %142 = vmatpush1.xpose.msra.mxu0 0.0
  %143 = vmatprep.subr.mxu0 0.0
  %144 = vmatpush1.xpose.msra.mxu0 0.0
  %145 = vmatprep.subr.mxu0 0.0
  %146 = vmatpush1.xpose.msra.mxu0 0.0
  %147 = vmatprep.subr.mxu0 0.0
  %148 = vmatpush1.xpose.msra.mxu0 0.0
  %149 = vmatprep.subr.mxu0 0.0
  %150 = vmatpush1.xpose.msra.mxu0 0.0
  %151 = vmatprep.subr.mxu0 0.0
  %152 = vmatpush1.xpose.msra.mxu0 0.0
  %153 = vmatprep.subr.mxu0 0.0
  %154 = vmatpush1.xpose.msra.mxu0 0.0
  %155 = vmatprep.subr.mxu0 0.0
  %156 = vmatpush1.xpose.msra.mxu0 0.0
  %157 = vmatprep.subr.mxu0 0.0
  %158 = vmatpush1.xpose.msra.mxu0 0.0
  %159 = vmatprep.subr.mxu0 0.0
  %160 = vmatpush1.xpose.msra.mxu0 0.0
  %161 = vmatprep.subr.mxu0 0.0
  %162 = vmatpush1.xpose.msra.mxu0 0.0
  %163 = vmatprep.subr.mxu0 0.0
  %164 = vmatpush1.xpose.msra.mxu0 0.0
  %165 = vmatprep.subr.mxu0 0.0
  %166 = vmatpush1.xpose.msra.mxu0 0.0
  %167 = vmatprep.subr.mxu0 0.0
  %168 = vmatpush1.xpose.msra.mxu0 0.0
  %169 = vmatprep.subr.mxu0 0.0
  %170 = vmatpush1.xpose.msra.mxu0 0.0
  %171 = vmatprep.subr.mxu0 0.0
  %172 = vmatpush1.xpose.msra.mxu0 0.0
  %173 = vmatprep.subr.mxu0 0.0
  %174 = vmatpush1.xpose.msra.mxu0 0.0
  %175 = vmatprep.subr.mxu0 0.0
  %176 = vmatpush1.xpose.msra.mxu0 0.0
  %177 = vmatprep.subr.mxu0 0.0
  %178 = vmatpush1.xpose.msra.mxu0 0.0
  %179 = vmatprep.subr.mxu0 0.0
  %180 = vmatpush1.xpose.msra.mxu0 0.0
  %181 = vmatprep.subr.mxu0 0.0
  %182 = vmatpush1.xpose.msra.mxu0 0.0
  %183 = vmatprep.subr.mxu0 0.0
  %184 = vmatpush1.xpose.msra.mxu0 0.0
  %185 = vmatprep.mubr.f32.mxu0 0.0
  %186 = vmatmul.mubr.f32.gmra.mrb[0].mxu0 %v74
  %v187 = vpop.f32.mrb[0].mxu0
  %v188 = vadd.f32 0.0, %v187
  %v189 = vpop.f32.mrb[0].mxu0
  %190 = vmatprep.mubr.f32.mxu0 0.0
  %191 = vmatmul.mubr.f32.gmra.mrb[0].mxu0 %v77
  %v192 = vpop.f32.mrb[0].mxu0
  %v193 = vadd.f32 0.0, %v192
  %v194 = vpop.f32.mrb[0].mxu0
  %195 = vmatprep.mubr.f32.mxu0 0.0
  %196 = vmatmul.mubr.f32.gmra.mrb[0].mxu0 %v80
  %v197 = vpop.f32.mrb[0].mxu0
  %v198 = vadd.f32 0.0, %v197
  %v199 = vpop.f32.mrb[0].mxu0
  %200 = vmatprep.mubr.f32.mxu0 0.0
  %201 = vmatmul.mubr.f32.gmra.mrb[0].mxu0 %v83
  %v202 = vpop.f32.mrb[0].mxu0
  %v203 = vadd.f32 0.0, %v202
  %v204 = vpop.f32.mrb[0].mxu0
  %205 = vmatprep.mubr.f32.mxu0 0.0
  %206 = vmatmul.mubr.f32.gmra.mrb[0].mxu0 %v86
  %v207 = vpop.f32.mrb[0].mxu0
  %v208 = vadd.f32 0.0, %v207
  %v209 = vpop.f32.mrb[0].mxu0
  %210 = vmatprep.mubr.f32.mxu0 0.0
  %211 = vmatmul.mubr.f32.gmra.mrb[0].mxu0 %v89
  %v212 = vpop.f32.mrb[0].mxu0
  %v213 = vadd.f32 0.0, %v212
  %v214 = vpop.f32.mrb[0].mxu0
  %215 = vmatprep.mubr.f32.mxu0 0.0
  %216 = vmatmul.mubr.f32.gmra.mrb[0].mxu0 %v92
  %v217 = vpop.f32.mrb[0].mxu0
  %v218 = vadd.f32 0.0, %v217
  %v219 = vpop.f32.mrb[0].mxu0
  %220 = vmatprep.mubr.f32.mxu0 0.0
  %221 = vmatmul.mubr.f32.gmra.mrb[0].mxu0 %v95
  %v222 = vpop.f32.mrb[0].mxu0
  %v223 = vadd.f32 0.0, %v222
  %v224 = vpop.f32.mrb[0].mxu0
  %225 = vdwg.mxu0
  %v227 = vsel %vm72, %v48, 0
  %v230 = vsel %vm72, %v49, 0
  %v233 = vsel %vm72, %v50, 0
  %v236 = vsel %vm72, %v51, 0
  %v239 = vsel %vm72, %v52, 0
  %v242 = vsel %vm72, %v53, 0
  %v245 = vsel %vm72, %v54, 0
  %v248 = vsel %vm72, %v55, 0
  %v251 = vsel %vm72, %v16, 0
  %v254 = vsel %vm72, %v17, 0
  %v257 = vsel %vm72, %v18, 0
  %v260 = vsel %vm72, %v19, 0
  %v263 = vsel %vm72, %v20, 0
  %v266 = vsel %vm72, %v21, 0
  %v269 = vsel %vm72, %v22, 0
  %v272 = vsel %vm72, %v23, 0
  %274 = vmatprep.subr.mxu0 0.0
  %275 = vmatpush1.xpose.msra.mxu0 %v251
  %276 = vmatprep.subr.mxu0 0.0
  %277 = vmatpush1.xpose.msra.mxu0 %v254
  %278 = vmatprep.subr.mxu0 0.0
  %279 = vmatpush1.xpose.msra.mxu0 %v257
  %280 = vmatprep.subr.mxu0 0.0
  %281 = vmatpush1.xpose.msra.mxu0 %v260
  %282 = vmatprep.subr.mxu0 0.0
  %283 = vmatpush1.xpose.msra.mxu0 %v263
  %284 = vmatprep.subr.mxu0 0.0
  %285 = vmatpush1.xpose.msra.mxu0 %v266
  %286 = vmatprep.subr.mxu0 0.0
  %287 = vmatpush1.xpose.msra.mxu0 %v269
  %288 = vmatprep.subr.mxu0 0.0
  %289 = vmatpush1.xpose.msra.mxu0 %v272
  %290 = vmatprep.subr.mxu0 0.0
  %291 = vmatpush1.xpose.msra.mxu0 0.0
  %292 = vmatprep.subr.mxu0 0.0
  %293 = vmatpush1.xpose.msra.mxu0 0.0
  %294 = vmatprep.subr.mxu0 0.0
  %295 = vmatpush1.xpose.msra.mxu0 0.0
  %296 = vmatprep.subr.mxu0 0.0
  %297 = vmatpush1.xpose.msra.mxu0 0.0
  %298 = vmatprep.subr.mxu0 0.0
  %299 = vmatpush1.xpose.msra.mxu0 0.0
  %300 = vmatprep.subr.mxu0 0.0
  %301 = vmatpush1.xpose.msra.mxu0 0.0
  %302 = vmatprep.subr.mxu0 0.0
  %303 = vmatpush1.xpose.msra.mxu0 0.0
  %304 = vmatprep.subr.mxu0 0.0
  %305 = vmatpush1.xpose.msra.mxu0 0.0
  %306 = vmatprep.subr.mxu0 0.0
  %307 = vmatpush1.xpose.msra.mxu0 0.0
  %308 = vmatprep.subr.mxu0 0.0
  %309 = vmatpush1.xpose.msra.mxu0 0.0
  %310 = vmatprep.subr.mxu0 0.0
  %311 = vmatpush1.xpose.msra.mxu0 0.0
  %312 = vmatprep.subr.mxu0 0.0
  %313 = vmatpush1.xpose.msra.mxu0 0.0
  %314 = vmatprep.subr.mxu0 0.0
  %315 = vmatpush1.xpose.msra.mxu0 0.0
  %316 = vmatprep.subr.mxu0 0.0
  %317 = vmatpush1.xpose.msra.mxu0 0.0
  %318 = vmatprep.subr.mxu0 0.0
  %319 = vmatpush1.xpose.msra.mxu0 0.0
  %320 = vmatprep.subr.mxu0 0.0
  %321 = vmatpush1.xpose.msra.mxu0 0.0
  %322 = vmatprep.subr.mxu0 0.0
  %323 = vmatpush1.xpose.msra.mxu0 0.0
  %324 = vmatprep.subr.mxu0 0.0
  %325 = vmatpush1.xpose.msra.mxu0 0.0
  %326 = vmatprep.subr.mxu0 0.0
  %327 = vmatpush1.xpose.msra.mxu0 0.0
  %328 = vmatprep.subr.mxu0 0.0
  %329 = vmatpush1.xpose.msra.mxu0 0.0
  %330 = vmatprep.subr.mxu0 0.0
  %331 = vmatpush1.xpose.msra.mxu0 0.0
  %332 = vmatprep.subr.mxu0 0.0
  %333 = vmatpush1.xpose.msra.mxu0 0.0
  %334 = vmatprep.subr.mxu0 0.0
  %335 = vmatpush1.xpose.msra.mxu0 0.0
  %336 = vmatprep.subr.mxu0 0.0
  %337 = vmatpush1.xpose.msra.mxu0 0.0
  %338 = vmatprep.mubr.f32.mxu0 0.0
  %339 = vmatmul.mubr.f32.gmra.mrb[0].mxu0 %v227
  %v340 = vpop.f32.mrb[0].mxu0
  %v341 = vadd.f32 0.0, %v340
  %v342 = vpop.f32.mrb[0].mxu0
  %343 = vmatprep.mubr.f32.mxu0 0.0
  %344 = vmatmul.mubr.f32.gmra.mrb[0].mxu0 %v230
  %v345 = vpop.f32.mrb[0].mxu0
  %v346 = vadd.f32 0.0, %v345
  %v347 = vpop.f32.mrb[0].mxu0
  %348 = vmatprep.mubr.f32.mxu0 0.0
  %349 = vmatmul.mubr.f32.gmra.mrb[0].mxu0 %v233
  %v350 = vpop.f32.mrb[0].mxu0
  %v351 = vadd.f32 0.0, %v350
  %v352 = vpop.f32.mrb[0].mxu0
  %353 = vmatprep.mubr.f32.mxu0 0.0
  %354 = vmatmul.mubr.f32.gmra.mrb[0].mxu0 %v236
  %v355 = vpop.f32.mrb[0].mxu0
  %v356 = vadd.f32 0.0, %v355
  %v357 = vpop.f32.mrb[0].mxu0
  %358 = vmatprep.mubr.f32.mxu0 0.0
  %359 = vmatmul.mubr.f32.gmra.mrb[0].mxu0 %v239
  %v360 = vpop.f32.mrb[0].mxu0
  %v361 = vadd.f32 0.0, %v360
  %v362 = vpop.f32.mrb[0].mxu0
  %363 = vmatprep.mubr.f32.mxu0 0.0
  %364 = vmatmul.mubr.f32.gmra.mrb[0].mxu0 %v242
  %v365 = vpop.f32.mrb[0].mxu0
  %v366 = vadd.f32 0.0, %v365
  %v367 = vpop.f32.mrb[0].mxu0
  %368 = vmatprep.mubr.f32.mxu0 0.0
  %369 = vmatmul.mubr.f32.gmra.mrb[0].mxu0 %v245
  %v370 = vpop.f32.mrb[0].mxu0
  %v371 = vadd.f32 0.0, %v370
  %v372 = vpop.f32.mrb[0].mxu0
  %373 = vmatprep.mubr.f32.mxu0 0.0
  %374 = vmatmul.mubr.f32.gmra.mrb[0].mxu0 %v248
  %v375 = vpop.f32.mrb[0].mxu0
  %v376 = vadd.f32 0.0, %v375
  %v377 = vpop.f32.mrb[0].mxu0
  %378 = vdwg.mxu0
  %v380 = vsel %vm72, %v56, 0
  %v383 = vsel %vm72, %v57, 0
  %v386 = vsel %vm72, %v58, 0
  %v389 = vsel %vm72, %v59, 0
  %v392 = vsel %vm72, %v60, 0
  %v395 = vsel %vm72, %v61, 0
  %v398 = vsel %vm72, %v62, 0
  %v401 = vsel %vm72, %v63, 0
  %v404 = vsel %vm72, %v24, 0
  %v407 = vsel %vm72, %v25, 0
  %v410 = vsel %vm72, %v26, 0
  %v413 = vsel %vm72, %v27, 0
  %v416 = vsel %vm72, %v28, 0
  %v419 = vsel %vm72, %v29, 0
  %v422 = vsel %vm72, %v30, 0
  %v425 = vsel %vm72, %v31, 0
  %427 = vmatprep.subr.mxu0 0.0
  %428 = vmatpush1.xpose.msra.mxu0 %v404
  %429 = vmatprep.subr.mxu0 0.0
  %430 = vmatpush1.xpose.msra.mxu0 %v407
  %431 = vmatprep.subr.mxu0 0.0
  %432 = vmatpush1.xpose.msra.mxu0 %v410
  %433 = vmatprep.subr.mxu0 0.0
  %434 = vmatpush1.xpose.msra.mxu0 %v413
  %435 = vmatprep.subr.mxu0 0.0
  %436 = vmatpush1.xpose.msra.mxu0 %v416
  %437 = vmatprep.subr.mxu0 0.0
  %438 = vmatpush1.xpose.msra.mxu0 %v419
  %439 = vmatprep.subr.mxu0 0.0
  %440 = vmatpush1.xpose.msra.mxu0 %v422
  %441 = vmatprep.subr.mxu0 0.0
  %442 = vmatpush1.xpose.msra.mxu0 %v425
  %443 = vmatprep.subr.mxu0 0.0
  %444 = vmatpush1.xpose.msra.mxu0 0.0
  %445 = vmatprep.subr.mxu0 0.0
  %446 = vmatpush1.xpose.msra.mxu0 0.0
  %447 = vmatprep.subr.mxu0 0.0
  %448 = vmatpush1.xpose.msra.mxu0 0.0
  %449 = vmatprep.subr.mxu0 0.0
  %450 = vmatpush1.xpose.msra.mxu0 0.0
  %451 = vmatprep.subr.mxu0 0.0
  %452 = vmatpush1.xpose.msra.mxu0 0.0
  %453 = vmatprep.subr.mxu0 0.0
  %454 = vmatpush1.xpose.msra.mxu0 0.0
  %455 = vmatprep.subr.mxu0 0.0
  %456 = vmatpush1.xpose.msra.mxu0 0.0
  %457 = vmatprep.subr.mxu0 0.0
  %458 = vmatpush1.xpose.msra.mxu0 0.0
  %459 = vmatprep.subr.mxu0 0.0
  %460 = vmatpush1.xpose.msra.mxu0 0.0
  %461 = vmatprep.subr.mxu0 0.0
  %462 = vmatpush1.xpose.msra.mxu0 0.0
  %463 = vmatprep.subr.mxu0 0.0
  %464 = vmatpush1.xpose.msra.mxu0 0.0
  %465 = vmatprep.subr.mxu0 0.0
  %466 = vmatpush1.xpose.msra.mxu0 0.0
  %467 = vmatprep.subr.mxu0 0.0
  %468 = vmatpush1.xpose.msra.mxu0 0.0
  %469 = vmatprep.subr.mxu0 0.0
  %470 = vmatpush1.xpose.msra.mxu0 0.0
  %471 = vmatprep.subr.mxu0 0.0
  %472 = vmatpush1.xpose.msra.mxu0 0.0
  %473 = vmatprep.subr.mxu0 0.0
  %474 = vmatpush1.xpose.msra.mxu0 0.0
  %475 = vmatprep.subr.mxu0 0.0
  %476 = vmatpush1.xpose.msra.mxu0 0.0
  %477 = vmatprep.subr.mxu0 0.0
  %478 = vmatpush1.xpose.msra.mxu0 0.0
  %479 = vmatprep.subr.mxu0 0.0
  %480 = vmatpush1.xpose.msra.mxu0 0.0
  %481 = vmatprep.subr.mxu0 0.0
  %482 = vmatpush1.xpose.msra.mxu0 0.0
  %483 = vmatprep.subr.mxu0 0.0
  %484 = vmatpush1.xpose.msra.mxu0 0.0
  %485 = vmatprep.subr.mxu0 0.0
  %486 = vmatpush1.xpose.msra.mxu0 0.0
  %487 = vmatprep.subr.mxu0 0.0
  %488 = vmatpush1.xpose.msra.mxu0 0.0
  %489 = vmatprep.subr.mxu0 0.0
  %490 = vmatpush1.xpose.msra.mxu0 0.0
  %491 = vmatprep.mubr.f32.mxu0 0.0
  %492 = vmatmul.mubr.f32.gmra.mrb[0].mxu0 %v380
  %v493 = vpop.f32.mrb[0].mxu0
  %v494 = vadd.f32 0.0, %v493
  %v495 = vpop.f32.mrb[0].mxu0
  %496 = vmatprep.mubr.f32.mxu0 0.0
  %497 = vmatmul.mubr.f32.gmra.mrb[0].mxu0 %v383
  %v498 = vpop.f32.mrb[0].mxu0
  %v499 = vadd.f32 0.0, %v498
  %v500 = vpop.f32.mrb[0].mxu0
  %501 = vmatprep.mubr.f32.mxu0 0.0
  %502 = vmatmul.mubr.f32.gmra.mrb[0].mxu0 %v386
  %v503 = vpop.f32.mrb[0].mxu0
  %v504 = vadd.f32 0.0, %v503
  %v505 = vpop.f32.mrb[0].mxu0
  %506 = vmatprep.mubr.f32.mxu0 0.0
  %507 = vmatmul.mubr.f32.gmra.mrb[0].mxu0 %v389
  %v508 = vpop.f32.mrb[0].mxu0
  %v509 = vadd.f32 0.0, %v508
  %v510 = vpop.f32.mrb[0].mxu0
  %511 = vmatprep.mubr.f32.mxu0 0.0
  %512 = vmatmul.mubr.f32.gmra.mrb[0].mxu0 %v392
  %v513 = vpop.f32.mrb[0].mxu0
  %v514 = vadd.f32 0.0, %v513
  %v515 = vpop.f32.mrb[0].mxu0
  %516 = vmatprep.mubr.f32.mxu0 0.0
  %517 = vmatmul.mubr.f32.gmra.mrb[0].mxu0 %v395
  %v518 = vpop.f32.mrb[0].mxu0
  %v519 = vadd.f32 0.0, %v518
  %v520 = vpop.f32.mrb[0].mxu0
  %521 = vmatprep.mubr.f32.mxu0 0.0
  %522 = vmatmul.mubr.f32.gmra.mrb[0].mxu0 %v398
  %v523 = vpop.f32.mrb[0].mxu0
  %v524 = vadd.f32 0.0, %v523
  %v525 = vpop.f32.mrb[0].mxu0
  %526 = vmatprep.mubr.f32.mxu0 0.0
  %527 = vmatmul.mubr.f32.gmra.mrb[0].mxu0 %v401
  %v528 = vpop.f32.mrb[0].mxu0
  %v529 = vadd.f32 0.0, %v528
  %v530 = vpop.f32.mrb[0].mxu0
  %531 = vdwg.mxu0
  %v533 = vsel %vm72, %v64, 0
  %v536 = vsel %vm72, %v65, 0
  %v539 = vsel %vm72, %v66, 0
  %v542 = vsel %vm72, %v67, 0
  %v545 = vsel %vm72, %v68, 0
  %v548 = vsel %vm72, %v69, 0
  %v551 = vsel %vm72, %v70, 0
  %v554 = vsel %vm72, %v71, 0
  %v557 = vsel %vm72, %v32, 0
  %v560 = vsel %vm72, %v33, 0
  %v563 = vsel %vm72, %v34, 0
  %v566 = vsel %vm72, %v35, 0
  %v569 = vsel %vm72, %v36, 0
  %v572 = vsel %vm72, %v37, 0
  %v575 = vsel %vm72, %v38, 0
  %v578 = vsel %vm72, %v39, 0
  %580 = vmatprep.subr.mxu0 0.0
  %581 = vmatpush1.xpose.msra.mxu0 %v557
  %582 = vmatprep.subr.mxu0 0.0
  %583 = vmatpush1.xpose.msra.mxu0 %v560
  %584 = vmatprep.subr.mxu0 0.0
  %585 = vmatpush1.xpose.msra.mxu0 %v563
  %586 = vmatprep.subr.mxu0 0.0
  %587 = vmatpush1.xpose.msra.mxu0 %v566
  %588 = vmatprep.subr.mxu0 0.0
  %589 = vmatpush1.xpose.msra.mxu0 %v569
  %590 = vmatprep.subr.mxu0 0.0
  %591 = vmatpush1.xpose.msra.mxu0 %v572
  %592 = vmatprep.subr.mxu0 0.0
  %593 = vmatpush1.xpose.msra.mxu0 %v575
  %594 = vmatprep.subr.mxu0 0.0
  %595 = vmatpush1.xpose.msra.mxu0 %v578
  %596 = vmatprep.subr.mxu0 0.0
  %597 = vmatpush1.xpose.msra.mxu0 0.0
  %598 = vmatprep.subr.mxu0 0.0
  %599 = vmatpush1.xpose.msra.mxu0 0.0
  %600 = vmatprep.subr.mxu0 0.0
  %601 = vmatpush1.xpose.msra.mxu0 0.0
  %602 = vmatprep.subr.mxu0 0.0
  %603 = vmatpush1.xpose.msra.mxu0 0.0
  %604 = vmatprep.subr.mxu0 0.0
  %605 = vmatpush1.xpose.msra.mxu0 0.0
  %606 = vmatprep.subr.mxu0 0.0
  %607 = vmatpush1.xpose.msra.mxu0 0.0
  %608 = vmatprep.subr.mxu0 0.0
  %609 = vmatpush1.xpose.msra.mxu0 0.0
  %610 = vmatprep.subr.mxu0 0.0
  %611 = vmatpush1.xpose.msra.mxu0 0.0
  %612 = vmatprep.subr.mxu0 0.0
  %613 = vmatpush1.xpose.msra.mxu0 0.0
  %614 = vmatprep.subr.mxu0 0.0
  %615 = vmatpush1.xpose.msra.mxu0 0.0
  %616 = vmatprep.subr.mxu0 0.0
  %617 = vmatpush1.xpose.msra.mxu0 0.0
  %618 = vmatprep.subr.mxu0 0.0
  %619 = vmatpush1.xpose.msra.mxu0 0.0
  %620 = vmatprep.subr.mxu0 0.0
  %621 = vmatpush1.xpose.msra.mxu0 0.0
  %622 = vmatprep.subr.mxu0 0.0
  %623 = vmatpush1.xpose.msra.mxu0 0.0
  %624 = vmatprep.subr.mxu0 0.0
  %625 = vmatpush1.xpose.msra.mxu0 0.0
  %626 = vmatprep.subr.mxu0 0.0
  %627 = vmatpush1.xpose.msra.mxu0 0.0
  %628 = vmatprep.subr.mxu0 0.0
  %629 = vmatpush1.xpose.msra.mxu0 0.0
  %630 = vmatprep.subr.mxu0 0.0
  %631 = vmatpush1.xpose.msra.mxu0 0.0
  %632 = vmatprep.subr.mxu0 0.0
  %633 = vmatpush1.xpose.msra.mxu0 0.0
  %634 = vmatprep.subr.mxu0 0.0
  %635 = vmatpush1.xpose.msra.mxu0 0.0
  %636 = vmatprep.subr.mxu0 0.0
  %637 = vmatpush1.xpose.msra.mxu0 0.0
  %638 = vmatprep.subr.mxu0 0.0
  %639 = vmatpush1.xpose.msra.mxu0 0.0
  %640 = vmatprep.subr.mxu0 0.0
  %641 = vmatpush1.xpose.msra.mxu0 0.0
  %642 = vmatprep.subr.mxu0 0.0
  %643 = vmatpush1.xpose.msra.mxu0 0.0
  %644 = vmatprep.mubr.f32.mxu0 0.0
  %645 = vmatmul.mubr.f32.gmra.mrb[0].mxu0 %v533
  %v646 = vpop.f32.mrb[0].mxu0
  %v647 = vadd.f32 0.0, %v646
  %v648 = vpop.f32.mrb[0].mxu0
  %649 = vmatprep.mubr.f32.mxu0 0.0
  %650 = vmatmul.mubr.f32.gmra.mrb[0].mxu0 %v536
  %v651 = vpop.f32.mrb[0].mxu0
  %v652 = vadd.f32 0.0, %v651
  %v653 = vpop.f32.mrb[0].mxu0
  %654 = vmatprep.mubr.f32.mxu0 0.0
  %655 = vmatmul.mubr.f32.gmra.mrb[0].mxu0 %v539
  %v656 = vpop.f32.mrb[0].mxu0
  %v657 = vadd.f32 0.0, %v656
  %v658 = vpop.f32.mrb[0].mxu0
  %659 = vmatprep.mubr.f32.mxu0 0.0
  %660 = vmatmul.mubr.f32.gmra.mrb[0].mxu0 %v542
  %v661 = vpop.f32.mrb[0].mxu0
  %v662 = vadd.f32 0.0, %v661
  %v663 = vpop.f32.mrb[0].mxu0
  %664 = vmatprep.mubr.f32.mxu0 0.0
  %665 = vmatmul.mubr.f32.gmra.mrb[0].mxu0 %v545
  %v666 = vpop.f32.mrb[0].mxu0
  %v667 = vadd.f32 0.0, %v666
  %v668 = vpop.f32.mrb[0].mxu0
  %669 = vmatprep.mubr.f32.mxu0 0.0
  %670 = vmatmul.mubr.f32.gmra.mrb[0].mxu0 %v548
  %v671 = vpop.f32.mrb[0].mxu0
  %v672 = vadd.f32 0.0, %v671
  %v673 = vpop.f32.mrb[0].mxu0
  %674 = vmatprep.mubr.f32.mxu0 0.0
  %675 = vmatmul.mubr.f32.gmra.mrb[0].mxu0 %v551
  %v676 = vpop.f32.mrb[0].mxu0
  %v677 = vadd.f32 0.0, %v676
  %v678 = vpop.f32.mrb[0].mxu0
  %679 = vmatprep.mubr.f32.mxu0 0.0
  %680 = vmatmul.mubr.f32.gmra.mrb[0].mxu0 %v554
  %v681 = vpop.f32.mrb[0].mxu0
  %v682 = vadd.f32 0.0, %v681
  %v683 = vpop.f32.mrb[0].mxu0
  %684 = vdwg.mxu0
  %vm685 = vcmask 523264
  %v686 = vsel %vm685, %v188, -inf
  %687 = vmax.xlane.f32.xlu0 %v686
  %v688 = vpop.xlane.xlu0 %687
  %v689 = vsel %vm685, %v193, -inf
  %690 = vmax.xlane.f32.xlu0 %v689
  %v691 = vpop.xlane.xlu0 %690
  %v692 = vsel %vm685, %v198, -inf
  %693 = vmax.xlane.f32.xlu0 %v692
  %v694 = vpop.xlane.xlu0 %693
  %v695 = vsel %vm685, %v203, -inf
  %696 = vmax.xlane.f32.xlu0 %v695
  %v697 = vpop.xlane.xlu0 %696
  %v698 = vsel %vm685, %v208, -inf
  %699 = vmax.xlane.f32.xlu0 %v698
  %v700 = vpop.xlane.xlu0 %699
  %v701 = vsel %vm685, %v213, -inf
  %702 = vmax.xlane.f32.xlu0 %v701
  %v703 = vpop.xlane.xlu0 %702
  %v704 = vsel %vm685, %v218, -inf
  %705 = vmax.xlane.f32.xlu0 %v704
  %v706 = vpop.xlane.xlu0 %705
  %v707 = vsel %vm685, %v223, -inf
  %708 = vmax.xlane.f32.xlu0 %v707
  %v709 = vpop.xlane.xlu0 %708
  %v710 = vsel %vm685, %v341, -inf
  %711 = vmax.xlane.f32.xlu0 %v710
  %v712 = vpop.xlane.xlu0 %711
  %v713 = vsel %vm685, %v346, -inf
  %714 = vmax.xlane.f32.xlu0 %v713
  %v715 = vpop.xlane.xlu0 %714
  %v716 = vsel %vm685, %v351, -inf
  %717 = vmax.xlane.f32.xlu0 %v716
  %v718 = vpop.xlane.xlu0 %717
  %v719 = vsel %vm685, %v356, -inf
  %720 = vmax.xlane.f32.xlu0 %v719
  %v721 = vpop.xlane.xlu0 %720
  %v722 = vsel %vm685, %v361, -inf
  %723 = vmax.xlane.f32.xlu0 %v722
  %v724 = vpop.xlane.xlu0 %723
  %v725 = vsel %vm685, %v366, -inf
  %726 = vmax.xlane.f32.xlu0 %v725
  %v727 = vpop.xlane.xlu0 %726
  %v728 = vsel %vm685, %v371, -inf
  %729 = vmax.xlane.f32.xlu0 %v728
  %v730 = vpop.xlane.xlu0 %729
  %v731 = vsel %vm685, %v376, -inf
  %732 = vmax.xlane.f32.xlu0 %v731
  %v733 = vpop.xlane.xlu0 %732
  %v734 = vsel %vm685, %v494, -inf
  %735 = vmax.xlane.f32.xlu0 %v734
  %v736 = vpop.xlane.xlu0 %735
  %v737 = vsel %vm685, %v499, -inf
  %738 = vmax.xlane.f32.xlu0 %v737
  %v739 = vpop.xlane.xlu0 %738
  %v740 = vsel %vm685, %v504, -inf
  %741 = vmax.xlane.f32.xlu0 %v740
  %v742 = vpop.xlane.xlu0 %741
  %v743 = vsel %vm685, %v509, -inf
  %744 = vmax.xlane.f32.xlu0 %v743
  %v745 = vpop.xlane.xlu0 %744
  %v746 = vsel %vm685, %v514, -inf
  %747 = vmax.xlane.f32.xlu0 %v746
  %v748 = vpop.xlane.xlu0 %747
  %v749 = vsel %vm685, %v519, -inf
  %750 = vmax.xlane.f32.xlu0 %v749
  %v751 = vpop.xlane.xlu0 %750
  %v752 = vsel %vm685, %v524, -inf
  %753 = vmax.xlane.f32.xlu0 %v752
  %v754 = vpop.xlane.xlu0 %753
  %v755 = vsel %vm685, %v529, -inf
  %756 = vmax.xlane.f32.xlu0 %v755
  %v757 = vpop.xlane.xlu0 %756
  %v758 = vsel %vm685, %v647, -inf
  %759 = vmax.xlane.f32.xlu0 %v758
  %v760 = vpop.xlane.xlu0 %759
  %v761 = vsel %vm685, %v652, -inf
  %762 = vmax.xlane.f32.xlu0 %v761
  %v763 = vpop.xlane.xlu0 %762
  %v764 = vsel %vm685, %v657, -inf
  %765 = vmax.xlane.f32.xlu0 %v764
  %v766 = vpop.xlane.xlu0 %765
  %v767 = vsel %vm685, %v662, -inf
  %768 = vmax.xlane.f32.xlu0 %v767
  %v769 = vpop.xlane.xlu0 %768
  %v770 = vsel %vm685, %v667, -inf
  %771 = vmax.xlane.f32.xlu0 %v770
  %v772 = vpop.xlane.xlu0 %771
  %v773 = vsel %vm685, %v672, -inf
  %774 = vmax.xlane.f32.xlu0 %v773
  %v775 = vpop.xlane.xlu0 %774
  %v776 = vsel %vm685, %v677, -inf
  %777 = vmax.xlane.f32.xlu0 %v776
  %v778 = vpop.xlane.xlu0 %777
  %v779 = vsel %vm685, %v682, -inf
  %780 = vmax.xlane.f32.xlu0 %v779
  %v781 = vpop.xlane.xlu0 %780
  %v782 = vsub.f32 %v188, %v688
  %v783 = vsub.f32 %v193, %v691
  %v784 = vsub.f32 %v198, %v694
  %v785 = vsub.f32 %v203, %v697
  %v786 = vsub.f32 %v208, %v700
  %v787 = vsub.f32 %v213, %v703
  %v788 = vsub.f32 %v218, %v706
  %v789 = vsub.f32 %v223, %v709
  %v790 = vsub.f32 %v341, %v712
  %v791 = vsub.f32 %v346, %v715
  %v792 = vsub.f32 %v351, %v718
  %v793 = vsub.f32 %v356, %v721
  %v794 = vsub.f32 %v361, %v724
  %v795 = vsub.f32 %v366, %v727
  %v796 = vsub.f32 %v371, %v730
  %v797 = vsub.f32 %v376, %v733
  %v798 = vsub.f32 %v494, %v736
  %v799 = vsub.f32 %v499, %v739
  %v800 = vsub.f32 %v504, %v742
  %v801 = vsub.f32 %v509, %v745
  %v802 = vsub.f32 %v514, %v748
  %v803 = vsub.f32 %v519, %v751
  %v804 = vsub.f32 %v524, %v754
  %v805 = vsub.f32 %v529, %v757
  %v806 = vsub.f32 %v647, %v760
  %v807 = vsub.f32 %v652, %v763
  %v808 = vsub.f32 %v657, %v766
  %v809 = vsub.f32 %v662, %v769
  %v810 = vsub.f32 %v667, %v772
  %v811 = vsub.f32 %v672, %v775
  %v812 = vsub.f32 %v677, %v778
  %v813 = vsub.f32 %v682, %v781
  %v814 = vmul.f32 %v782, 1.442695
  %v815 = vpow.pop %v814
  %v816 = vmul.f32 %v783, 1.442695
  %v817 = vpow.pop %v816
  %v818 = vmul.f32 %v784, 1.442695
  %v819 = vpow.pop %v818
  %v820 = vmul.f32 %v785, 1.442695
  %v821 = vpow.pop %v820
  %v822 = vmul.f32 %v786, 1.442695
  %v823 = vpow.pop %v822
  %v824 = vmul.f32 %v787, 1.442695
  %v825 = vpow.pop %v824
  %v826 = vmul.f32 %v788, 1.442695
  %v827 = vpow.pop %v826
  %v828 = vmul.f32 %v789, 1.442695
  %v829 = vpow.pop %v828
  %v830 = vmul.f32 %v790, 1.442695
  %v831 = vpow.pop %v830
  %v832 = vmul.f32 %v791, 1.442695
  %v833 = vpow.pop %v832
  %v834 = vmul.f32 %v792, 1.442695
  %v835 = vpow.pop %v834
  %v836 = vmul.f32 %v793, 1.442695
  %v837 = vpow.pop %v836
  %v838 = vmul.f32 %v794, 1.442695
  %v839 = vpow.pop %v838
  %v840 = vmul.f32 %v795, 1.442695
  %v841 = vpow.pop %v840
  %v842 = vmul.f32 %v796, 1.442695
  %v843 = vpow.pop %v842
  %v844 = vmul.f32 %v797, 1.442695
  %v845 = vpow.pop %v844
  %v846 = vmul.f32 %v798, 1.442695
  %v847 = vpow.pop %v846
  %v848 = vmul.f32 %v799, 1.442695
  %v849 = vpow.pop %v848
  %v850 = vmul.f32 %v800, 1.442695
  %v851 = vpow.pop %v850
  %v852 = vmul.f32 %v801, 1.442695
  %v853 = vpow.pop %v852
  %v854 = vmul.f32 %v802, 1.442695
  %v855 = vpow.pop %v854
  %v856 = vmul.f32 %v803, 1.442695
  %v857 = vpow.pop %v856
  %v858 = vmul.f32 %v804, 1.442695
  %v859 = vpow.pop %v858
  %v860 = vmul.f32 %v805, 1.442695
  %v861 = vpow.pop %v860
  %v862 = vmul.f32 %v806, 1.442695
  %v863 = vpow.pop %v862
  %v864 = vmul.f32 %v807, 1.442695
  %v865 = vpow.pop %v864
  %v866 = vmul.f32 %v808, 1.442695
  %v867 = vpow.pop %v866
  %v868 = vmul.f32 %v809, 1.442695
  %v869 = vpow.pop %v868
  %v870 = vmul.f32 %v810, 1.442695
  %v871 = vpow.pop %v870
  %v872 = vmul.f32 %v811, 1.442695
  %v873 = vpow.pop %v872
  %v874 = vmul.f32 %v812, 1.442695
  %v875 = vpow.pop %v874
  %v876 = vmul.f32 %v813, 1.442695
  %v877 = vpow.pop %v876
  %v878 = vsel %vm685, %v815, 0.0
  %879 = vadd.xlane.f32.xlu0 %v878
  %v880 = vpop.xlane.xlu0 %879
  %v881 = vsel %vm685, %v817, 0.0
  %882 = vadd.xlane.f32.xlu0 %v881
  %v883 = vpop.xlane.xlu0 %882
  %v884 = vsel %vm685, %v819, 0.0
  %885 = vadd.xlane.f32.xlu0 %v884
  %v886 = vpop.xlane.xlu0 %885
  %v887 = vsel %vm685, %v821, 0.0
  %888 = vadd.xlane.f32.xlu0 %v887
  %v889 = vpop.xlane.xlu0 %888
  %v890 = vsel %vm685, %v823, 0.0
  %891 = vadd.xlane.f32.xlu0 %v890
  %v892 = vpop.xlane.xlu0 %891
  %v893 = vsel %vm685, %v825, 0.0
  %894 = vadd.xlane.f32.xlu0 %v893
  %v895 = vpop.xlane.xlu0 %894
  %v896 = vsel %vm685, %v827, 0.0
  %897 = vadd.xlane.f32.xlu0 %v896
  %v898 = vpop.xlane.xlu0 %897
  %v899 = vsel %vm685, %v829, 0.0
  %900 = vadd.xlane.f32.xlu0 %v899
  %v901 = vpop.xlane.xlu0 %900
  %v902 = vsel %vm685, %v831, 0.0
  %903 = vadd.xlane.f32.xlu0 %v902
  %v904 = vpop.xlane.xlu0 %903
  %v905 = vsel %vm685, %v833, 0.0
  %906 = vadd.xlane.f32.xlu0 %v905
  %v907 = vpop.xlane.xlu0 %906
  %v908 = vsel %vm685, %v835, 0.0
  %909 = vadd.xlane.f32.xlu0 %v908
  %v910 = vpop.xlane.xlu0 %909
  %v911 = vsel %vm685, %v837, 0.0
  %912 = vadd.xlane.f32.xlu0 %v911
  %v913 = vpop.xlane.xlu0 %912
  %v914 = vsel %vm685, %v839, 0.0
  %915 = vadd.xlane.f32.xlu0 %v914
  %v916 = vpop.xlane.xlu0 %915
  %v917 = vsel %vm685, %v841, 0.0
  %918 = vadd.xlane.f32.xlu0 %v917
  %v919 = vpop.xlane.xlu0 %918
  %v920 = vsel %vm685, %v843, 0.0
  %921 = vadd.xlane.f32.xlu0 %v920
  %v922 = vpop.xlane.xlu0 %921
  %v923 = vsel %vm685, %v845, 0.0
  %924 = vadd.xlane.f32.xlu0 %v923
  %v925 = vpop.xlane.xlu0 %924
  %v926 = vsel %vm685, %v847, 0.0
  %927 = vadd.xlane.f32.xlu0 %v926
  %v928 = vpop.xlane.xlu0 %927
  %v929 = vsel %vm685, %v849, 0.0
  %930 = vadd.xlane.f32.xlu0 %v929
  %v931 = vpop.xlane.xlu0 %930
  %v932 = vsel %vm685, %v851, 0.0
  %933 = vadd.xlane.f32.xlu0 %v932
  %v934 = vpop.xlane.xlu0 %933
  %v935 = vsel %vm685, %v853, 0.0
  %936 = vadd.xlane.f32.xlu0 %v935
  %v937 = vpop.xlane.xlu0 %936
  %v938 = vsel %vm685, %v855, 0.0
  %939 = vadd.xlane.f32.xlu0 %v938
  %v940 = vpop.xlane.xlu0 %939
  %v941 = vsel %vm685, %v857, 0.0
  %942 = vadd.xlane.f32.xlu0 %v941
  %v943 = vpop.xlane.xlu0 %942
  %v944 = vsel %vm685, %v859, 0.0
  %945 = vadd.xlane.f32.xlu0 %v944
  %v946 = vpop.xlane.xlu0 %945
  %v947 = vsel %vm685, %v861, 0.0
  %948 = vadd.xlane.f32.xlu0 %v947
  %v949 = vpop.xlane.xlu0 %948
  %v950 = vsel %vm685, %v863, 0.0
  %951 = vadd.xlane.f32.xlu0 %v950
  %v952 = vpop.xlane.xlu0 %951
  %v953 = vsel %vm685, %v865, 0.0
  %954 = vadd.xlane.f32.xlu0 %v953
  %v955 = vpop.xlane.xlu0 %954
  %v956 = vsel %vm685, %v867, 0.0
  %957 = vadd.xlane.f32.xlu0 %v956
  %v958 = vpop.xlane.xlu0 %957
  %v959 = vsel %vm685, %v869, 0.0
  %960 = vadd.xlane.f32.xlu0 %v959
  %v961 = vpop.xlane.xlu0 %960
  %v962 = vsel %vm685, %v871, 0.0
  %963 = vadd.xlane.f32.xlu0 %v962
  %v964 = vpop.xlane.xlu0 %963
  %v965 = vsel %vm685, %v873, 0.0
  %966 = vadd.xlane.f32.xlu0 %v965
  %v967 = vpop.xlane.xlu0 %966
  %v968 = vsel %vm685, %v875, 0.0
  %969 = vadd.xlane.f32.xlu0 %v968
  %v970 = vpop.xlane.xlu0 %969
  %v971 = vsel %vm685, %v877, 0.0
  %972 = vadd.xlane.f32.xlu0 %v971
  %v973 = vpop.xlane.xlu0 %972
  %v975 = vsel %vm685, %v815, 0
  %v978 = vsel %vm685, %v817, 0
  %v981 = vsel %vm685, %v819, 0
  %v984 = vsel %vm685, %v821, 0
  %v987 = vsel %vm685, %v823, 0
  %v990 = vsel %vm685, %v825, 0
  %v993 = vsel %vm685, %v827, 0
  %v996 = vsel %vm685, %v829, 0
  %998 = vmatprep.subr.mxu0 0.0
  %999 = vmatpush1.msra.mxu0 %v8
  %1000 = vmatprep.subr.mxu0 0.0
  %1001 = vmatpush1.msra.mxu0 %v9
  %1002 = vmatprep.subr.mxu0 0.0
  %1003 = vmatpush1.msra.mxu0 %v10
  %1004 = vmatprep.subr.mxu0 0.0
  %1005 = vmatpush1.msra.mxu0 %v11
  %1006 = vmatprep.subr.mxu0 0.0
  %1007 = vmatpush1.msra.mxu0 %v12
  %1008 = vmatprep.subr.mxu0 0.0
  %1009 = vmatpush1.msra.mxu0 %v13
  %1010 = vmatprep.subr.mxu0 0.0
  %1011 = vmatpush1.msra.mxu0 %v14
  %1012 = vmatprep.subr.mxu0 0.0
  %1013 = vmatpush1.msra.mxu0 %v15
  %1014 = vmatprep.subr.mxu0 0.0
  %1015 = vmatpush1.msra.mxu0 0.0
  %1016 = vmatprep.subr.mxu0 0.0
  %1017 = vmatpush1.msra.mxu0 0.0
  %1018 = vmatprep.subr.mxu0 0.0
  %1019 = vmatpush1.msra.mxu0 0.0
  %1020 = vmatprep.subr.mxu0 0.0
  %1021 = vmatpush1.msra.mxu0 0.0
  %1022 = vmatprep.subr.mxu0 0.0
  %1023 = vmatpush1.msra.mxu0 0.0
  %1024 = vmatprep.subr.mxu0 0.0
  %1025 = vmatpush1.msra.mxu0 0.0
  %1026 = vmatprep.subr.mxu0 0.0
  %1027 = vmatpush1.msra.mxu0 0.0
  %1028 = vmatprep.subr.mxu0 0.0
  %1029 = vmatpush1.msra.mxu0 0.0
  %1030 = vmatprep.subr.mxu0 0.0
  %1031 = vmatpush1.msra.mxu0 0.0
  %1032 = vmatprep.subr.mxu0 0.0
  %1033 = vmatpush1.msra.mxu0 0.0
  %1034 = vmatprep.subr.mxu0 0.0
  %1035 = vmatpush1.msra.mxu0 0.0
  %1036 = vmatprep.subr.mxu0 0.0
  %1037 = vmatpush1.msra.mxu0 0.0
  %1038 = vmatprep.subr.mxu0 0.0
  %1039 = vmatpush1.msra.mxu0 0.0
  %1040 = vmatprep.subr.mxu0 0.0
  %1041 = vmatpush1.msra.mxu0 0.0
  %1042 = vmatprep.subr.mxu0 0.0
  %1043 = vmatpush1.msra.mxu0 0.0
  %1044 = vmatprep.subr.mxu0 0.0
  %1045 = vmatpush1.msra.mxu0 0.0
  %1046 = vmatprep.subr.mxu0 0.0
  %1047 = vmatpush1.msra.mxu0 0.0
  %1048 = vmatprep.subr.mxu0 0.0
  %1049 = vmatpush1.msra.mxu0 0.0
  %1050 = vmatprep.subr.mxu0 0.0
  %1051 = vmatpush1.msra.mxu0 0.0
  %1052 = vmatprep.subr.mxu0 0.0
  %1053 = vmatpush1.msra.mxu0 0.0
  %1054 = vmatprep.subr.mxu0 0.0
  %1055 = vmatpush1.msra.mxu0 0.0
  %1056 = vmatprep.subr.mxu0 0.0
  %1057 = vmatpush1.msra.mxu0 0.0
  %1058 = vmatprep.subr.mxu0 0.0
  %1059 = vmatpush1.msra.mxu0 0.0
  %1060 = vmatprep.subr.mxu0 0.0
  %1061 = vmatpush1.msra.mxu0 0.0
  %1062 = vmatprep.mubr.f32.mxu0 0.0
  %1063 = vmatmul.mubr.f32.gmra.mrb[0].mxu0 %v975
  %v1064 = vpop.f32.mrb[0].mxu0
  %v1065 = vadd.f32 0.0, %v1064
  %v1066 = vpop.f32.mrb[0].mxu0
  %1067 = vmatprep.mubr.f32.mxu0 0.0
  %1068 = vmatmul.mubr.f32.gmra.mrb[0].mxu0 %v978
  %v1069 = vpop.f32.mrb[0].mxu0
  %v1070 = vadd.f32 0.0, %v1069
  %v1071 = vpop.f32.mrb[0].mxu0
  %1072 = vmatprep.mubr.f32.mxu0 0.0
  %1073 = vmatmul.mubr.f32.gmra.mrb[0].mxu0 %v981
  %v1074 = vpop.f32.mrb[0].mxu0
  %v1075 = vadd.f32 0.0, %v1074
  %v1076 = vpop.f32.mrb[0].mxu0
  %1077 = vmatprep.mubr.f32.mxu0 0.0
  %1078 = vmatmul.mubr.f32.gmra.mrb[0].mxu0 %v984
  %v1079 = vpop.f32.mrb[0].mxu0
  %v1080 = vadd.f32 0.0, %v1079
  %v1081 = vpop.f32.mrb[0].mxu0
  %1082 = vmatprep.mubr.f32.mxu0 0.0
  %1083 = vmatmul.mubr.f32.gmra.mrb[0].mxu0 %v987
  %v1084 = vpop.f32.mrb[0].mxu0
  %v1085 = vadd.f32 0.0, %v1084
  %v1086 = vpop.f32.mrb[0].mxu0
  %1087 = vmatprep.mubr.f32.mxu0 0.0
  %1088 = vmatmul.mubr.f32.gmra.mrb[0].mxu0 %v990
  %v1089 = vpop.f32.mrb[0].mxu0
  %v1090 = vadd.f32 0.0, %v1089
  %v1091 = vpop.f32.mrb[0].mxu0
  %1092 = vmatprep.mubr.f32.mxu0 0.0
  %1093 = vmatmul.mubr.f32.gmra.mrb[0].mxu0 %v993
  %v1094 = vpop.f32.mrb[0].mxu0
  %v1095 = vadd.f32 0.0, %v1094
  %v1096 = vpop.f32.mrb[0].mxu0
  %1097 = vmatprep.mubr.f32.mxu0 0.0
  %1098 = vmatmul.mubr.f32.gmra.mrb[0].mxu0 %v996
  %v1099 = vpop.f32.mrb[0].mxu0
  %v1100 = vadd.f32 0.0, %v1099
  %v1101 = vpop.f32.mrb[0].mxu0
  %1102 = vdwg.mxu0
  %v1104 = vsel %vm685, %v831, 0
  %v1107 = vsel %vm685, %v833, 0
  %v1110 = vsel %vm685, %v835, 0
  %v1113 = vsel %vm685, %v837, 0
  %v1116 = vsel %vm685, %v839, 0
  %v1119 = vsel %vm685, %v841, 0
  %v1122 = vsel %vm685, %v843, 0
  %v1125 = vsel %vm685, %v845, 0
  %1127 = vmatprep.subr.mxu0 0.0
  %1128 = vmatpush1.msra.mxu0 %v16
  %1129 = vmatprep.subr.mxu0 0.0
  %1130 = vmatpush1.msra.mxu0 %v17
  %1131 = vmatprep.subr.mxu0 0.0
  %1132 = vmatpush1.msra.mxu0 %v18
  %1133 = vmatprep.subr.mxu0 0.0
  %1134 = vmatpush1.msra.mxu0 %v19
  %1135 = vmatprep.subr.mxu0 0.0
  %1136 = vmatpush1.msra.mxu0 %v20
  %1137 = vmatprep.subr.mxu0 0.0
  %1138 = vmatpush1.msra.mxu0 %v21
  %1139 = vmatprep.subr.mxu0 0.0
  %1140 = vmatpush1.msra.mxu0 %v22
  %1141 = vmatprep.subr.mxu0 0.0
  %1142 = vmatpush1.msra.mxu0 %v23
  %1143 = vmatprep.subr.mxu0 0.0
  %1144 = vmatpush1.msra.mxu0 0.0
  %1145 = vmatprep.subr.mxu0 0.0
  %1146 = vmatpush1.msra.mxu0 0.0
  %1147 = vmatprep.subr.mxu0 0.0
  %1148 = vmatpush1.msra.mxu0 0.0
  %1149 = vmatprep.subr.mxu0 0.0
  %1150 = vmatpush1.msra.mxu0 0.0
  %1151 = vmatprep.subr.mxu0 0.0
  %1152 = vmatpush1.msra.mxu0 0.0
  %1153 = vmatprep.subr.mxu0 0.0
  %1154 = vmatpush1.msra.mxu0 0.0
  %1155 = vmatprep.subr.mxu0 0.0
  %1156 = vmatpush1.msra.mxu0 0.0
  %1157 = vmatprep.subr.mxu0 0.0
  %1158 = vmatpush1.msra.mxu0 0.0
  %1159 = vmatprep.subr.mxu0 0.0
  %1160 = vmatpush1.msra.mxu0 0.0
  %1161 = vmatprep.subr.mxu0 0.0
  %1162 = vmatpush1.msra.mxu0 0.0
  %1163 = vmatprep.subr.mxu0 0.0
  %1164 = vmatpush1.msra.mxu0 0.0
  %1165 = vmatprep.subr.mxu0 0.0
  %1166 = vmatpush1.msra.mxu0 0.0
  %1167 = vmatprep.subr.mxu0 0.0
  %1168 = vmatpush1.msra.mxu0 0.0
  %1169 = vmatprep.subr.mxu0 0.0
  %1170 = vmatpush1.msra.mxu0 0.0
  %1171 = vmatprep.subr.mxu0 0.0
  %1172 = vmatpush1.msra.mxu0 0.0
  %1173 = vmatprep.subr.mxu0 0.0
  %1174 = vmatpush1.msra.mxu0 0.0
  %1175 = vmatprep.subr.mxu0 0.0
  %1176 = vmatpush1.msra.mxu0 0.0
  %1177 = vmatprep.subr.mxu0 0.0
  %1178 = vmatpush1.msra.mxu0 0.0
  %1179 = vmatprep.subr.mxu0 0.0
  %1180 = vmatpush1.msra.mxu0 0.0
  %1181 = vmatprep.subr.mxu0 0.0
  %1182 = vmatpush1.msra.mxu0 0.0
  %1183 = vmatprep.subr.mxu0 0.0
  %1184 = vmatpush1.msra.mxu0 0.0
  %1185 = vmatprep.subr.mxu0 0.0
  %1186 = vmatpush1.msra.mxu0 0.0
  %1187 = vmatprep.subr.mxu0 0.0
  %1188 = vmatpush1.msra.mxu0 0.0
  %1189 = vmatprep.subr.mxu0 0.0
  %1190 = vmatpush1.msra.mxu0 0.0
  %1191 = vmatprep.mubr.f32.mxu0 0.0
  %1192 = vmatmul.mubr.f32.gmra.mrb[0].mxu0 %v1104
  %v1193 = vpop.f32.mrb[0].mxu0
  %v1194 = vadd.f32 0.0, %v1193
  %v1195 = vpop.f32.mrb[0].mxu0
  %1196 = vmatprep.mubr.f32.mxu0 0.0
  %1197 = vmatmul.mubr.f32.gmra.mrb[0].mxu0 %v1107
  %v1198 = vpop.f32.mrb[0].mxu0
  %v1199 = vadd.f32 0.0, %v1198
  %v1200 = vpop.f32.mrb[0].mxu0
  %1201 = vmatprep.mubr.f32.mxu0 0.0
  %1202 = vmatmul.mubr.f32.gmra.mrb[0].mxu0 %v1110
  %v1203 = vpop.f32.mrb[0].mxu0
  %v1204 = vadd.f32 0.0, %v1203
  %v1205 = vpop.f32.mrb[0].mxu0
  %1206 = vmatprep.mubr.f32.mxu0 0.0
  %1207 = vmatmul.mubr.f32.gmra.mrb[0].mxu0 %v1113
  %v1208 = vpop.f32.mrb[0].mxu0
  %v1209 = vadd.f32 0.0, %v1208
  %v1210 = vpop.f32.mrb[0].mxu0
  %1211 = vmatprep.mubr.f32.mxu0 0.0
  %1212 = vmatmul.mubr.f32.gmra.mrb[0].mxu0 %v1116
  %v1213 = vpop.f32.mrb[0].mxu0
  %v1214 = vadd.f32 0.0, %v1213
  %v1215 = vpop.f32.mrb[0].mxu0
  %1216 = vmatprep.mubr.f32.mxu0 0.0
  %1217 = vmatmul.mubr.f32.gmra.mrb[0].mxu0 %v1119
  %v1218 = vpop.f32.mrb[0].mxu0
  %v1219 = vadd.f32 0.0, %v1218
  %v1220 = vpop.f32.mrb[0].mxu0
  %1221 = vmatprep.mubr.f32.mxu0 0.0
  %1222 = vmatmul.mubr.f32.gmra.mrb[0].mxu0 %v1122
  %v1223 = vpop.f32.mrb[0].mxu0
  %v1224 = vadd.f32 0.0, %v1223
  %v1225 = vpop.f32.mrb[0].mxu0
  %1226 = vmatprep.mubr.f32.mxu0 0.0
  %1227 = vmatmul.mubr.f32.gmra.mrb[0].mxu0 %v1125
  %v1228 = vpop.f32.mrb[0].mxu0
  %v1229 = vadd.f32 0.0, %v1228
  %v1230 = vpop.f32.mrb[0].mxu0
  %1231 = vdwg.mxu0
  %v1233 = vsel %vm685, %v847, 0
  %v1236 = vsel %vm685, %v849, 0
  %v1239 = vsel %vm685, %v851, 0
  %v1242 = vsel %vm685, %v853, 0
  %v1245 = vsel %vm685, %v855, 0
  %v1248 = vsel %vm685, %v857, 0
  %v1251 = vsel %vm685, %v859, 0
  %v1254 = vsel %vm685, %v861, 0
  %1256 = vmatprep.subr.mxu0 0.0
  %1257 = vmatpush1.msra.mxu0 %v24
  %1258 = vmatprep.subr.mxu0 0.0
  %1259 = vmatpush1.msra.mxu0 %v25
  %1260 = vmatprep.subr.mxu0 0.0
  %1261 = vmatpush1.msra.mxu0 %v26
  %1262 = vmatprep.subr.mxu0 0.0
  %1263 = vmatpush1.msra.mxu0 %v27
  %1264 = vmatprep.subr.mxu0 0.0
  %1265 = vmatpush1.msra.mxu0 %v28
  %1266 = vmatprep.subr.mxu0 0.0
  %1267 = vmatpush1.msra.mxu0 %v29
  %1268 = vmatprep.subr.mxu0 0.0
  %1269 = vmatpush1.msra.mxu0 %v30
  %1270 = vmatprep.subr.mxu0 0.0
  %1271 = vmatpush1.msra.mxu0 %v31
  %1272 = vmatprep.subr.mxu0 0.0
  %1273 = vmatpush1.msra.mxu0 0.0
  %1274 = vmatprep.subr.mxu0 0.0
  %1275 = vmatpush1.msra.mxu0 0.0
  %1276 = vmatprep.subr.mxu0 0.0
  %1277 = vmatpush1.msra.mxu0 0.0
  %1278 = vmatprep.subr.mxu0 0.0
  %1279 = vmatpush1.msra.mxu0 0.0
  %1280 = vmatprep.subr.mxu0 0.0
  %1281 = vmatpush1.msra.mxu0 0.0
  %1282 = vmatprep.subr.mxu0 0.0
  %1283 = vmatpush1.msra.mxu0 0.0
  %1284 = vmatprep.subr.mxu0 0.0
  %1285 = vmatpush1.msra.mxu0 0.0
  %1286 = vmatprep.subr.mxu0 0.0
  %1287 = vmatpush1.msra.mxu0 0.0
  %1288 = vmatprep.subr.mxu0 0.0
  %1289 = vmatpush1.msra.mxu0 0.0
  %1290 = vmatprep.subr.mxu0 0.0
  %1291 = vmatpush1.msra.mxu0 0.0
  %1292 = vmatprep.subr.mxu0 0.0
  %1293 = vmatpush1.msra.mxu0 0.0
  %1294 = vmatprep.subr.mxu0 0.0
  %1295 = vmatpush1.msra.mxu0 0.0
  %1296 = vmatprep.subr.mxu0 0.0
  %1297 = vmatpush1.msra.mxu0 0.0
  %1298 = vmatprep.subr.mxu0 0.0
  %1299 = vmatpush1.msra.mxu0 0.0
  %1300 = vmatprep.subr.mxu0 0.0
  %1301 = vmatpush1.msra.mxu0 0.0
  %1302 = vmatprep.subr.mxu0 0.0
  %1303 = vmatpush1.msra.mxu0 0.0
  %1304 = vmatprep.subr.mxu0 0.0
  %1305 = vmatpush1.msra.mxu0 0.0
  %1306 = vmatprep.subr.mxu0 0.0
  %1307 = vmatpush1.msra.mxu0 0.0
  %1308 = vmatprep.subr.mxu0 0.0
  %1309 = vmatpush1.msra.mxu0 0.0
  %1310 = vmatprep.subr.mxu0 0.0
  %1311 = vmatpush1.msra.mxu0 0.0
  %1312 = vmatprep.subr.mxu0 0.0
  %1313 = vmatpush1.msra.mxu0 0.0
  %1314 = vmatprep.subr.mxu0 0.0
  %1315 = vmatpush1.msra.mxu0 0.0
  %1316 = vmatprep.subr.mxu0 0.0
  %1317 = vmatpush1.msra.mxu0 0.0
  %1318 = vmatprep.subr.mxu0 0.0
  %1319 = vmatpush1.msra.mxu0 0.0
  %1320 = vmatprep.mubr.f32.mxu0 0.0
  %1321 = vmatmul.mubr.f32.gmra.mrb[0].mxu0 %v1233
  %v1322 = vpop.f32.mrb[0].mxu0
  %v1323 = vadd.f32 0.0, %v1322
  %v1324 = vpop.f32.mrb[0].mxu0
  %1325 = vmatprep.mubr.f32.mxu0 0.0
  %1326 = vmatmul.mubr.f32.gmra.mrb[0].mxu0 %v1236
  %v1327 = vpop.f32.mrb[0].mxu0
  %v1328 = vadd.f32 0.0, %v1327
  %v1329 = vpop.f32.mrb[0].mxu0
  %1330 = vmatprep.mubr.f32.mxu0 0.0
  %1331 = vmatmul.mubr.f32.gmra.mrb[0].mxu0 %v1239
  %v1332 = vpop.f32.mrb[0].mxu0
  %v1333 = vadd.f32 0.0, %v1332
  %v1334 = vpop.f32.mrb[0].mxu0
  %1335 = vmatprep.mubr.f32.mxu0 0.0
  %1336 = vmatmul.mubr.f32.gmra.mrb[0].mxu0 %v1242
  %v1337 = vpop.f32.mrb[0].mxu0
  %v1338 = vadd.f32 0.0, %v1337
  %v1339 = vpop.f32.mrb[0].mxu0
  %1340 = vmatprep.mubr.f32.mxu0 0.0
  %1341 = vmatmul.mubr.f32.gmra.mrb[0].mxu0 %v1245
  %v1342 = vpop.f32.mrb[0].mxu0
  %v1343 = vadd.f32 0.0, %v1342
  %v1344 = vpop.f32.mrb[0].mxu0
  %1345 = vmatprep.mubr.f32.mxu0 0.0
  %1346 = vmatmul.mubr.f32.gmra.mrb[0].mxu0 %v1248
  %v1347 = vpop.f32.mrb[0].mxu0
  %v1348 = vadd.f32 0.0, %v1347
  %v1349 = vpop.f32.mrb[0].mxu0
  %1350 = vmatprep.mubr.f32.mxu0 0.0
  %1351 = vmatmul.mubr.f32.gmra.mrb[0].mxu0 %v1251
  %v1352 = vpop.f32.mrb[0].mxu0
  %v1353 = vadd.f32 0.0, %v1352
  %v1354 = vpop.f32.mrb[0].mxu0
  %1355 = vmatprep.mubr.f32.mxu0 0.0
  %1356 = vmatmul.mubr.f32.gmra.mrb[0].mxu0 %v1254
  %v1357 = vpop.f32.mrb[0].mxu0
  %v1358 = vadd.f32 0.0, %v1357
  %v1359 = vpop.f32.mrb[0].mxu0
  %1360 = vdwg.mxu0
  %v1362 = vsel %vm685, %v863, 0
  %v1365 = vsel %vm685, %v865, 0
  %v1368 = vsel %vm685, %v867, 0
  %v1371 = vsel %vm685, %v869, 0
  %v1374 = vsel %vm685, %v871, 0
  %v1377 = vsel %vm685, %v873, 0
  %v1380 = vsel %vm685, %v875, 0
  %v1383 = vsel %vm685, %v877, 0
  %1385 = vmatprep.subr.mxu0 0.0
  %1386 = vmatpush1.msra.mxu0 %v32
  %1387 = vmatprep.subr.mxu0 0.0
  %1388 = vmatpush1.msra.mxu0 %v33
  %1389 = vmatprep.subr.mxu0 0.0
  %1390 = vmatpush1.msra.mxu0 %v34
  %1391 = vmatprep.subr.mxu0 0.0
  %1392 = vmatpush1.msra.mxu0 %v35
  %1393 = vmatprep.subr.mxu0 0.0
  %1394 = vmatpush1.msra.mxu0 %v36
  %1395 = vmatprep.subr.mxu0 0.0
  %1396 = vmatpush1.msra.mxu0 %v37
  %1397 = vmatprep.subr.mxu0 0.0
  %1398 = vmatpush1.msra.mxu0 %v38
  %1399 = vmatprep.subr.mxu0 0.0
  %1400 = vmatpush1.msra.mxu0 %v39
  %1401 = vmatprep.subr.mxu0 0.0
  %1402 = vmatpush1.msra.mxu0 0.0
  %1403 = vmatprep.subr.mxu0 0.0
  %1404 = vmatpush1.msra.mxu0 0.0
  %1405 = vmatprep.subr.mxu0 0.0
  %1406 = vmatpush1.msra.mxu0 0.0
  %1407 = vmatprep.subr.mxu0 0.0
  %1408 = vmatpush1.msra.mxu0 0.0
  %1409 = vmatprep.subr.mxu0 0.0
  %1410 = vmatpush1.msra.mxu0 0.0
  %1411 = vmatprep.subr.mxu0 0.0
  %1412 = vmatpush1.msra.mxu0 0.0
  %1413 = vmatprep.subr.mxu0 0.0
  %1414 = vmatpush1.msra.mxu0 0.0
  %1415 = vmatprep.subr.mxu0 0.0
  %1416 = vmatpush1.msra.mxu0 0.0
  %1417 = vmatprep.subr.mxu0 0.0
  %1418 = vmatpush1.msra.mxu0 0.0
  %1419 = vmatprep.subr.mxu0 0.0
  %1420 = vmatpush1.msra.mxu0 0.0
  %1421 = vmatprep.subr.mxu0 0.0
  %1422 = vmatpush1.msra.mxu0 0.0
  %1423 = vmatprep.subr.mxu0 0.0
  %1424 = vmatpush1.msra.mxu0 0.0
  %1425 = vmatprep.subr.mxu0 0.0
  %1426 = vmatpush1.msra.mxu0 0.0
  %1427 = vmatprep.subr.mxu0 0.0
  %1428 = vmatpush1.msra.mxu0 0.0
  %1429 = vmatprep.subr.mxu0 0.0
  %1430 = vmatpush1.msra.mxu0 0.0
  %1431 = vmatprep.subr.mxu0 0.0
  %1432 = vmatpush1.msra.mxu0 0.0
  %1433 = vmatprep.subr.mxu0 0.0
  %1434 = vmatpush1.msra.mxu0 0.0
  %1435 = vmatprep.subr.mxu0 0.0
  %1436 = vmatpush1.msra.mxu0 0.0
  %1437 = vmatprep.subr.mxu0 0.0
  %1438 = vmatpush1.msra.mxu0 0.0
  %1439 = vmatprep.subr.mxu0 0.0
  %1440 = vmatpush1.msra.mxu0 0.0
  %1441 = vmatprep.subr.mxu0 0.0
  %1442 = vmatpush1.msra.mxu0 0.0
  %1443 = vmatprep.subr.mxu0 0.0
  %1444 = vmatpush1.msra.mxu0 0.0
  %1445 = vmatprep.subr.mxu0 0.0
  %1446 = vmatpush1.msra.mxu0 0.0
  %1447 = vmatprep.subr.mxu0 0.0
  %1448 = vmatpush1.msra.mxu0 0.0
  %1449 = vmatprep.mubr.f32.mxu0 0.0
  %1450 = vmatmul.mubr.f32.gmra.mrb[0].mxu0 %v1362
  %v1451 = vpop.f32.mrb[0].mxu0
  %v1452 = vadd.f32 0.0, %v1451
  %v1453 = vpop.f32.mrb[0].mxu0
  %1454 = vmatprep.mubr.f32.mxu0 0.0
  %1455 = vmatmul.mubr.f32.gmra.mrb[0].mxu0 %v1365
  %v1456 = vpop.f32.mrb[0].mxu0
  %v1457 = vadd.f32 0.0, %v1456
  %v1458 = vpop.f32.mrb[0].mxu0
  %1459 = vmatprep.mubr.f32.mxu0 0.0
  %1460 = vmatmul.mubr.f32.gmra.mrb[0].mxu0 %v1368
  %v1461 = vpop.f32.mrb[0].mxu0
  %v1462 = vadd.f32 0.0, %v1461
  %v1463 = vpop.f32.mrb[0].mxu0
  %1464 = vmatprep.mubr.f32.mxu0 0.0
  %1465 = vmatmul.mubr.f32.gmra.mrb[0].mxu0 %v1371
  %v1466 = vpop.f32.mrb[0].mxu0
  %v1467 = vadd.f32 0.0, %v1466
  %v1468 = vpop.f32.mrb[0].mxu0
  %1469 = vmatprep.mubr.f32.mxu0 0.0
  %1470 = vmatmul.mubr.f32.gmra.mrb[0].mxu0 %v1374
  %v1471 = vpop.f32.mrb[0].mxu0
  %v1472 = vadd.f32 0.0, %v1471
  %v1473 = vpop.f32.mrb[0].mxu0
  %1474 = vmatprep.mubr.f32.mxu0 0.0
  %1475 = vmatmul.mubr.f32.gmra.mrb[0].mxu0 %v1377
  %v1476 = vpop.f32.mrb[0].mxu0
  %v1477 = vadd.f32 0.0, %v1476
  %v1478 = vpop.f32.mrb[0].mxu0
  %1479 = vmatprep.mubr.f32.mxu0 0.0
  %1480 = vmatmul.mubr.f32.gmra.mrb[0].mxu0 %v1380
  %v1481 = vpop.f32.mrb[0].mxu0
  %v1482 = vadd.f32 0.0, %v1481
  %v1483 = vpop.f32.mrb[0].mxu0
  %1484 = vmatprep.mubr.f32.mxu0 0.0
  %1485 = vmatmul.mubr.f32.gmra.mrb[0].mxu0 %v1383
  %v1486 = vpop.f32.mrb[0].mxu0
  %v1487 = vadd.f32 0.0, %v1486
  %v1488 = vpop.f32.mrb[0].mxu0
  %1489 = vdwg.mxu0
  %v1490 = vrcp.pop %v880
  %v1491 = vrcp.pop %v883
  %v1492 = vrcp.pop %v886
  %v1493 = vrcp.pop %v889
  %v1494 = vrcp.pop %v892
  %v1495 = vrcp.pop %v895
  %v1496 = vrcp.pop %v898
  %v1497 = vrcp.pop %v901
  %v1498 = vrcp.pop %v904
  %v1499 = vrcp.pop %v907
  %v1500 = vrcp.pop %v910
  %v1501 = vrcp.pop %v913
  %v1502 = vrcp.pop %v916
  %v1503 = vrcp.pop %v919
  %v1504 = vrcp.pop %v922
  %v1505 = vrcp.pop %v925
  %v1506 = vrcp.pop %v928
  %v1507 = vrcp.pop %v931
  %v1508 = vrcp.pop %v934
  %v1509 = vrcp.pop %v937
  %v1510 = vrcp.pop %v940
  %v1511 = vrcp.pop %v943
  %v1512 = vrcp.pop %v946
  %v1513 = vrcp.pop %v949
  %v1514 = vrcp.pop %v952
  %v1515 = vrcp.pop %v955
  %v1516 = vrcp.pop %v958
  %v1517 = vrcp.pop %v961
  %v1518 = vrcp.pop %v964
  %v1519 = vrcp.pop %v967
  %v1520 = vrcp.pop %v970
  %v1521 = vrcp.pop %v973
  %v1522 = vmul.f32 %v1065, %v1490
  %v1523 = vmul.f32 %v1070, %v1491
  %v1524 = vmul.f32 %v1075, %v1492
  %v1525 = vmul.f32 %v1080, %v1493
  %v1526 = vmul.f32 %v1085, %v1494
  %v1527 = vmul.f32 %v1090, %v1495
  %v1528 = vmul.f32 %v1095, %v1496
  %v1529 = vmul.f32 %v1100, %v1497
  %v1530 = vmul.f32 %v1194, %v1498
  %v1531 = vmul.f32 %v1199, %v1499
  %v1532 = vmul.f32 %v1204, %v1500
  %v1533 = vmul.f32 %v1209, %v1501
  %v1534 = vmul.f32 %v1214, %v1502
  %v1535 = vmul.f32 %v1219, %v1503
  %v1536 = vmul.f32 %v1224, %v1504
  %v1537 = vmul.f32 %v1229, %v1505
  %v1538 = vmul.f32 %v1323, %v1506
  %v1539 = vmul.f32 %v1328, %v1507
  %v1540 = vmul.f32 %v1333, %v1508
  %v1541 = vmul.f32 %v1338, %v1509
  %v1542 = vmul.f32 %v1343, %v1510
  %v1543 = vmul.f32 %v1348, %v1511
  %v1544 = vmul.f32 %v1353, %v1512
  %v1545 = vmul.f32 %v1358, %v1513
  %v1546 = vmul.f32 %v1452, %v1514
  %v1547 = vmul.f32 %v1457, %v1515
  %v1548 = vmul.f32 %v1462, %v1516
  %v1549 = vmul.f32 %v1467, %v1517
  %v1550 = vmul.f32 %v1472, %v1518
  %v1551 = vmul.f32 %v1477, %v1519
  %v1552 = vmul.f32 %v1482, %v1520
  %v1553 = vmul.f32 %v1487, %v1521
  %1554 = vst.msk [vmem:[%s1] sm:$0xff] %vm72, %v1522
  %1555 = vst.msk [vmem:[%s1 + $0x8] sm:$0xff] %vm72, %v1523
  %1556 = vst.msk [vmem:[%s1 + $0x10] sm:$0xff] %vm72, %v1524
  %1557 = vst.msk [vmem:[%s1 + $0x18] sm:$0xff] %vm72, %v1525
  %1558 = vst.msk [vmem:[%s1 + $0x20] sm:$0xff] %vm72, %v1526
  %1559 = vst.msk [vmem:[%s1 + $0x28] sm:$0xff] %vm72, %v1527
  %1560 = vst.msk [vmem:[%s1 + $0x30] sm:$0xff] %vm72, %v1528
  %1561 = vst.msk [vmem:[%s1 + $0x38] sm:$0xff] %vm72, %v1529
  %1562 = vst.msk [vmem:[%s1 + $0x40] sm:$0xff] %vm72, %v1530
  %1563 = vst.msk [vmem:[%s1 + $0x48] sm:$0xff] %vm72, %v1531
  %1564 = vst.msk [vmem:[%s1 + $0x50] sm:$0xff] %vm72, %v1532
  %1565 = vst.msk [vmem:[%s1 + $0x58] sm:$0xff] %vm72, %v1533
  %1566 = vst.msk [vmem:[%s1 + $0x60] sm:$0xff] %vm72, %v1534
  %1567 = vst.msk [vmem:[%s1 + $0x68] sm:$0xff] %vm72, %v1535
  %1568 = vst.msk [vmem:[%s1 + $0x70] sm:$0xff] %vm72, %v1536
  %1569 = vst.msk [vmem:[%s1 + $0x78] sm:$0xff] %vm72, %v1537
  %1570 = vst.msk [vmem:[%s1 + $0x80] sm:$0xff] %vm72, %v1538
  %1571 = vst.msk [vmem:[%s1 + $0x88] sm:$0xff] %vm72, %v1539
  %1572 = vst.msk [vmem:[%s1 + $0x90] sm:$0xff] %vm72, %v1540
  %1573 = vst.msk [vmem:[%s1 + $0x98] sm:$0xff] %vm72, %v1541
  %1574 = vst.msk [vmem:[%s1 + $0xa0] sm:$0xff] %vm72, %v1542
  %1575 = vst.msk [vmem:[%s1 + $0xa8] sm:$0xff] %vm72, %v1543
  %1576 = vst.msk [vmem:[%s1 + $0xb0] sm:$0xff] %vm72, %v1544
  %1577 = vst.msk [vmem:[%s1 + $0xb8] sm:$0xff] %vm72, %v1545
  %1578 = vst.msk [vmem:[%s1 + $0xc0] sm:$0xff] %vm72, %v1546
  %1579 = vst.msk [vmem:[%s1 + $0xc8] sm:$0xff] %vm72, %v1547
  %1580 = vst.msk [vmem:[%s1 + $0xd0] sm:$0xff] %vm72, %v1548
  %1581 = vst.msk [vmem:[%s1 + $0xd8] sm:$0xff] %vm72, %v1549
  %1582 = vst.msk [vmem:[%s1 + $0xe0] sm:$0xff] %vm72, %v1550
  %1583 = vst.msk [vmem:[%s1 + $0xe8] sm:$0xff] %vm72, %v1551
  %1584 = vst.msk [vmem:[%s1 + $0xf0] sm:$0xff] %vm72, %v1552
  %1585 = vst.msk [vmem:[%s1 + $0xf8] sm:$0xff] %vm72, %v1553
  %1586 = vrot.lane.b32.xlu0 %v40, 120
  %v1587 = vpop.permute.xlu0 %1586
  %1588 = vrot.lane.b32.xlu0 %v41, 120
  %v1589 = vpop.permute.xlu0 %1588
  %1590 = vrot.lane.b32.xlu0 %v42, 120
  %v1591 = vpop.permute.xlu0 %1590
  %1592 = vrot.lane.b32.xlu0 %v43, 120
  %v1593 = vpop.permute.xlu0 %1592
  %1594 = vrot.lane.b32.xlu0 %v44, 120
  %v1595 = vpop.permute.xlu0 %1594
  %1596 = vrot.lane.b32.xlu0 %v45, 120
  %v1597 = vpop.permute.xlu0 %1596
  %1598 = vrot.lane.b32.xlu0 %v46, 120
  %v1599 = vpop.permute.xlu0 %1598
  %1600 = vrot.lane.b32.xlu0 %v47, 120
  %v1601 = vpop.permute.xlu0 %1600
  %1602 = vrot.lane.b32.xlu0 %v8, 120
  %v1603 = vpop.permute.xlu0 %1602
  %1604 = vrot.lane.b32.xlu0 %v9, 120
  %v1605 = vpop.permute.xlu0 %1604
  %1606 = vrot.lane.b32.xlu0 %v10, 120
  %v1607 = vpop.permute.xlu0 %1606
  %1608 = vrot.lane.b32.xlu0 %v11, 120
  %v1609 = vpop.permute.xlu0 %1608
  %1610 = vrot.lane.b32.xlu0 %v12, 120
  %v1611 = vpop.permute.xlu0 %1610
  %1612 = vrot.lane.b32.xlu0 %v13, 120
  %v1613 = vpop.permute.xlu0 %1612
  %1614 = vrot.lane.b32.xlu0 %v14, 120
  %v1615 = vpop.permute.xlu0 %1614
  %1616 = vrot.lane.b32.xlu0 %v15, 120
  %v1617 = vpop.permute.xlu0 %1616
  %v1618 = vsel %vm72, %v1587, 0
  %v1620 = vsel %vm72, %v1589, 0
  %v1622 = vsel %vm72, %v1591, 0
  %v1624 = vsel %vm72, %v1593, 0
  %v1626 = vsel %vm72, %v1595, 0
  %v1628 = vsel %vm72, %v1597, 0
  %v1630 = vsel %vm72, %v1599, 0
  %v1632 = vsel %vm72, %v1601, 0
  %v1634 = vsel %vm72, %v1603, 0
  %v1636 = vsel %vm72, %v1605, 0
  %v1638 = vsel %vm72, %v1607, 0
  %v1640 = vsel %vm72, %v1609, 0
  %v1642 = vsel %vm72, %v1611, 0
  %v1644 = vsel %vm72, %v1613, 0
  %v1646 = vsel %vm72, %v1615, 0
  %v1648 = vsel %vm72, %v1617, 0
  %1650 = vmatprep.subr.mxu0 0.0
  %1651 = vmatpush1.xpose.msra.mxu0 %v1634
  %1652 = vmatprep.subr.mxu0 0.0
  %1653 = vmatpush1.xpose.msra.mxu0 %v1636
  %1654 = vmatprep.subr.mxu0 0.0
  %1655 = vmatpush1.xpose.msra.mxu0 %v1638
  %1656 = vmatprep.subr.mxu0 0.0
  %1657 = vmatpush1.xpose.msra.mxu0 %v1640
  %1658 = vmatprep.subr.mxu0 0.0
  %1659 = vmatpush1.xpose.msra.mxu0 %v1642
  %1660 = vmatprep.subr.mxu0 0.0
  %1661 = vmatpush1.xpose.msra.mxu0 %v1644
  %1662 = vmatprep.subr.mxu0 0.0
  %1663 = vmatpush1.xpose.msra.mxu0 %v1646
  %1664 = vmatprep.subr.mxu0 0.0
  %1665 = vmatpush1.xpose.msra.mxu0 %v1648
  %1666 = vmatprep.subr.mxu0 0.0
  %1667 = vmatpush1.xpose.msra.mxu0 0.0
  %1668 = vmatprep.subr.mxu0 0.0
  %1669 = vmatpush1.xpose.msra.mxu0 0.0
  %1670 = vmatprep.subr.mxu0 0.0
  %1671 = vmatpush1.xpose.msra.mxu0 0.0
  %1672 = vmatprep.subr.mxu0 0.0
  %1673 = vmatpush1.xpose.msra.mxu0 0.0
  %1674 = vmatprep.subr.mxu0 0.0
  %1675 = vmatpush1.xpose.msra.mxu0 0.0
  %1676 = vmatprep.subr.mxu0 0.0
  %1677 = vmatpush1.xpose.msra.mxu0 0.0
  %1678 = vmatprep.subr.mxu0 0.0
  %1679 = vmatpush1.xpose.msra.mxu0 0.0
  %1680 = vmatprep.subr.mxu0 0.0
  %1681 = vmatpush1.xpose.msra.mxu0 0.0
  %1682 = vmatprep.subr.mxu0 0.0
  %1683 = vmatpush1.xpose.msra.mxu0 0.0
  %1684 = vmatprep.subr.mxu0 0.0
  %1685 = vmatpush1.xpose.msra.mxu0 0.0
  %1686 = vmatprep.subr.mxu0 0.0
  %1687 = vmatpush1.xpose.msra.mxu0 0.0
  %1688 = vmatprep.subr.mxu0 0.0
  %1689 = vmatpush1.xpose.msra.mxu0 0.0
  %1690 = vmatprep.subr.mxu0 0.0
  %1691 = vmatpush1.xpose.msra.mxu0 0.0
  %1692 = vmatprep.subr.mxu0 0.0
  %1693 = vmatpush1.xpose.msra.mxu0 0.0
  %1694 = vmatprep.subr.mxu0 0.0
  %1695 = vmatpush1.xpose.msra.mxu0 0.0
  %1696 = vmatprep.subr.mxu0 0.0
  %1697 = vmatpush1.xpose.msra.mxu0 0.0
  %1698 = vmatprep.subr.mxu0 0.0
  %1699 = vmatpush1.xpose.msra.mxu0 0.0
  %1700 = vmatprep.subr.mxu0 0.0
  %1701 = vmatpush1.xpose.msra.mxu0 0.0
  %1702 = vmatprep.subr.mxu0 0.0
  %1703 = vmatpush1.xpose.msra.mxu0 0.0
  %1704 = vmatprep.subr.mxu0 0.0
  %1705 = vmatpush1.xpose.msra.mxu0 0.0
  %1706 = vmatprep.subr.mxu0 0.0
  %1707 = vmatpush1.xpose.msra.mxu0 0.0
  %1708 = vmatprep.subr.mxu0 0.0
  %1709 = vmatpush1.xpose.msra.mxu0 0.0
  %1710 = vmatprep.subr.mxu0 0.0
  %1711 = vmatpush1.xpose.msra.mxu0 0.0
  %1712 = vmatprep.subr.mxu0 0.0
  %1713 = vmatpush1.xpose.msra.mxu0 0.0
  %1714 = vmatprep.mubr.f32.mxu0 0.0
  %1715 = vmatmul.mubr.f32.gmra.mrb[0].mxu0 %v1618
  %v1716 = vpop.f32.mrb[0].mxu0
  %v1717 = vadd.f32 0.0, %v1716
  %v1718 = vpop.f32.mrb[0].mxu0
  %1719 = vmatprep.mubr.f32.mxu0 0.0
  %1720 = vmatmul.mubr.f32.gmra.mrb[0].mxu0 %v1620
  %v1721 = vpop.f32.mrb[0].mxu0
  %v1722 = vadd.f32 0.0, %v1721
  %v1723 = vpop.f32.mrb[0].mxu0
  %1724 = vmatprep.mubr.f32.mxu0 0.0
  %1725 = vmatmul.mubr.f32.gmra.mrb[0].mxu0 %v1622
  %v1726 = vpop.f32.mrb[0].mxu0
  %v1727 = vadd.f32 0.0, %v1726
  %v1728 = vpop.f32.mrb[0].mxu0
  %1729 = vmatprep.mubr.f32.mxu0 0.0
  %1730 = vmatmul.mubr.f32.gmra.mrb[0].mxu0 %v1624
  %v1731 = vpop.f32.mrb[0].mxu0
  %v1732 = vadd.f32 0.0, %v1731
  %v1733 = vpop.f32.mrb[0].mxu0
  %1734 = vmatprep.mubr.f32.mxu0 0.0
  %1735 = vmatmul.mubr.f32.gmra.mrb[0].mxu0 %v1626
  %v1736 = vpop.f32.mrb[0].mxu0
  %v1737 = vadd.f32 0.0, %v1736
  %v1738 = vpop.f32.mrb[0].mxu0
  %1739 = vmatprep.mubr.f32.mxu0 0.0
  %1740 = vmatmul.mubr.f32.gmra.mrb[0].mxu0 %v1628
  %v1741 = vpop.f32.mrb[0].mxu0
  %v1742 = vadd.f32 0.0, %v1741
  %v1743 = vpop.f32.mrb[0].mxu0
  %1744 = vmatprep.mubr.f32.mxu0 0.0
  %1745 = vmatmul.mubr.f32.gmra.mrb[0].mxu0 %v1630
  %v1746 = vpop.f32.mrb[0].mxu0
  %v1747 = vadd.f32 0.0, %v1746
  %v1748 = vpop.f32.mrb[0].mxu0
  %1749 = vmatprep.mubr.f32.mxu0 0.0
  %1750 = vmatmul.mubr.f32.gmra.mrb[0].mxu0 %v1632
  %v1751 = vpop.f32.mrb[0].mxu0
  %v1752 = vadd.f32 0.0, %v1751
  %v1753 = vpop.f32.mrb[0].mxu0
  %1754 = vdwg.mxu0
  %1755 = vrot.lane.b32.xlu0 %v48, 120
  %v1756 = vpop.permute.xlu0 %1755
  %1757 = vrot.lane.b32.xlu0 %v49, 120
  %v1758 = vpop.permute.xlu0 %1757
  %1759 = vrot.lane.b32.xlu0 %v50, 120
  %v1760 = vpop.permute.xlu0 %1759
  %1761 = vrot.lane.b32.xlu0 %v51, 120
  %v1762 = vpop.permute.xlu0 %1761
  %1763 = vrot.lane.b32.xlu0 %v52, 120
  %v1764 = vpop.permute.xlu0 %1763
  %1765 = vrot.lane.b32.xlu0 %v53, 120
  %v1766 = vpop.permute.xlu0 %1765
  %1767 = vrot.lane.b32.xlu0 %v54, 120
  %v1768 = vpop.permute.xlu0 %1767
  %1769 = vrot.lane.b32.xlu0 %v55, 120
  %v1770 = vpop.permute.xlu0 %1769
  %1771 = vrot.lane.b32.xlu0 %v16, 120
  %v1772 = vpop.permute.xlu0 %1771
  %1773 = vrot.lane.b32.xlu0 %v17, 120
  %v1774 = vpop.permute.xlu0 %1773
  %1775 = vrot.lane.b32.xlu0 %v18, 120
  %v1776 = vpop.permute.xlu0 %1775
  %1777 = vrot.lane.b32.xlu0 %v19, 120
  %v1778 = vpop.permute.xlu0 %1777
  %1779 = vrot.lane.b32.xlu0 %v20, 120
  %v1780 = vpop.permute.xlu0 %1779
  %1781 = vrot.lane.b32.xlu0 %v21, 120
  %v1782 = vpop.permute.xlu0 %1781
  %1783 = vrot.lane.b32.xlu0 %v22, 120
  %v1784 = vpop.permute.xlu0 %1783
  %1785 = vrot.lane.b32.xlu0 %v23, 120
  %v1786 = vpop.permute.xlu0 %1785
  %v1787 = vsel %vm72, %v1756, 0
  %v1789 = vsel %vm72, %v1758, 0
  %v1791 = vsel %vm72, %v1760, 0
  %v1793 = vsel %vm72, %v1762, 0
  %v1795 = vsel %vm72, %v1764, 0
  %v1797 = vsel %vm72, %v1766, 0
  %v1799 = vsel %vm72, %v1768, 0
  %v1801 = vsel %vm72, %v1770, 0
  %v1803 = vsel %vm72, %v1772, 0
  %v1805 = vsel %vm72, %v1774, 0
  %v1807 = vsel %vm72, %v1776, 0
  %v1809 = vsel %vm72, %v1778, 0
  %v1811 = vsel %vm72, %v1780, 0
  %v1813 = vsel %vm72, %v1782, 0
  %v1815 = vsel %vm72, %v1784, 0
  %v1817 = vsel %vm72, %v1786, 0
  %1819 = vmatprep.subr.mxu0 0.0
  %1820 = vmatpush1.xpose.msra.mxu0 %v1803
  %1821 = vmatprep.subr.mxu0 0.0
  %1822 = vmatpush1.xpose.msra.mxu0 %v1805
  %1823 = vmatprep.subr.mxu0 0.0
  %1824 = vmatpush1.xpose.msra.mxu0 %v1807
  %1825 = vmatprep.subr.mxu0 0.0
  %1826 = vmatpush1.xpose.msra.mxu0 %v1809
  %1827 = vmatprep.subr.mxu0 0.0
  %1828 = vmatpush1.xpose.msra.mxu0 %v1811
  %1829 = vmatprep.subr.mxu0 0.0
  %1830 = vmatpush1.xpose.msra.mxu0 %v1813
  %1831 = vmatprep.subr.mxu0 0.0
  %1832 = vmatpush1.xpose.msra.mxu0 %v1815
  %1833 = vmatprep.subr.mxu0 0.0
  %1834 = vmatpush1.xpose.msra.mxu0 %v1817
  %1835 = vmatprep.subr.mxu0 0.0
  %1836 = vmatpush1.xpose.msra.mxu0 0.0
  %1837 = vmatprep.subr.mxu0 0.0
  %1838 = vmatpush1.xpose.msra.mxu0 0.0
  %1839 = vmatprep.subr.mxu0 0.0
  %1840 = vmatpush1.xpose.msra.mxu0 0.0
  %1841 = vmatprep.subr.mxu0 0.0
  %1842 = vmatpush1.xpose.msra.mxu0 0.0
  %1843 = vmatprep.subr.mxu0 0.0
  %1844 = vmatpush1.xpose.msra.mxu0 0.0
  %1845 = vmatprep.subr.mxu0 0.0
  %1846 = vmatpush1.xpose.msra.mxu0 0.0
  %1847 = vmatprep.subr.mxu0 0.0
  %1848 = vmatpush1.xpose.msra.mxu0 0.0
  %1849 = vmatprep.subr.mxu0 0.0
  %1850 = vmatpush1.xpose.msra.mxu0 0.0
  %1851 = vmatprep.subr.mxu0 0.0
  %1852 = vmatpush1.xpose.msra.mxu0 0.0
  %1853 = vmatprep.subr.mxu0 0.0
  %1854 = vmatpush1.xpose.msra.mxu0 0.0
  %1855 = vmatprep.subr.mxu0 0.0
  %1856 = vmatpush1.xpose.msra.mxu0 0.0
  %1857 = vmatprep.subr.mxu0 0.0
  %1858 = vmatpush1.xpose.msra.mxu0 0.0
  %1859 = vmatprep.subr.mxu0 0.0
  %1860 = vmatpush1.xpose.msra.mxu0 0.0
  %1861 = vmatprep.subr.mxu0 0.0
  %1862 = vmatpush1.xpose.msra.mxu0 0.0
  %1863 = vmatprep.subr.mxu0 0.0
  %1864 = vmatpush1.xpose.msra.mxu0 0.0
  %1865 = vmatprep.subr.mxu0 0.0
  %1866 = vmatpush1.xpose.msra.mxu0 0.0
  %1867 = vmatprep.subr.mxu0 0.0
  %1868 = vmatpush1.xpose.msra.mxu0 0.0
  %1869 = vmatprep.subr.mxu0 0.0
  %1870 = vmatpush1.xpose.msra.mxu0 0.0
  %1871 = vmatprep.subr.mxu0 0.0
  %1872 = vmatpush1.xpose.msra.mxu0 0.0
  %1873 = vmatprep.subr.mxu0 0.0
  %1874 = vmatpush1.xpose.msra.mxu0 0.0
  %1875 = vmatprep.subr.mxu0 0.0
  %1876 = vmatpush1.xpose.msra.mxu0 0.0
  %1877 = vmatprep.subr.mxu0 0.0
  %1878 = vmatpush1.xpose.msra.mxu0 0.0
  %1879 = vmatprep.subr.mxu0 0.0
  %1880 = vmatpush1.xpose.msra.mxu0 0.0
  %1881 = vmatprep.subr.mxu0 0.0
  %1882 = vmatpush1.xpose.msra.mxu0 0.0
  %1883 = vmatprep.mubr.f32.mxu0 0.0
  %1884 = vmatmul.mubr.f32.gmra.mrb[0].mxu0 %v1787
  %v1885 = vpop.f32.mrb[0].mxu0
  %v1886 = vadd.f32 0.0, %v1885
  %v1887 = vpop.f32.mrb[0].mxu0
  %1888 = vmatprep.mubr.f32.mxu0 0.0
  %1889 = vmatmul.mubr.f32.gmra.mrb[0].mxu0 %v1789
  %v1890 = vpop.f32.mrb[0].mxu0
  %v1891 = vadd.f32 0.0, %v1890
  %v1892 = vpop.f32.mrb[0].mxu0
  %1893 = vmatprep.mubr.f32.mxu0 0.0
  %1894 = vmatmul.mubr.f32.gmra.mrb[0].mxu0 %v1791
  %v1895 = vpop.f32.mrb[0].mxu0
  %v1896 = vadd.f32 0.0, %v1895
  %v1897 = vpop.f32.mrb[0].mxu0
  %1898 = vmatprep.mubr.f32.mxu0 0.0
  %1899 = vmatmul.mubr.f32.gmra.mrb[0].mxu0 %v1793
  %v1900 = vpop.f32.mrb[0].mxu0
  %v1901 = vadd.f32 0.0, %v1900
  %v1902 = vpop.f32.mrb[0].mxu0
  %1903 = vmatprep.mubr.f32.mxu0 0.0
  %1904 = vmatmul.mubr.f32.gmra.mrb[0].mxu0 %v1795
  %v1905 = vpop.f32.mrb[0].mxu0
  %v1906 = vadd.f32 0.0, %v1905
  %v1907 = vpop.f32.mrb[0].mxu0
  %1908 = vmatprep.mubr.f32.mxu0 0.0
  %1909 = vmatmul.mubr.f32.gmra.mrb[0].mxu0 %v1797
  %v1910 = vpop.f32.mrb[0].mxu0
  %v1911 = vadd.f32 0.0, %v1910
  %v1912 = vpop.f32.mrb[0].mxu0
  %1913 = vmatprep.mubr.f32.mxu0 0.0
  %1914 = vmatmul.mubr.f32.gmra.mrb[0].mxu0 %v1799
  %v1915 = vpop.f32.mrb[0].mxu0
  %v1916 = vadd.f32 0.0, %v1915
  %v1917 = vpop.f32.mrb[0].mxu0
  %1918 = vmatprep.mubr.f32.mxu0 0.0
  %1919 = vmatmul.mubr.f32.gmra.mrb[0].mxu0 %v1801
  %v1920 = vpop.f32.mrb[0].mxu0
  %v1921 = vadd.f32 0.0, %v1920
  %v1922 = vpop.f32.mrb[0].mxu0
  %1923 = vdwg.mxu0
  %1924 = vrot.lane.b32.xlu0 %v56, 120
  %v1925 = vpop.permute.xlu0 %1924
  %1926 = vrot.lane.b32.xlu0 %v57, 120
  %v1927 = vpop.permute.xlu0 %1926
  %1928 = vrot.lane.b32.xlu0 %v58, 120
  %v1929 = vpop.permute.xlu0 %1928
  %1930 = vrot.lane.b32.xlu0 %v59, 120
  %v1931 = vpop.permute.xlu0 %1930
  %1932 = vrot.lane.b32.xlu0 %v60, 120
  %v1933 = vpop.permute.xlu0 %1932
  %1934 = vrot.lane.b32.xlu0 %v61, 120
  %v1935 = vpop.permute.xlu0 %1934
  %1936 = vrot.lane.b32.xlu0 %v62, 120
  %v1937 = vpop.permute.xlu0 %1936
  %1938 = vrot.lane.b32.xlu0 %v63, 120
  %v1939 = vpop.permute.xlu0 %1938
  %1940 = vrot.lane.b32.xlu0 %v24, 120
  %v1941 = vpop.permute.xlu0 %1940
  %1942 = vrot.lane.b32.xlu0 %v25, 120
  %v1943 = vpop.permute.xlu0 %1942
  %1944 = vrot.lane.b32.xlu0 %v26, 120
  %v1945 = vpop.permute.xlu0 %1944
  %1946 = vrot.lane.b32.xlu0 %v27, 120
  %v1947 = vpop.permute.xlu0 %1946
  %1948 = vrot.lane.b32.xlu0 %v28, 120
  %v1949 = vpop.permute.xlu0 %1948
  %1950 = vrot.lane.b32.xlu0 %v29, 120
  %v1951 = vpop.permute.xlu0 %1950
  %1952 = vrot.lane.b32.xlu0 %v30, 120
  %v1953 = vpop.permute.xlu0 %1952
  %1954 = vrot.lane.b32.xlu0 %v31, 120
  %v1955 = vpop.permute.xlu0 %1954
  %v1956 = vsel %vm72, %v1925, 0
  %v1958 = vsel %vm72, %v1927, 0
  %v1960 = vsel %vm72, %v1929, 0
  %v1962 = vsel %vm72, %v1931, 0
  %v1964 = vsel %vm72, %v1933, 0
  %v1966 = vsel %vm72, %v1935, 0
  %v1968 = vsel %vm72, %v1937, 0
  %v1970 = vsel %vm72, %v1939, 0
  %v1972 = vsel %vm72, %v1941, 0
  %v1974 = vsel %vm72, %v1943, 0
  %v1976 = vsel %vm72, %v1945, 0
  %v1978 = vsel %vm72, %v1947, 0
  %v1980 = vsel %vm72, %v1949, 0
  %v1982 = vsel %vm72, %v1951, 0
  %v1984 = vsel %vm72, %v1953, 0
  %v1986 = vsel %vm72, %v1955, 0
  %1988 = vmatprep.subr.mxu0 0.0
  %1989 = vmatpush1.xpose.msra.mxu0 %v1972
  %1990 = vmatprep.subr.mxu0 0.0
  %1991 = vmatpush1.xpose.msra.mxu0 %v1974
  %1992 = vmatprep.subr.mxu0 0.0
  %1993 = vmatpush1.xpose.msra.mxu0 %v1976
  %1994 = vmatprep.subr.mxu0 0.0
  %1995 = vmatpush1.xpose.msra.mxu0 %v1978
  %1996 = vmatprep.subr.mxu0 0.0
  %1997 = vmatpush1.xpose.msra.mxu0 %v1980
  %1998 = vmatprep.subr.mxu0 0.0
  %1999 = vmatpush1.xpose.msra.mxu0 %v1982
  %2000 = vmatprep.subr.mxu0 0.0
  %2001 = vmatpush1.xpose.msra.mxu0 %v1984
  %2002 = vmatprep.subr.mxu0 0.0
  %2003 = vmatpush1.xpose.msra.mxu0 %v1986
  %2004 = vmatprep.subr.mxu0 0.0
  %2005 = vmatpush1.xpose.msra.mxu0 0.0
  %2006 = vmatprep.subr.mxu0 0.0
  %2007 = vmatpush1.xpose.msra.mxu0 0.0
  %2008 = vmatprep.subr.mxu0 0.0
  %2009 = vmatpush1.xpose.msra.mxu0 0.0
  %2010 = vmatprep.subr.mxu0 0.0
  %2011 = vmatpush1.xpose.msra.mxu0 0.0
  %2012 = vmatprep.subr.mxu0 0.0
  %2013 = vmatpush1.xpose.msra.mxu0 0.0
  %2014 = vmatprep.subr.mxu0 0.0
  %2015 = vmatpush1.xpose.msra.mxu0 0.0
  %2016 = vmatprep.subr.mxu0 0.0
  %2017 = vmatpush1.xpose.msra.mxu0 0.0
  %2018 = vmatprep.subr.mxu0 0.0
  %2019 = vmatpush1.xpose.msra.mxu0 0.0
  %2020 = vmatprep.subr.mxu0 0.0
  %2021 = vmatpush1.xpose.msra.mxu0 0.0
  %2022 = vmatprep.subr.mxu0 0.0
  %2023 = vmatpush1.xpose.msra.mxu0 0.0
  %2024 = vmatprep.subr.mxu0 0.0
  %2025 = vmatpush1.xpose.msra.mxu0 0.0
  %2026 = vmatprep.subr.mxu0 0.0
  %2027 = vmatpush1.xpose.msra.mxu0 0.0
  %2028 = vmatprep.subr.mxu0 0.0
  %2029 = vmatpush1.xpose.msra.mxu0 0.0
  %2030 = vmatprep.subr.mxu0 0.0
  %2031 = vmatpush1.xpose.msra.mxu0 0.0
  %2032 = vmatprep.subr.mxu0 0.0
  %2033 = vmatpush1.xpose.msra.mxu0 0.0
  %2034 = vmatprep.subr.mxu0 0.0
  %2035 = vmatpush1.xpose.msra.mxu0 0.0
  %2036 = vmatprep.subr.mxu0 0.0
  %2037 = vmatpush1.xpose.msra.mxu0 0.0
  %2038 = vmatprep.subr.mxu0 0.0
  %2039 = vmatpush1.xpose.msra.mxu0 0.0
  %2040 = vmatprep.subr.mxu0 0.0
  %2041 = vmatpush1.xpose.msra.mxu0 0.0
  %2042 = vmatprep.subr.mxu0 0.0
  %2043 = vmatpush1.xpose.msra.mxu0 0.0
  %2044 = vmatprep.subr.mxu0 0.0
  %2045 = vmatpush1.xpose.msra.mxu0 0.0
  %2046 = vmatprep.subr.mxu0 0.0
  %2047 = vmatpush1.xpose.msra.mxu0 0.0
  %2048 = vmatprep.subr.mxu0 0.0
  %2049 = vmatpush1.xpose.msra.mxu0 0.0
  %2050 = vmatprep.subr.mxu0 0.0
  %2051 = vmatpush1.xpose.msra.mxu0 0.0
  %2052 = vmatprep.mubr.f32.mxu0 0.0
  %2053 = vmatmul.mubr.f32.gmra.mrb[0].mxu0 %v1956
  %v2054 = vpop.f32.mrb[0].mxu0
  %v2055 = vadd.f32 0.0, %v2054
  %v2056 = vpop.f32.mrb[0].mxu0
  %2057 = vmatprep.mubr.f32.mxu0 0.0
  %2058 = vmatmul.mubr.f32.gmra.mrb[0].mxu0 %v1958
  %v2059 = vpop.f32.mrb[0].mxu0
  %v2060 = vadd.f32 0.0, %v2059
  %v2061 = vpop.f32.mrb[0].mxu0
  %2062 = vmatprep.mubr.f32.mxu0 0.0
  %2063 = vmatmul.mubr.f32.gmra.mrb[0].mxu0 %v1960
  %v2064 = vpop.f32.mrb[0].mxu0
  %v2065 = vadd.f32 0.0, %v2064
  %v2066 = vpop.f32.mrb[0].mxu0
  %2067 = vmatprep.mubr.f32.mxu0 0.0
  %2068 = vmatmul.mubr.f32.gmra.mrb[0].mxu0 %v1962
  %v2069 = vpop.f32.mrb[0].mxu0
  %v2070 = vadd.f32 0.0, %v2069
  %v2071 = vpop.f32.mrb[0].mxu0
  %2072 = vmatprep.mubr.f32.mxu0 0.0
  %2073 = vmatmul.mubr.f32.gmra.mrb[0].mxu0 %v1964
  %v2074 = vpop.f32.mrb[0].mxu0
  %v2075 = vadd.f32 0.0, %v2074
  %v2076 = vpop.f32.mrb[0].mxu0
  %2077 = vmatprep.mubr.f32.mxu0 0.0
  %2078 = vmatmul.mubr.f32.gmra.mrb[0].mxu0 %v1966
  %v2079 = vpop.f32.mrb[0].mxu0
  %v2080 = vadd.f32 0.0, %v2079
  %v2081 = vpop.f32.mrb[0].mxu0
  %2082 = vmatprep.mubr.f32.mxu0 0.0
  %2083 = vmatmul.mubr.f32.gmra.mrb[0].mxu0 %v1968
  %v2084 = vpop.f32.mrb[0].mxu0
  %v2085 = vadd.f32 0.0, %v2084
  %v2086 = vpop.f32.mrb[0].mxu0
  %2087 = vmatprep.mubr.f32.mxu0 0.0
  %2088 = vmatmul.mubr.f32.gmra.mrb[0].mxu0 %v1970
  %v2089 = vpop.f32.mrb[0].mxu0
  %v2090 = vadd.f32 0.0, %v2089
  %v2091 = vpop.f32.mrb[0].mxu0
  %2092 = vdwg.mxu0
  %2093 = vrot.lane.b32.xlu0 %v64, 120
  %v2094 = vpop.permute.xlu0 %2093
  %2095 = vrot.lane.b32.xlu0 %v65, 120
  %v2096 = vpop.permute.xlu0 %2095
  %2097 = vrot.lane.b32.xlu0 %v66, 120
  %v2098 = vpop.permute.xlu0 %2097
  %2099 = vrot.lane.b32.xlu0 %v67, 120
  %v2100 = vpop.permute.xlu0 %2099
  %2101 = vrot.lane.b32.xlu0 %v68, 120
  %v2102 = vpop.permute.xlu0 %2101
  %2103 = vrot.lane.b32.xlu0 %v69, 120
  %v2104 = vpop.permute.xlu0 %2103
  %2105 = vrot.lane.b32.xlu0 %v70, 120
  %v2106 = vpop.permute.xlu0 %2105
  %2107 = vrot.lane.b32.xlu0 %v71, 120
  %v2108 = vpop.permute.xlu0 %2107
  %2109 = vrot.lane.b32.xlu0 %v32, 120
  %v2110 = vpop.permute.xlu0 %2109
  %2111 = vrot.lane.b32.xlu0 %v33, 120
  %v2112 = vpop.permute.xlu0 %2111
  %2113 = vrot.lane.b32.xlu0 %v34, 120
  %v2114 = vpop.permute.xlu0 %2113
  %2115 = vrot.lane.b32.xlu0 %v35, 120
  %v2116 = vpop.permute.xlu0 %2115
  %2117 = vrot.lane.b32.xlu0 %v36, 120
  %v2118 = vpop.permute.xlu0 %2117
  %2119 = vrot.lane.b32.xlu0 %v37, 120
  %v2120 = vpop.permute.xlu0 %2119
  %2121 = vrot.lane.b32.xlu0 %v38, 120
  %v2122 = vpop.permute.xlu0 %2121
  %2123 = vrot.lane.b32.xlu0 %v39, 120
  %v2124 = vpop.permute.xlu0 %2123
  %v2125 = vsel %vm72, %v2094, 0
  %v2127 = vsel %vm72, %v2096, 0
  %v2129 = vsel %vm72, %v2098, 0
  %v2131 = vsel %vm72, %v2100, 0
  %v2133 = vsel %vm72, %v2102, 0
  %v2135 = vsel %vm72, %v2104, 0
  %v2137 = vsel %vm72, %v2106, 0
  %v2139 = vsel %vm72, %v2108, 0
  %v2141 = vsel %vm72, %v2110, 0
  %v2143 = vsel %vm72, %v2112, 0
  %v2145 = vsel %vm72, %v2114, 0
  %v2147 = vsel %vm72, %v2116, 0
  %v2149 = vsel %vm72, %v2118, 0
  %v2151 = vsel %vm72, %v2120, 0
  %v2153 = vsel %vm72, %v2122, 0
  %v2155 = vsel %vm72, %v2124, 0
  %2157 = vmatprep.subr.mxu0 0.0
  %2158 = vmatpush1.xpose.msra.mxu0 %v2141
  %2159 = vmatprep.subr.mxu0 0.0
  %2160 = vmatpush1.xpose.msra.mxu0 %v2143
  %2161 = vmatprep.subr.mxu0 0.0
  %2162 = vmatpush1.xpose.msra.mxu0 %v2145
  %2163 = vmatprep.subr.mxu0 0.0
  %2164 = vmatpush1.xpose.msra.mxu0 %v2147
  %2165 = vmatprep.subr.mxu0 0.0
  %2166 = vmatpush1.xpose.msra.mxu0 %v2149
  %2167 = vmatprep.subr.mxu0 0.0
  %2168 = vmatpush1.xpose.msra.mxu0 %v2151
  %2169 = vmatprep.subr.mxu0 0.0
  %2170 = vmatpush1.xpose.msra.mxu0 %v2153
  %2171 = vmatprep.subr.mxu0 0.0
  %2172 = vmatpush1.xpose.msra.mxu0 %v2155
  %2173 = vmatprep.subr.mxu0 0.0
  %2174 = vmatpush1.xpose.msra.mxu0 0.0
  %2175 = vmatprep.subr.mxu0 0.0
  %2176 = vmatpush1.xpose.msra.mxu0 0.0
  %2177 = vmatprep.subr.mxu0 0.0
  %2178 = vmatpush1.xpose.msra.mxu0 0.0
  %2179 = vmatprep.subr.mxu0 0.0
  %2180 = vmatpush1.xpose.msra.mxu0 0.0
  %2181 = vmatprep.subr.mxu0 0.0
  %2182 = vmatpush1.xpose.msra.mxu0 0.0
  %2183 = vmatprep.subr.mxu0 0.0
  %2184 = vmatpush1.xpose.msra.mxu0 0.0
  %2185 = vmatprep.subr.mxu0 0.0
  %2186 = vmatpush1.xpose.msra.mxu0 0.0
  %2187 = vmatprep.subr.mxu0 0.0
  %2188 = vmatpush1.xpose.msra.mxu0 0.0
  %2189 = vmatprep.subr.mxu0 0.0
  %2190 = vmatpush1.xpose.msra.mxu0 0.0
  %2191 = vmatprep.subr.mxu0 0.0
  %2192 = vmatpush1.xpose.msra.mxu0 0.0
  %2193 = vmatprep.subr.mxu0 0.0
  %2194 = vmatpush1.xpose.msra.mxu0 0.0
  %2195 = vmatprep.subr.mxu0 0.0
  %2196 = vmatpush1.xpose.msra.mxu0 0.0
  %2197 = vmatprep.subr.mxu0 0.0
  %2198 = vmatpush1.xpose.msra.mxu0 0.0
  %2199 = vmatprep.subr.mxu0 0.0
  %2200 = vmatpush1.xpose.msra.mxu0 0.0
  %2201 = vmatprep.subr.mxu0 0.0
  %2202 = vmatpush1.xpose.msra.mxu0 0.0
  %2203 = vmatprep.subr.mxu0 0.0
  %2204 = vmatpush1.xpose.msra.mxu0 0.0
  %2205 = vmatprep.subr.mxu0 0.0
  %2206 = vmatpush1.xpose.msra.mxu0 0.0
  %2207 = vmatprep.subr.mxu0 0.0
  %2208 = vmatpush1.xpose.msra.mxu0 0.0
  %2209 = vmatprep.subr.mxu0 0.0
  %2210 = vmatpush1.xpose.msra.mxu0 0.0
  %2211 = vmatprep.subr.mxu0 0.0
  %2212 = vmatpush1.xpose.msra.mxu0 0.0
  %2213 = vmatprep.subr.mxu0 0.0
  %2214 = vmatpush1.xpose.msra.mxu0 0.0
  %2215 = vmatprep.subr.mxu0 0.0
  %2216 = vmatpush1.xpose.msra.mxu0 0.0
  %2217 = vmatprep.subr.mxu0 0.0
  %2218 = vmatpush1.xpose.msra.mxu0 0.0
  %2219 = vmatprep.subr.mxu0 0.0
  %2220 = vmatpush1.xpose.msra.mxu0 0.0
  %2221 = vmatprep.mubr.f32.mxu0 0.0
  %2222 = vmatmul.mubr.f32.gmra.mrb[0].mxu0 %v2125
  %v2223 = vpop.f32.mrb[0].mxu0
  %v2224 = vadd.f32 0.0, %v2223
  %v2225 = vpop.f32.mrb[0].mxu0
  %2226 = vmatprep.mubr.f32.mxu0 0.0
  %2227 = vmatmul.mubr.f32.gmra.mrb[0].mxu0 %v2127
  %v2228 = vpop.f32.mrb[0].mxu0
  %v2229 = vadd.f32 0.0, %v2228
  %v2230 = vpop.f32.mrb[0].mxu0
  %2231 = vmatprep.mubr.f32.mxu0 0.0
  %2232 = vmatmul.mubr.f32.gmra.mrb[0].mxu0 %v2129
  %v2233 = vpop.f32.mrb[0].mxu0
  %v2234 = vadd.f32 0.0, %v2233
  %v2235 = vpop.f32.mrb[0].mxu0
  %2236 = vmatprep.mubr.f32.mxu0 0.0
  %2237 = vmatmul.mubr.f32.gmra.mrb[0].mxu0 %v2131
  %v2238 = vpop.f32.mrb[0].mxu0
  %v2239 = vadd.f32 0.0, %v2238
  %v2240 = vpop.f32.mrb[0].mxu0
  %2241 = vmatprep.mubr.f32.mxu0 0.0
  %2242 = vmatmul.mubr.f32.gmra.mrb[0].mxu0 %v2133
  %v2243 = vpop.f32.mrb[0].mxu0
  %v2244 = vadd.f32 0.0, %v2243
  %v2245 = vpop.f32.mrb[0].mxu0
  %2246 = vmatprep.mubr.f32.mxu0 0.0
  %2247 = vmatmul.mubr.f32.gmra.mrb[0].mxu0 %v2135
  %v2248 = vpop.f32.mrb[0].mxu0
  %v2249 = vadd.f32 0.0, %v2248
  %v2250 = vpop.f32.mrb[0].mxu0
  %2251 = vmatprep.mubr.f32.mxu0 0.0
  %2252 = vmatmul.mubr.f32.gmra.mrb[0].mxu0 %v2137
  %v2253 = vpop.f32.mrb[0].mxu0
  %v2254 = vadd.f32 0.0, %v2253
  %v2255 = vpop.f32.mrb[0].mxu0
  %2256 = vmatprep.mubr.f32.mxu0 0.0
  %2257 = vmatmul.mubr.f32.gmra.mrb[0].mxu0 %v2139
  %v2258 = vpop.f32.mrb[0].mxu0
  %v2259 = vadd.f32 0.0, %v2258
  %v2260 = vpop.f32.mrb[0].mxu0
  %2261 = vdwg.mxu0
  %v2262 = vsel %vm685, %v1717, -inf
  %2263 = vmax.xlane.f32.xlu0 %v2262
  %v2264 = vpop.xlane.xlu0 %2263
  %v2265 = vsel %vm685, %v1722, -inf
  %2266 = vmax.xlane.f32.xlu0 %v2265
  %v2267 = vpop.xlane.xlu0 %2266
  %v2268 = vsel %vm685, %v1727, -inf
  %2269 = vmax.xlane.f32.xlu0 %v2268
  %v2270 = vpop.xlane.xlu0 %2269
  %v2271 = vsel %vm685, %v1732, -inf
  %2272 = vmax.xlane.f32.xlu0 %v2271
  %v2273 = vpop.xlane.xlu0 %2272
  %v2274 = vsel %vm685, %v1737, -inf
  %2275 = vmax.xlane.f32.xlu0 %v2274
  %v2276 = vpop.xlane.xlu0 %2275
  %v2277 = vsel %vm685, %v1742, -inf
  %2278 = vmax.xlane.f32.xlu0 %v2277
  %v2279 = vpop.xlane.xlu0 %2278
  %v2280 = vsel %vm685, %v1747, -inf
  %2281 = vmax.xlane.f32.xlu0 %v2280
  %v2282 = vpop.xlane.xlu0 %2281
  %v2283 = vsel %vm685, %v1752, -inf
  %2284 = vmax.xlane.f32.xlu0 %v2283
  %v2285 = vpop.xlane.xlu0 %2284
  %v2286 = vsel %vm685, %v1886, -inf
  %2287 = vmax.xlane.f32.xlu0 %v2286
  %v2288 = vpop.xlane.xlu0 %2287
  %v2289 = vsel %vm685, %v1891, -inf
  %2290 = vmax.xlane.f32.xlu0 %v2289
  %v2291 = vpop.xlane.xlu0 %2290
  %v2292 = vsel %vm685, %v1896, -inf
  %2293 = vmax.xlane.f32.xlu0 %v2292
  %v2294 = vpop.xlane.xlu0 %2293
  %v2295 = vsel %vm685, %v1901, -inf
  %2296 = vmax.xlane.f32.xlu0 %v2295
  %v2297 = vpop.xlane.xlu0 %2296
  %v2298 = vsel %vm685, %v1906, -inf
  %2299 = vmax.xlane.f32.xlu0 %v2298
  %v2300 = vpop.xlane.xlu0 %2299
  %v2301 = vsel %vm685, %v1911, -inf
  %2302 = vmax.xlane.f32.xlu0 %v2301
  %v2303 = vpop.xlane.xlu0 %2302
  %v2304 = vsel %vm685, %v1916, -inf
  %2305 = vmax.xlane.f32.xlu0 %v2304
  %v2306 = vpop.xlane.xlu0 %2305
  %v2307 = vsel %vm685, %v1921, -inf
  %2308 = vmax.xlane.f32.xlu0 %v2307
  %v2309 = vpop.xlane.xlu0 %2308
  %v2310 = vsel %vm685, %v2055, -inf
  %2311 = vmax.xlane.f32.xlu0 %v2310
  %v2312 = vpop.xlane.xlu0 %2311
  %v2313 = vsel %vm685, %v2060, -inf
  %2314 = vmax.xlane.f32.xlu0 %v2313
  %v2315 = vpop.xlane.xlu0 %2314
  %v2316 = vsel %vm685, %v2065, -inf
  %2317 = vmax.xlane.f32.xlu0 %v2316
  %v2318 = vpop.xlane.xlu0 %2317
  %v2319 = vsel %vm685, %v2070, -inf
  %2320 = vmax.xlane.f32.xlu0 %v2319
  %v2321 = vpop.xlane.xlu0 %2320
  %v2322 = vsel %vm685, %v2075, -inf
  %2323 = vmax.xlane.f32.xlu0 %v2322
  %v2324 = vpop.xlane.xlu0 %2323
  %v2325 = vsel %vm685, %v2080, -inf
  %2326 = vmax.xlane.f32.xlu0 %v2325
  %v2327 = vpop.xlane.xlu0 %2326
  %v2328 = vsel %vm685, %v2085, -inf
  %2329 = vmax.xlane.f32.xlu0 %v2328
  %v2330 = vpop.xlane.xlu0 %2329
  %v2331 = vsel %vm685, %v2090, -inf
  %2332 = vmax.xlane.f32.xlu0 %v2331
  %v2333 = vpop.xlane.xlu0 %2332
  %v2334 = vsel %vm685, %v2224, -inf
  %2335 = vmax.xlane.f32.xlu0 %v2334
  %v2336 = vpop.xlane.xlu0 %2335
  %v2337 = vsel %vm685, %v2229, -inf
  %2338 = vmax.xlane.f32.xlu0 %v2337
  %v2339 = vpop.xlane.xlu0 %2338
  %v2340 = vsel %vm685, %v2234, -inf
  %2341 = vmax.xlane.f32.xlu0 %v2340
  %v2342 = vpop.xlane.xlu0 %2341
  %v2343 = vsel %vm685, %v2239, -inf
  %2344 = vmax.xlane.f32.xlu0 %v2343
  %v2345 = vpop.xlane.xlu0 %2344
  %v2346 = vsel %vm685, %v2244, -inf
  %2347 = vmax.xlane.f32.xlu0 %v2346
  %v2348 = vpop.xlane.xlu0 %2347
  %v2349 = vsel %vm685, %v2249, -inf
  %2350 = vmax.xlane.f32.xlu0 %v2349
  %v2351 = vpop.xlane.xlu0 %2350
  %v2352 = vsel %vm685, %v2254, -inf
  %2353 = vmax.xlane.f32.xlu0 %v2352
  %v2354 = vpop.xlane.xlu0 %2353
  %v2355 = vsel %vm685, %v2259, -inf
  %2356 = vmax.xlane.f32.xlu0 %v2355
  %v2357 = vpop.xlane.xlu0 %2356
  %v2358 = vsub.f32 %v1717, %v2264
  %v2359 = vsub.f32 %v1722, %v2267
  %v2360 = vsub.f32 %v1727, %v2270
  %v2361 = vsub.f32 %v1732, %v2273
  %v2362 = vsub.f32 %v1737, %v2276
  %v2363 = vsub.f32 %v1742, %v2279
  %v2364 = vsub.f32 %v1747, %v2282
  %v2365 = vsub.f32 %v1752, %v2285
  %v2366 = vsub.f32 %v1886, %v2288
  %v2367 = vsub.f32 %v1891, %v2291
  %v2368 = vsub.f32 %v1896, %v2294
  %v2369 = vsub.f32 %v1901, %v2297
  %v2370 = vsub.f32 %v1906, %v2300
  %v2371 = vsub.f32 %v1911, %v2303
  %v2372 = vsub.f32 %v1916, %v2306
  %v2373 = vsub.f32 %v1921, %v2309
  %v2374 = vsub.f32 %v2055, %v2312
  %v2375 = vsub.f32 %v2060, %v2315
  %v2376 = vsub.f32 %v2065, %v2318
  %v2377 = vsub.f32 %v2070, %v2321
  %v2378 = vsub.f32 %v2075, %v2324
  %v2379 = vsub.f32 %v2080, %v2327
  %v2380 = vsub.f32 %v2085, %v2330
  %v2381 = vsub.f32 %v2090, %v2333
  %v2382 = vsub.f32 %v2224, %v2336
  %v2383 = vsub.f32 %v2229, %v2339
  %v2384 = vsub.f32 %v2234, %v2342
  %v2385 = vsub.f32 %v2239, %v2345
  %v2386 = vsub.f32 %v2244, %v2348
  %v2387 = vsub.f32 %v2249, %v2351
  %v2388 = vsub.f32 %v2254, %v2354
  %v2389 = vsub.f32 %v2259, %v2357
  %v2390 = vmul.f32 %v2358, 1.442695
  %v2391 = vpow.pop %v2390
  %v2392 = vmul.f32 %v2359, 1.442695
  %v2393 = vpow.pop %v2392
  %v2394 = vmul.f32 %v2360, 1.442695
  %v2395 = vpow.pop %v2394
  %v2396 = vmul.f32 %v2361, 1.442695
  %v2397 = vpow.pop %v2396
  %v2398 = vmul.f32 %v2362, 1.442695
  %v2399 = vpow.pop %v2398
  %v2400 = vmul.f32 %v2363, 1.442695
  %v2401 = vpow.pop %v2400
  %v2402 = vmul.f32 %v2364, 1.442695
  %v2403 = vpow.pop %v2402
  %v2404 = vmul.f32 %v2365, 1.442695
  %v2405 = vpow.pop %v2404
  %v2406 = vmul.f32 %v2366, 1.442695
  %v2407 = vpow.pop %v2406
  %v2408 = vmul.f32 %v2367, 1.442695
  %v2409 = vpow.pop %v2408
  %v2410 = vmul.f32 %v2368, 1.442695
  %v2411 = vpow.pop %v2410
  %v2412 = vmul.f32 %v2369, 1.442695
  %v2413 = vpow.pop %v2412
  %v2414 = vmul.f32 %v2370, 1.442695
  %v2415 = vpow.pop %v2414
  %v2416 = vmul.f32 %v2371, 1.442695
  %v2417 = vpow.pop %v2416
  %v2418 = vmul.f32 %v2372, 1.442695
  %v2419 = vpow.pop %v2418
  %v2420 = vmul.f32 %v2373, 1.442695
  %v2421 = vpow.pop %v2420
  %v2422 = vmul.f32 %v2374, 1.442695
  %v2423 = vpow.pop %v2422
  %v2424 = vmul.f32 %v2375, 1.442695
  %v2425 = vpow.pop %v2424
  %v2426 = vmul.f32 %v2376, 1.442695
  %v2427 = vpow.pop %v2426
  %v2428 = vmul.f32 %v2377, 1.442695
  %v2429 = vpow.pop %v2428
  %v2430 = vmul.f32 %v2378, 1.442695
  %v2431 = vpow.pop %v2430
  %v2432 = vmul.f32 %v2379, 1.442695
  %v2433 = vpow.pop %v2432
  %v2434 = vmul.f32 %v2380, 1.442695
  %v2435 = vpow.pop %v2434
  %v2436 = vmul.f32 %v2381, 1.442695
  %v2437 = vpow.pop %v2436
  %v2438 = vmul.f32 %v2382, 1.442695
  %v2439 = vpow.pop %v2438
  %v2440 = vmul.f32 %v2383, 1.442695
  %v2441 = vpow.pop %v2440
  %v2442 = vmul.f32 %v2384, 1.442695
  %v2443 = vpow.pop %v2442
  %v2444 = vmul.f32 %v2385, 1.442695
  %v2445 = vpow.pop %v2444
  %v2446 = vmul.f32 %v2386, 1.442695
  %v2447 = vpow.pop %v2446
  %v2448 = vmul.f32 %v2387, 1.442695
  %v2449 = vpow.pop %v2448
  %v2450 = vmul.f32 %v2388, 1.442695
  %v2451 = vpow.pop %v2450
  %v2452 = vmul.f32 %v2389, 1.442695
  %v2453 = vpow.pop %v2452
  %v2454 = vsel %vm685, %v2391, 0.0
  %2455 = vadd.xlane.f32.xlu0 %v2454
  %v2456 = vpop.xlane.xlu0 %2455
  %v2457 = vsel %vm685, %v2393, 0.0
  %2458 = vadd.xlane.f32.xlu0 %v2457
  %v2459 = vpop.xlane.xlu0 %2458
  %v2460 = vsel %vm685, %v2395, 0.0
  %2461 = vadd.xlane.f32.xlu0 %v2460
  %v2462 = vpop.xlane.xlu0 %2461
  %v2463 = vsel %vm685, %v2397, 0.0
  %2464 = vadd.xlane.f32.xlu0 %v2463
  %v2465 = vpop.xlane.xlu0 %2464
  %v2466 = vsel %vm685, %v2399, 0.0
  %2467 = vadd.xlane.f32.xlu0 %v2466
  %v2468 = vpop.xlane.xlu0 %2467
  %v2469 = vsel %vm685, %v2401, 0.0
  %2470 = vadd.xlane.f32.xlu0 %v2469
  %v2471 = vpop.xlane.xlu0 %2470
  %v2472 = vsel %vm685, %v2403, 0.0
  %2473 = vadd.xlane.f32.xlu0 %v2472
  %v2474 = vpop.xlane.xlu0 %2473
  %v2475 = vsel %vm685, %v2405, 0.0
  %2476 = vadd.xlane.f32.xlu0 %v2475
  %v2477 = vpop.xlane.xlu0 %2476
  %v2478 = vsel %vm685, %v2407, 0.0
  %2479 = vadd.xlane.f32.xlu0 %v2478
  %v2480 = vpop.xlane.xlu0 %2479
  %v2481 = vsel %vm685, %v2409, 0.0
  %2482 = vadd.xlane.f32.xlu0 %v2481
  %v2483 = vpop.xlane.xlu0 %2482
  %v2484 = vsel %vm685, %v2411, 0.0
  %2485 = vadd.xlane.f32.xlu0 %v2484
  %v2486 = vpop.xlane.xlu0 %2485
  %v2487 = vsel %vm685, %v2413, 0.0
  %2488 = vadd.xlane.f32.xlu0 %v2487
  %v2489 = vpop.xlane.xlu0 %2488
  %v2490 = vsel %vm685, %v2415, 0.0
  %2491 = vadd.xlane.f32.xlu0 %v2490
  %v2492 = vpop.xlane.xlu0 %2491
  %v2493 = vsel %vm685, %v2417, 0.0
  %2494 = vadd.xlane.f32.xlu0 %v2493
  %v2495 = vpop.xlane.xlu0 %2494
  %v2496 = vsel %vm685, %v2419, 0.0
  %2497 = vadd.xlane.f32.xlu0 %v2496
  %v2498 = vpop.xlane.xlu0 %2497
  %v2499 = vsel %vm685, %v2421, 0.0
  %2500 = vadd.xlane.f32.xlu0 %v2499
  %v2501 = vpop.xlane.xlu0 %2500
  %v2502 = vsel %vm685, %v2423, 0.0
  %2503 = vadd.xlane.f32.xlu0 %v2502
  %v2504 = vpop.xlane.xlu0 %2503
  %v2505 = vsel %vm685, %v2425, 0.0
  %2506 = vadd.xlane.f32.xlu0 %v2505
  %v2507 = vpop.xlane.xlu0 %2506
  %v2508 = vsel %vm685, %v2427, 0.0
  %2509 = vadd.xlane.f32.xlu0 %v2508
  %v2510 = vpop.xlane.xlu0 %2509
  %v2511 = vsel %vm685, %v2429, 0.0
  %2512 = vadd.xlane.f32.xlu0 %v2511
  %v2513 = vpop.xlane.xlu0 %2512
  %v2514 = vsel %vm685, %v2431, 0.0
  %2515 = vadd.xlane.f32.xlu0 %v2514
  %v2516 = vpop.xlane.xlu0 %2515
  %v2517 = vsel %vm685, %v2433, 0.0
  %2518 = vadd.xlane.f32.xlu0 %v2517
  %v2519 = vpop.xlane.xlu0 %2518
  %v2520 = vsel %vm685, %v2435, 0.0
  %2521 = vadd.xlane.f32.xlu0 %v2520
  %v2522 = vpop.xlane.xlu0 %2521
  %v2523 = vsel %vm685, %v2437, 0.0
  %2524 = vadd.xlane.f32.xlu0 %v2523
  %v2525 = vpop.xlane.xlu0 %2524
  %v2526 = vsel %vm685, %v2439, 0.0
  %2527 = vadd.xlane.f32.xlu0 %v2526
  %v2528 = vpop.xlane.xlu0 %2527
  %v2529 = vsel %vm685, %v2441, 0.0
  %2530 = vadd.xlane.f32.xlu0 %v2529
  %v2531 = vpop.xlane.xlu0 %2530
  %v2532 = vsel %vm685, %v2443, 0.0
  %2533 = vadd.xlane.f32.xlu0 %v2532
  %v2534 = vpop.xlane.xlu0 %2533
  %v2535 = vsel %vm685, %v2445, 0.0
  %2536 = vadd.xlane.f32.xlu0 %v2535
  %v2537 = vpop.xlane.xlu0 %2536
  %v2538 = vsel %vm685, %v2447, 0.0
  %2539 = vadd.xlane.f32.xlu0 %v2538
  %v2540 = vpop.xlane.xlu0 %2539
  %v2541 = vsel %vm685, %v2449, 0.0
  %2542 = vadd.xlane.f32.xlu0 %v2541
  %v2543 = vpop.xlane.xlu0 %2542
  %v2544 = vsel %vm685, %v2451, 0.0
  %2545 = vadd.xlane.f32.xlu0 %v2544
  %v2546 = vpop.xlane.xlu0 %2545
  %v2547 = vsel %vm685, %v2453, 0.0
  %2548 = vadd.xlane.f32.xlu0 %v2547
  %v2549 = vpop.xlane.xlu0 %2548
  %v2559 = vsel %vm685, %v2391, 0
  %v2562 = vsel %vm685, %v2393, 0
  %v2565 = vsel %vm685, %v2395, 0
  %v2568 = vsel %vm685, %v2397, 0
  %v2571 = vsel %vm685, %v2399, 0
  %v2574 = vsel %vm685, %v2401, 0
  %v2577 = vsel %vm685, %v2403, 0
  %v2580 = vsel %vm685, %v2405, 0
  %2582 = vmatprep.subr.mxu0 0.0
  %2583 = vmatpush1.msra.mxu0 %v1603
  %2584 = vmatprep.subr.mxu0 0.0
  %2585 = vmatpush1.msra.mxu0 %v1605
  %2586 = vmatprep.subr.mxu0 0.0
  %2587 = vmatpush1.msra.mxu0 %v1607
  %2588 = vmatprep.subr.mxu0 0.0
  %2589 = vmatpush1.msra.mxu0 %v1609
  %2590 = vmatprep.subr.mxu0 0.0
  %2591 = vmatpush1.msra.mxu0 %v1611
  %2592 = vmatprep.subr.mxu0 0.0
  %2593 = vmatpush1.msra.mxu0 %v1613
  %2594 = vmatprep.subr.mxu0 0.0
  %2595 = vmatpush1.msra.mxu0 %v1615
  %2596 = vmatprep.subr.mxu0 0.0
  %2597 = vmatpush1.msra.mxu0 %v1617
  %2598 = vmatprep.subr.mxu0 0.0
  %2599 = vmatpush1.msra.mxu0 0.0
  %2600 = vmatprep.subr.mxu0 0.0
  %2601 = vmatpush1.msra.mxu0 0.0
  %2602 = vmatprep.subr.mxu0 0.0
  %2603 = vmatpush1.msra.mxu0 0.0
  %2604 = vmatprep.subr.mxu0 0.0
  %2605 = vmatpush1.msra.mxu0 0.0
  %2606 = vmatprep.subr.mxu0 0.0
  %2607 = vmatpush1.msra.mxu0 0.0
  %2608 = vmatprep.subr.mxu0 0.0
  %2609 = vmatpush1.msra.mxu0 0.0
  %2610 = vmatprep.subr.mxu0 0.0
  %2611 = vmatpush1.msra.mxu0 0.0
  %2612 = vmatprep.subr.mxu0 0.0
  %2613 = vmatpush1.msra.mxu0 0.0
  %2614 = vmatprep.subr.mxu0 0.0
  %2615 = vmatpush1.msra.mxu0 0.0
  %2616 = vmatprep.subr.mxu0 0.0
  %2617 = vmatpush1.msra.mxu0 0.0
  %2618 = vmatprep.subr.mxu0 0.0
  %2619 = vmatpush1.msra.mxu0 0.0
  %2620 = vmatprep.subr.mxu0 0.0
  %2621 = vmatpush1.msra.mxu0 0.0
  %2622 = vmatprep.subr.mxu0 0.0
  %2623 = vmatpush1.msra.mxu0 0.0
  %2624 = vmatprep.subr.mxu0 0.0
  %2625 = vmatpush1.msra.mxu0 0.0
  %2626 = vmatprep.subr.mxu0 0.0
  %2627 = vmatpush1.msra.mxu0 0.0
  %2628 = vmatprep.subr.mxu0 0.0
  %2629 = vmatpush1.msra.mxu0 0.0
  %2630 = vmatprep.subr.mxu0 0.0
  %2631 = vmatpush1.msra.mxu0 0.0
  %2632 = vmatprep.subr.mxu0 0.0
  %2633 = vmatpush1.msra.mxu0 0.0
  %2634 = vmatprep.subr.mxu0 0.0
  %2635 = vmatpush1.msra.mxu0 0.0
  %2636 = vmatprep.subr.mxu0 0.0
  %2637 = vmatpush1.msra.mxu0 0.0
  %2638 = vmatprep.subr.mxu0 0.0
  %2639 = vmatpush1.msra.mxu0 0.0
  %2640 = vmatprep.subr.mxu0 0.0
  %2641 = vmatpush1.msra.mxu0 0.0
  %2642 = vmatprep.subr.mxu0 0.0
  %2643 = vmatpush1.msra.mxu0 0.0
  %2644 = vmatprep.subr.mxu0 0.0
  %2645 = vmatpush1.msra.mxu0 0.0
  %2646 = vmatprep.mubr.f32.mxu0 0.0
  %2647 = vmatmul.mubr.f32.gmra.mrb[0].mxu0 %v2559
  %v2648 = vpop.f32.mrb[0].mxu0
  %v2649 = vadd.f32 0.0, %v2648
  %v2650 = vpop.f32.mrb[0].mxu0
  %2651 = vmatprep.mubr.f32.mxu0 0.0
  %2652 = vmatmul.mubr.f32.gmra.mrb[0].mxu0 %v2562
  %v2653 = vpop.f32.mrb[0].mxu0
  %v2654 = vadd.f32 0.0, %v2653
  %v2655 = vpop.f32.mrb[0].mxu0
  %2656 = vmatprep.mubr.f32.mxu0 0.0
  %2657 = vmatmul.mubr.f32.gmra.mrb[0].mxu0 %v2565
  %v2658 = vpop.f32.mrb[0].mxu0
  %v2659 = vadd.f32 0.0, %v2658
  %v2660 = vpop.f32.mrb[0].mxu0
  %2661 = vmatprep.mubr.f32.mxu0 0.0
  %2662 = vmatmul.mubr.f32.gmra.mrb[0].mxu0 %v2568
  %v2663 = vpop.f32.mrb[0].mxu0
  %v2664 = vadd.f32 0.0, %v2663
  %v2665 = vpop.f32.mrb[0].mxu0
  %2666 = vmatprep.mubr.f32.mxu0 0.0
  %2667 = vmatmul.mubr.f32.gmra.mrb[0].mxu0 %v2571
  %v2668 = vpop.f32.mrb[0].mxu0
  %v2669 = vadd.f32 0.0, %v2668
  %v2670 = vpop.f32.mrb[0].mxu0
  %2671 = vmatprep.mubr.f32.mxu0 0.0
  %2672 = vmatmul.mubr.f32.gmra.mrb[0].mxu0 %v2574
  %v2673 = vpop.f32.mrb[0].mxu0
  %v2674 = vadd.f32 0.0, %v2673
  %v2675 = vpop.f32.mrb[0].mxu0
  %2676 = vmatprep.mubr.f32.mxu0 0.0
  %2677 = vmatmul.mubr.f32.gmra.mrb[0].mxu0 %v2577
  %v2678 = vpop.f32.mrb[0].mxu0
  %v2679 = vadd.f32 0.0, %v2678
  %v2680 = vpop.f32.mrb[0].mxu0
  %2681 = vmatprep.mubr.f32.mxu0 0.0
  %2682 = vmatmul.mubr.f32.gmra.mrb[0].mxu0 %v2580
  %v2683 = vpop.f32.mrb[0].mxu0
  %v2684 = vadd.f32 0.0, %v2683
  %v2685 = vpop.f32.mrb[0].mxu0
  %2686 = vdwg.mxu0
  %v2696 = vsel %vm685, %v2407, 0
  %v2699 = vsel %vm685, %v2409, 0
  %v2702 = vsel %vm685, %v2411, 0
  %v2705 = vsel %vm685, %v2413, 0
  %v2708 = vsel %vm685, %v2415, 0
  %v2711 = vsel %vm685, %v2417, 0
  %v2714 = vsel %vm685, %v2419, 0
  %v2717 = vsel %vm685, %v2421, 0
  %2719 = vmatprep.subr.mxu0 0.0
  %2720 = vmatpush1.msra.mxu0 %v1772
  %2721 = vmatprep.subr.mxu0 0.0
  %2722 = vmatpush1.msra.mxu0 %v1774
  %2723 = vmatprep.subr.mxu0 0.0
  %2724 = vmatpush1.msra.mxu0 %v1776
  %2725 = vmatprep.subr.mxu0 0.0
  %2726 = vmatpush1.msra.mxu0 %v1778
  %2727 = vmatprep.subr.mxu0 0.0
  %2728 = vmatpush1.msra.mxu0 %v1780
  %2729 = vmatprep.subr.mxu0 0.0
  %2730 = vmatpush1.msra.mxu0 %v1782
  %2731 = vmatprep.subr.mxu0 0.0
  %2732 = vmatpush1.msra.mxu0 %v1784
  %2733 = vmatprep.subr.mxu0 0.0
  %2734 = vmatpush1.msra.mxu0 %v1786
  %2735 = vmatprep.subr.mxu0 0.0
  %2736 = vmatpush1.msra.mxu0 0.0
  %2737 = vmatprep.subr.mxu0 0.0
  %2738 = vmatpush1.msra.mxu0 0.0
  %2739 = vmatprep.subr.mxu0 0.0
  %2740 = vmatpush1.msra.mxu0 0.0
  %2741 = vmatprep.subr.mxu0 0.0
  %2742 = vmatpush1.msra.mxu0 0.0
  %2743 = vmatprep.subr.mxu0 0.0
  %2744 = vmatpush1.msra.mxu0 0.0
  %2745 = vmatprep.subr.mxu0 0.0
  %2746 = vmatpush1.msra.mxu0 0.0
  %2747 = vmatprep.subr.mxu0 0.0
  %2748 = vmatpush1.msra.mxu0 0.0
  %2749 = vmatprep.subr.mxu0 0.0
  %2750 = vmatpush1.msra.mxu0 0.0
  %2751 = vmatprep.subr.mxu0 0.0
  %2752 = vmatpush1.msra.mxu0 0.0
  %2753 = vmatprep.subr.mxu0 0.0
  %2754 = vmatpush1.msra.mxu0 0.0
  %2755 = vmatprep.subr.mxu0 0.0
  %2756 = vmatpush1.msra.mxu0 0.0
  %2757 = vmatprep.subr.mxu0 0.0
  %2758 = vmatpush1.msra.mxu0 0.0
  %2759 = vmatprep.subr.mxu0 0.0
  %2760 = vmatpush1.msra.mxu0 0.0
  %2761 = vmatprep.subr.mxu0 0.0
  %2762 = vmatpush1.msra.mxu0 0.0
  %2763 = vmatprep.subr.mxu0 0.0
  %2764 = vmatpush1.msra.mxu0 0.0
  %2765 = vmatprep.subr.mxu0 0.0
  %2766 = vmatpush1.msra.mxu0 0.0
  %2767 = vmatprep.subr.mxu0 0.0
  %2768 = vmatpush1.msra.mxu0 0.0
  %2769 = vmatprep.subr.mxu0 0.0
  %2770 = vmatpush1.msra.mxu0 0.0
  %2771 = vmatprep.subr.mxu0 0.0
  %2772 = vmatpush1.msra.mxu0 0.0
  %2773 = vmatprep.subr.mxu0 0.0
  %2774 = vmatpush1.msra.mxu0 0.0
  %2775 = vmatprep.subr.mxu0 0.0
  %2776 = vmatpush1.msra.mxu0 0.0
  %2777 = vmatprep.subr.mxu0 0.0
  %2778 = vmatpush1.msra.mxu0 0.0
  %2779 = vmatprep.subr.mxu0 0.0
  %2780 = vmatpush1.msra.mxu0 0.0
  %2781 = vmatprep.subr.mxu0 0.0
  %2782 = vmatpush1.msra.mxu0 0.0
  %2783 = vmatprep.mubr.f32.mxu0 0.0
  %2784 = vmatmul.mubr.f32.gmra.mrb[0].mxu0 %v2696
  %v2785 = vpop.f32.mrb[0].mxu0
  %v2786 = vadd.f32 0.0, %v2785
  %v2787 = vpop.f32.mrb[0].mxu0
  %2788 = vmatprep.mubr.f32.mxu0 0.0
  %2789 = vmatmul.mubr.f32.gmra.mrb[0].mxu0 %v2699
  %v2790 = vpop.f32.mrb[0].mxu0
  %v2791 = vadd.f32 0.0, %v2790
  %v2792 = vpop.f32.mrb[0].mxu0
  %2793 = vmatprep.mubr.f32.mxu0 0.0
  %2794 = vmatmul.mubr.f32.gmra.mrb[0].mxu0 %v2702
  %v2795 = vpop.f32.mrb[0].mxu0
  %v2796 = vadd.f32 0.0, %v2795
  %v2797 = vpop.f32.mrb[0].mxu0
  %2798 = vmatprep.mubr.f32.mxu0 0.0
  %2799 = vmatmul.mubr.f32.gmra.mrb[0].mxu0 %v2705
  %v2800 = vpop.f32.mrb[0].mxu0
  %v2801 = vadd.f32 0.0, %v2800
  %v2802 = vpop.f32.mrb[0].mxu0
  %2803 = vmatprep.mubr.f32.mxu0 0.0
  %2804 = vmatmul.mubr.f32.gmra.mrb[0].mxu0 %v2708
  %v2805 = vpop.f32.mrb[0].mxu0
  %v2806 = vadd.f32 0.0, %v2805
  %v2807 = vpop.f32.mrb[0].mxu0
  %2808 = vmatprep.mubr.f32.mxu0 0.0
  %2809 = vmatmul.mubr.f32.gmra.mrb[0].mxu0 %v2711
  %v2810 = vpop.f32.mrb[0].mxu0
  %v2811 = vadd.f32 0.0, %v2810
  %v2812 = vpop.f32.mrb[0].mxu0
  %2813 = vmatprep.mubr.f32.mxu0 0.0
  %2814 = vmatmul.mubr.f32.gmra.mrb[0].mxu0 %v2714
  %v2815 = vpop.f32.mrb[0].mxu0
  %v2816 = vadd.f32 0.0, %v2815
  %v2817 = vpop.f32.mrb[0].mxu0
  %2818 = vmatprep.mubr.f32.mxu0 0.0
  %2819 = vmatmul.mubr.f32.gmra.mrb[0].mxu0 %v2717
  %v2820 = vpop.f32.mrb[0].mxu0
  %v2821 = vadd.f32 0.0, %v2820
  %v2822 = vpop.f32.mrb[0].mxu0
  %2823 = vdwg.mxu0
  %v2833 = vsel %vm685, %v2423, 0
  %v2836 = vsel %vm685, %v2425, 0
  %v2839 = vsel %vm685, %v2427, 0
  %v2842 = vsel %vm685, %v2429, 0
  %v2845 = vsel %vm685, %v2431, 0
  %v2848 = vsel %vm685, %v2433, 0
  %v2851 = vsel %vm685, %v2435, 0
  %v2854 = vsel %vm685, %v2437, 0
  %2856 = vmatprep.subr.mxu0 0.0
  %2857 = vmatpush1.msra.mxu0 %v1941
  %2858 = vmatprep.subr.mxu0 0.0
  %2859 = vmatpush1.msra.mxu0 %v1943
  %2860 = vmatprep.subr.mxu0 0.0
  %2861 = vmatpush1.msra.mxu0 %v1945
  %2862 = vmatprep.subr.mxu0 0.0
  %2863 = vmatpush1.msra.mxu0 %v1947
  %2864 = vmatprep.subr.mxu0 0.0
  %2865 = vmatpush1.msra.mxu0 %v1949
  %2866 = vmatprep.subr.mxu0 0.0
  %2867 = vmatpush1.msra.mxu0 %v1951
  %2868 = vmatprep.subr.mxu0 0.0
  %2869 = vmatpush1.msra.mxu0 %v1953
  %2870 = vmatprep.subr.mxu0 0.0
  %2871 = vmatpush1.msra.mxu0 %v1955
  %2872 = vmatprep.subr.mxu0 0.0
  %2873 = vmatpush1.msra.mxu0 0.0
  %2874 = vmatprep.subr.mxu0 0.0
  %2875 = vmatpush1.msra.mxu0 0.0
  %2876 = vmatprep.subr.mxu0 0.0
  %2877 = vmatpush1.msra.mxu0 0.0
  %2878 = vmatprep.subr.mxu0 0.0
  %2879 = vmatpush1.msra.mxu0 0.0
  %2880 = vmatprep.subr.mxu0 0.0
  %2881 = vmatpush1.msra.mxu0 0.0
  %2882 = vmatprep.subr.mxu0 0.0
  %2883 = vmatpush1.msra.mxu0 0.0
  %2884 = vmatprep.subr.mxu0 0.0
  %2885 = vmatpush1.msra.mxu0 0.0
  %2886 = vmatprep.subr.mxu0 0.0
  %2887 = vmatpush1.msra.mxu0 0.0
  %2888 = vmatprep.subr.mxu0 0.0
  %2889 = vmatpush1.msra.mxu0 0.0
  %2890 = vmatprep.subr.mxu0 0.0
  %2891 = vmatpush1.msra.mxu0 0.0
  %2892 = vmatprep.subr.mxu0 0.0
  %2893 = vmatpush1.msra.mxu0 0.0
  %2894 = vmatprep.subr.mxu0 0.0
  %2895 = vmatpush1.msra.mxu0 0.0
  %2896 = vmatprep.subr.mxu0 0.0
  %2897 = vmatpush1.msra.mxu0 0.0
  %2898 = vmatprep.subr.mxu0 0.0
  %2899 = vmatpush1.msra.mxu0 0.0
  %2900 = vmatprep.subr.mxu0 0.0
  %2901 = vmatpush1.msra.mxu0 0.0
  %2902 = vmatprep.subr.mxu0 0.0
  %2903 = vmatpush1.msra.mxu0 0.0
  %2904 = vmatprep.subr.mxu0 0.0
  %2905 = vmatpush1.msra.mxu0 0.0
  %2906 = vmatprep.subr.mxu0 0.0
  %2907 = vmatpush1.msra.mxu0 0.0
  %2908 = vmatprep.subr.mxu0 0.0
  %2909 = vmatpush1.msra.mxu0 0.0
  %2910 = vmatprep.subr.mxu0 0.0
  %2911 = vmatpush1.msra.mxu0 0.0
  %2912 = vmatprep.subr.mxu0 0.0
  %2913 = vmatpush1.msra.mxu0 0.0
  %2914 = vmatprep.subr.mxu0 0.0
  %2915 = vmatpush1.msra.mxu0 0.0
  %2916 = vmatprep.subr.mxu0 0.0
  %2917 = vmatpush1.msra.mxu0 0.0
  %2918 = vmatprep.subr.mxu0 0.0
  %2919 = vmatpush1.msra.mxu0 0.0
  %2920 = vmatprep.mubr.f32.mxu0 0.0
  %2921 = vmatmul.mubr.f32.gmra.mrb[0].mxu0 %v2833
  %v2922 = vpop.f32.mrb[0].mxu0
  %v2923 = vadd.f32 0.0, %v2922
  %v2924 = vpop.f32.mrb[0].mxu0
  %2925 = vmatprep.mubr.f32.mxu0 0.0
  %2926 = vmatmul.mubr.f32.gmra.mrb[0].mxu0 %v2836
  %v2927 = vpop.f32.mrb[0].mxu0
  %v2928 = vadd.f32 0.0, %v2927
  %v2929 = vpop.f32.mrb[0].mxu0
  %2930 = vmatprep.mubr.f32.mxu0 0.0
  %2931 = vmatmul.mubr.f32.gmra.mrb[0].mxu0 %v2839
  %v2932 = vpop.f32.mrb[0].mxu0
  %v2933 = vadd.f32 0.0, %v2932
  %v2934 = vpop.f32.mrb[0].mxu0
  %2935 = vmatprep.mubr.f32.mxu0 0.0
  %2936 = vmatmul.mubr.f32.gmra.mrb[0].mxu0 %v2842
  %v2937 = vpop.f32.mrb[0].mxu0
  %v2938 = vadd.f32 0.0, %v2937
  %v2939 = vpop.f32.mrb[0].mxu0
  %2940 = vmatprep.mubr.f32.mxu0 0.0
  %2941 = vmatmul.mubr.f32.gmra.mrb[0].mxu0 %v2845
  %v2942 = vpop.f32.mrb[0].mxu0
  %v2943 = vadd.f32 0.0, %v2942
  %v2944 = vpop.f32.mrb[0].mxu0
  %2945 = vmatprep.mubr.f32.mxu0 0.0
  %2946 = vmatmul.mubr.f32.gmra.mrb[0].mxu0 %v2848
  %v2947 = vpop.f32.mrb[0].mxu0
  %v2948 = vadd.f32 0.0, %v2947
  %v2949 = vpop.f32.mrb[0].mxu0
  %2950 = vmatprep.mubr.f32.mxu0 0.0
  %2951 = vmatmul.mubr.f32.gmra.mrb[0].mxu0 %v2851
  %v2952 = vpop.f32.mrb[0].mxu0
  %v2953 = vadd.f32 0.0, %v2952
  %v2954 = vpop.f32.mrb[0].mxu0
  %2955 = vmatprep.mubr.f32.mxu0 0.0
  %2956 = vmatmul.mubr.f32.gmra.mrb[0].mxu0 %v2854
  %v2957 = vpop.f32.mrb[0].mxu0
  %v2958 = vadd.f32 0.0, %v2957
  %v2959 = vpop.f32.mrb[0].mxu0
  %2960 = vdwg.mxu0
  %v2970 = vsel %vm685, %v2439, 0
  %v2973 = vsel %vm685, %v2441, 0
  %v2976 = vsel %vm685, %v2443, 0
  %v2979 = vsel %vm685, %v2445, 0
  %v2982 = vsel %vm685, %v2447, 0
  %v2985 = vsel %vm685, %v2449, 0
  %v2988 = vsel %vm685, %v2451, 0
  %v2991 = vsel %vm685, %v2453, 0
  %2993 = vmatprep.subr.mxu0 0.0
  %2994 = vmatpush1.msra.mxu0 %v2110
  %2995 = vmatprep.subr.mxu0 0.0
  %2996 = vmatpush1.msra.mxu0 %v2112
  %2997 = vmatprep.subr.mxu0 0.0
  %2998 = vmatpush1.msra.mxu0 %v2114
  %2999 = vmatprep.subr.mxu0 0.0
  %3000 = vmatpush1.msra.mxu0 %v2116
  %3001 = vmatprep.subr.mxu0 0.0
  %3002 = vmatpush1.msra.mxu0 %v2118
  %3003 = vmatprep.subr.mxu0 0.0
  %3004 = vmatpush1.msra.mxu0 %v2120
  %3005 = vmatprep.subr.mxu0 0.0
  %3006 = vmatpush1.msra.mxu0 %v2122
  %3007 = vmatprep.subr.mxu0 0.0
  %3008 = vmatpush1.msra.mxu0 %v2124
  %3009 = vmatprep.subr.mxu0 0.0
  %3010 = vmatpush1.msra.mxu0 0.0
  %3011 = vmatprep.subr.mxu0 0.0
  %3012 = vmatpush1.msra.mxu0 0.0
  %3013 = vmatprep.subr.mxu0 0.0
  %3014 = vmatpush1.msra.mxu0 0.0
  %3015 = vmatprep.subr.mxu0 0.0
  %3016 = vmatpush1.msra.mxu0 0.0
  %3017 = vmatprep.subr.mxu0 0.0
  %3018 = vmatpush1.msra.mxu0 0.0
  %3019 = vmatprep.subr.mxu0 0.0
  %3020 = vmatpush1.msra.mxu0 0.0
  %3021 = vmatprep.subr.mxu0 0.0
  %3022 = vmatpush1.msra.mxu0 0.0
  %3023 = vmatprep.subr.mxu0 0.0
  %3024 = vmatpush1.msra.mxu0 0.0
  %3025 = vmatprep.subr.mxu0 0.0
  %3026 = vmatpush1.msra.mxu0 0.0
  %3027 = vmatprep.subr.mxu0 0.0
  %3028 = vmatpush1.msra.mxu0 0.0
  %3029 = vmatprep.subr.mxu0 0.0
  %3030 = vmatpush1.msra.mxu0 0.0
  %3031 = vmatprep.subr.mxu0 0.0
  %3032 = vmatpush1.msra.mxu0 0.0
  %3033 = vmatprep.subr.mxu0 0.0
  %3034 = vmatpush1.msra.mxu0 0.0
  %3035 = vmatprep.subr.mxu0 0.0
  %3036 = vmatpush1.msra.mxu0 0.0
  %3037 = vmatprep.subr.mxu0 0.0
  %3038 = vmatpush1.msra.mxu0 0.0
  %3039 = vmatprep.subr.mxu0 0.0
  %3040 = vmatpush1.msra.mxu0 0.0
  %3041 = vmatprep.subr.mxu0 0.0
  %3042 = vmatpush1.msra.mxu0 0.0
  %3043 = vmatprep.subr.mxu0 0.0
  %3044 = vmatpush1.msra.mxu0 0.0
  %3045 = vmatprep.subr.mxu0 0.0
  %3046 = vmatpush1.msra.mxu0 0.0
  %3047 = vmatprep.subr.mxu0 0.0
  %3048 = vmatpush1.msra.mxu0 0.0
  %3049 = vmatprep.subr.mxu0 0.0
  %3050 = vmatpush1.msra.mxu0 0.0
  %3051 = vmatprep.subr.mxu0 0.0
  %3052 = vmatpush1.msra.mxu0 0.0
  %3053 = vmatprep.subr.mxu0 0.0
  %3054 = vmatpush1.msra.mxu0 0.0
  %3055 = vmatprep.subr.mxu0 0.0
  %3056 = vmatpush1.msra.mxu0 0.0
  %3057 = vmatprep.mubr.f32.mxu0 0.0
  %3058 = vmatmul.mubr.f32.gmra.mrb[0].mxu0 %v2970
  %v3059 = vpop.f32.mrb[0].mxu0
  %v3060 = vadd.f32 0.0, %v3059
  %v3061 = vpop.f32.mrb[0].mxu0
  %3062 = vmatprep.mubr.f32.mxu0 0.0
  %3063 = vmatmul.mubr.f32.gmra.mrb[0].mxu0 %v2973
  %v3064 = vpop.f32.mrb[0].mxu0
  %v3065 = vadd.f32 0.0, %v3064
  %v3066 = vpop.f32.mrb[0].mxu0
  %3067 = vmatprep.mubr.f32.mxu0 0.0
  %3068 = vmatmul.mubr.f32.gmra.mrb[0].mxu0 %v2976
  %v3069 = vpop.f32.mrb[0].mxu0
  %v3070 = vadd.f32 0.0, %v3069
  %v3071 = vpop.f32.mrb[0].mxu0
  %3072 = vmatprep.mubr.f32.mxu0 0.0
  %3073 = vmatmul.mubr.f32.gmra.mrb[0].mxu0 %v2979
  %v3074 = vpop.f32.mrb[0].mxu0
  %v3075 = vadd.f32 0.0, %v3074
  %v3076 = vpop.f32.mrb[0].mxu0
  %3077 = vmatprep.mubr.f32.mxu0 0.0
  %3078 = vmatmul.mubr.f32.gmra.mrb[0].mxu0 %v2982
  %v3079 = vpop.f32.mrb[0].mxu0
  %v3080 = vadd.f32 0.0, %v3079
  %v3081 = vpop.f32.mrb[0].mxu0
  %3082 = vmatprep.mubr.f32.mxu0 0.0
  %3083 = vmatmul.mubr.f32.gmra.mrb[0].mxu0 %v2985
  %v3084 = vpop.f32.mrb[0].mxu0
  %v3085 = vadd.f32 0.0, %v3084
  %v3086 = vpop.f32.mrb[0].mxu0
  %3087 = vmatprep.mubr.f32.mxu0 0.0
  %3088 = vmatmul.mubr.f32.gmra.mrb[0].mxu0 %v2988
  %v3089 = vpop.f32.mrb[0].mxu0
  %v3090 = vadd.f32 0.0, %v3089
  %v3091 = vpop.f32.mrb[0].mxu0
  %3092 = vmatprep.mubr.f32.mxu0 0.0
  %3093 = vmatmul.mubr.f32.gmra.mrb[0].mxu0 %v2991
  %v3094 = vpop.f32.mrb[0].mxu0
  %v3095 = vadd.f32 0.0, %v3094
  %v3096 = vpop.f32.mrb[0].mxu0
  %3097 = vdwg.mxu0
  %v3098 = vrcp.pop %v2456
  %v3099 = vrcp.pop %v2459
  %v3100 = vrcp.pop %v2462
  %v3101 = vrcp.pop %v2465
  %v3102 = vrcp.pop %v2468
  %v3103 = vrcp.pop %v2471
  %v3104 = vrcp.pop %v2474
  %v3105 = vrcp.pop %v2477
  %v3106 = vrcp.pop %v2480
  %v3107 = vrcp.pop %v2483
  %v3108 = vrcp.pop %v2486
  %v3109 = vrcp.pop %v2489
  %v3110 = vrcp.pop %v2492
  %v3111 = vrcp.pop %v2495
  %v3112 = vrcp.pop %v2498
  %v3113 = vrcp.pop %v2501
  %v3114 = vrcp.pop %v2504
  %v3115 = vrcp.pop %v2507
  %v3116 = vrcp.pop %v2510
  %v3117 = vrcp.pop %v2513
  %v3118 = vrcp.pop %v2516
  %v3119 = vrcp.pop %v2519
  %v3120 = vrcp.pop %v2522
  %v3121 = vrcp.pop %v2525
  %v3122 = vrcp.pop %v2528
  %v3123 = vrcp.pop %v2531
  %v3124 = vrcp.pop %v2534
  %v3125 = vrcp.pop %v2537
  %v3126 = vrcp.pop %v2540
  %v3127 = vrcp.pop %v2543
  %v3128 = vrcp.pop %v2546
  %v3129 = vrcp.pop %v2549
  %v3130 = vmul.f32 %v2649, %v3098
  %v3131 = vmul.f32 %v2654, %v3099
  %v3132 = vmul.f32 %v2659, %v3100
  %v3133 = vmul.f32 %v2664, %v3101
  %v3134 = vmul.f32 %v2669, %v3102
  %v3135 = vmul.f32 %v2674, %v3103
  %v3136 = vmul.f32 %v2679, %v3104
  %v3137 = vmul.f32 %v2684, %v3105
  %v3138 = vmul.f32 %v2786, %v3106
  %v3139 = vmul.f32 %v2791, %v3107
  %v3140 = vmul.f32 %v2796, %v3108
  %v3141 = vmul.f32 %v2801, %v3109
  %v3142 = vmul.f32 %v2806, %v3110
  %v3143 = vmul.f32 %v2811, %v3111
  %v3144 = vmul.f32 %v2816, %v3112
  %v3145 = vmul.f32 %v2821, %v3113
  %v3146 = vmul.f32 %v2923, %v3114
  %v3147 = vmul.f32 %v2928, %v3115
  %v3148 = vmul.f32 %v2933, %v3116
  %v3149 = vmul.f32 %v2938, %v3117
  %v3150 = vmul.f32 %v2943, %v3118
  %v3151 = vmul.f32 %v2948, %v3119
  %v3152 = vmul.f32 %v2953, %v3120
  %v3153 = vmul.f32 %v2958, %v3121
  %v3154 = vmul.f32 %v3060, %v3122
  %v3155 = vmul.f32 %v3065, %v3123
  %v3156 = vmul.f32 %v3070, %v3124
  %v3157 = vmul.f32 %v3075, %v3125
  %v3158 = vmul.f32 %v3080, %v3126
  %v3159 = vmul.f32 %v3085, %v3127
  %v3160 = vmul.f32 %v3090, %v3128
  %v3161 = vmul.f32 %v3095, %v3129
  %3194 = vrot.lane.b32.xlu0 %v3130, 8
  %v3195 = vpop.permute.xlu0 %3194
  %3196 = vrot.lane.b32.xlu0 %v3131, 8
  %v3197 = vpop.permute.xlu0 %3196
  %3198 = vrot.lane.b32.xlu0 %v3132, 8
  %v3199 = vpop.permute.xlu0 %3198
  %3200 = vrot.lane.b32.xlu0 %v3133, 8
  %v3201 = vpop.permute.xlu0 %3200
  %3202 = vrot.lane.b32.xlu0 %v3134, 8
  %v3203 = vpop.permute.xlu0 %3202
  %3204 = vrot.lane.b32.xlu0 %v3135, 8
  %v3205 = vpop.permute.xlu0 %3204
  %3206 = vrot.lane.b32.xlu0 %v3136, 8
  %v3207 = vpop.permute.xlu0 %3206
  %3208 = vrot.lane.b32.xlu0 %v3137, 8
  %v3209 = vpop.permute.xlu0 %3208
  %3210 = vrot.lane.b32.xlu0 %v3138, 8
  %v3211 = vpop.permute.xlu0 %3210
  %3212 = vrot.lane.b32.xlu0 %v3139, 8
  %v3213 = vpop.permute.xlu0 %3212
  %3214 = vrot.lane.b32.xlu0 %v3140, 8
  %v3215 = vpop.permute.xlu0 %3214
  %3216 = vrot.lane.b32.xlu0 %v3141, 8
  %v3217 = vpop.permute.xlu0 %3216
  %3218 = vrot.lane.b32.xlu0 %v3142, 8
  %v3219 = vpop.permute.xlu0 %3218
  %3220 = vrot.lane.b32.xlu0 %v3143, 8
  %v3221 = vpop.permute.xlu0 %3220
  %3222 = vrot.lane.b32.xlu0 %v3144, 8
  %v3223 = vpop.permute.xlu0 %3222
  %3224 = vrot.lane.b32.xlu0 %v3145, 8
  %v3225 = vpop.permute.xlu0 %3224
  %3226 = vrot.lane.b32.xlu0 %v3146, 8
  %v3227 = vpop.permute.xlu0 %3226
  %3228 = vrot.lane.b32.xlu0 %v3147, 8
  %v3229 = vpop.permute.xlu0 %3228
  %3230 = vrot.lane.b32.xlu0 %v3148, 8
  %v3231 = vpop.permute.xlu0 %3230
  %3232 = vrot.lane.b32.xlu0 %v3149, 8
  %v3233 = vpop.permute.xlu0 %3232
  %3234 = vrot.lane.b32.xlu0 %v3150, 8
  %v3235 = vpop.permute.xlu0 %3234
  %3236 = vrot.lane.b32.xlu0 %v3151, 8
  %v3237 = vpop.permute.xlu0 %3236
  %3238 = vrot.lane.b32.xlu0 %v3152, 8
  %v3239 = vpop.permute.xlu0 %3238
  %3240 = vrot.lane.b32.xlu0 %v3153, 8
  %v3241 = vpop.permute.xlu0 %3240
  %3242 = vrot.lane.b32.xlu0 %v3154, 8
  %v3243 = vpop.permute.xlu0 %3242
  %3244 = vrot.lane.b32.xlu0 %v3155, 8
  %v3245 = vpop.permute.xlu0 %3244
  %3246 = vrot.lane.b32.xlu0 %v3156, 8
  %v3247 = vpop.permute.xlu0 %3246
  %3248 = vrot.lane.b32.xlu0 %v3157, 8
  %v3249 = vpop.permute.xlu0 %3248
  %3250 = vrot.lane.b32.xlu0 %v3158, 8
  %v3251 = vpop.permute.xlu0 %3250
  %3252 = vrot.lane.b32.xlu0 %v3159, 8
  %v3253 = vpop.permute.xlu0 %3252
  %3254 = vrot.lane.b32.xlu0 %v3160, 8
  %v3255 = vpop.permute.xlu0 %3254
  %3256 = vrot.lane.b32.xlu0 %v3161, 8
  %v3257 = vpop.permute.xlu0 %3256
  %vm3290 = vcmask 130112
  %3291 = vst.msk [vmem:[%s1] sm:$0xff] %vm3290, %v3195
  %3292 = vst.msk [vmem:[%s1 + $0x8] sm:$0xff] %vm3290, %v3197
  %3293 = vst.msk [vmem:[%s1 + $0x10] sm:$0xff] %vm3290, %v3199
  %3294 = vst.msk [vmem:[%s1 + $0x18] sm:$0xff] %vm3290, %v3201
  %3295 = vst.msk [vmem:[%s1 + $0x20] sm:$0xff] %vm3290, %v3203
  %3296 = vst.msk [vmem:[%s1 + $0x28] sm:$0xff] %vm3290, %v3205
  %3297 = vst.msk [vmem:[%s1 + $0x30] sm:$0xff] %vm3290, %v3207
  %3298 = vst.msk [vmem:[%s1 + $0x38] sm:$0xff] %vm3290, %v3209
  %3299 = vst.msk [vmem:[%s1 + $0x40] sm:$0xff] %vm3290, %v3211
  %3300 = vst.msk [vmem:[%s1 + $0x48] sm:$0xff] %vm3290, %v3213
  %3301 = vst.msk [vmem:[%s1 + $0x50] sm:$0xff] %vm3290, %v3215
  %3302 = vst.msk [vmem:[%s1 + $0x58] sm:$0xff] %vm3290, %v3217
  %3303 = vst.msk [vmem:[%s1 + $0x60] sm:$0xff] %vm3290, %v3219
  %3304 = vst.msk [vmem:[%s1 + $0x68] sm:$0xff] %vm3290, %v3221
  %3305 = vst.msk [vmem:[%s1 + $0x70] sm:$0xff] %vm3290, %v3223
  %3306 = vst.msk [vmem:[%s1 + $0x78] sm:$0xff] %vm3290, %v3225
  %3307 = vst.msk [vmem:[%s1 + $0x80] sm:$0xff] %vm3290, %v3227
  %3308 = vst.msk [vmem:[%s1 + $0x88] sm:$0xff] %vm3290, %v3229
  %3309 = vst.msk [vmem:[%s1 + $0x90] sm:$0xff] %vm3290, %v3231
  %3310 = vst.msk [vmem:[%s1 + $0x98] sm:$0xff] %vm3290, %v3233
  %3311 = vst.msk [vmem:[%s1 + $0xa0] sm:$0xff] %vm3290, %v3235
  %3312 = vst.msk [vmem:[%s1 + $0xa8] sm:$0xff] %vm3290, %v3237
  %3313 = vst.msk [vmem:[%s1 + $0xb0] sm:$0xff] %vm3290, %v3239
  %3314 = vst.msk [vmem:[%s1 + $0xb8] sm:$0xff] %vm3290, %v3241
  %3315 = vst.msk [vmem:[%s1 + $0xc0] sm:$0xff] %vm3290, %v3243
  %3316 = vst.msk [vmem:[%s1 + $0xc8] sm:$0xff] %vm3290, %v3245
  %3317 = vst.msk [vmem:[%s1 + $0xd0] sm:$0xff] %vm3290, %v3247
  %3318 = vst.msk [vmem:[%s1 + $0xd8] sm:$0xff] %vm3290, %v3249
  %3319 = vst.msk [vmem:[%s1 + $0xe0] sm:$0xff] %vm3290, %v3251
  %3320 = vst.msk [vmem:[%s1 + $0xe8] sm:$0xff] %vm3290, %v3253
  %3321 = vst.msk [vmem:[%s1 + $0xf0] sm:$0xff] %vm3290, %v3255
  %3322 = vst.msk [vmem:[%s1 + $0xf8] sm:$0xff] %vm3290, %v3257
  %3323 = vrot.lane.b32.xlu0 %v40, 112
  %v3324 = vpop.permute.xlu0 %3323
  %3325 = vrot.lane.b32.xlu0 %v41, 112
  %v3326 = vpop.permute.xlu0 %3325
  %3327 = vrot.lane.b32.xlu0 %v42, 112
  %v3328 = vpop.permute.xlu0 %3327
  %3329 = vrot.lane.b32.xlu0 %v43, 112
  %v3330 = vpop.permute.xlu0 %3329
  %3331 = vrot.lane.b32.xlu0 %v44, 112
  %v3332 = vpop.permute.xlu0 %3331
  %3333 = vrot.lane.b32.xlu0 %v45, 112
  %v3334 = vpop.permute.xlu0 %3333
  %3335 = vrot.lane.b32.xlu0 %v46, 112
  %v3336 = vpop.permute.xlu0 %3335
  %3337 = vrot.lane.b32.xlu0 %v47, 112
  %v3338 = vpop.permute.xlu0 %3337
  %3339 = vrot.lane.b32.xlu0 %v8, 112
  %v3340 = vpop.permute.xlu0 %3339
  %3341 = vrot.lane.b32.xlu0 %v9, 112
  %v3342 = vpop.permute.xlu0 %3341
  %3343 = vrot.lane.b32.xlu0 %v10, 112
  %v3344 = vpop.permute.xlu0 %3343
  %3345 = vrot.lane.b32.xlu0 %v11, 112
  %v3346 = vpop.permute.xlu0 %3345
  %3347 = vrot.lane.b32.xlu0 %v12, 112
  %v3348 = vpop.permute.xlu0 %3347
  %3349 = vrot.lane.b32.xlu0 %v13, 112
  %v3350 = vpop.permute.xlu0 %3349
  %3351 = vrot.lane.b32.xlu0 %v14, 112
  %v3352 = vpop.permute.xlu0 %3351
  %3353 = vrot.lane.b32.xlu0 %v15, 112
  %v3354 = vpop.permute.xlu0 %3353
  %v3355 = vsel %vm72, %v3324, 0
  %v3357 = vsel %vm72, %v3326, 0
  %v3359 = vsel %vm72, %v3328, 0
  %v3361 = vsel %vm72, %v3330, 0
  %v3363 = vsel %vm72, %v3332, 0
  %v3365 = vsel %vm72, %v3334, 0
  %v3367 = vsel %vm72, %v3336, 0
  %v3369 = vsel %vm72, %v3338, 0
  %v3371 = vsel %vm72, %v3340, 0
  %v3373 = vsel %vm72, %v3342, 0
  %v3375 = vsel %vm72, %v3344, 0
  %v3377 = vsel %vm72, %v3346, 0
  %v3379 = vsel %vm72, %v3348, 0
  %v3381 = vsel %vm72, %v3350, 0
  %v3383 = vsel %vm72, %v3352, 0
  %v3385 = vsel %vm72, %v3354, 0
  %3387 = vmatprep.subr.mxu0 0.0
  %3388 = vmatpush1.xpose.msra.mxu0 %v3371
  %3389 = vmatprep.subr.mxu0 0.0
  %3390 = vmatpush1.xpose.msra.mxu0 %v3373
  %3391 = vmatprep.subr.mxu0 0.0
  %3392 = vmatpush1.xpose.msra.mxu0 %v3375
  %3393 = vmatprep.subr.mxu0 0.0
  %3394 = vmatpush1.xpose.msra.mxu0 %v3377
  %3395 = vmatprep.subr.mxu0 0.0
  %3396 = vmatpush1.xpose.msra.mxu0 %v3379
  %3397 = vmatprep.subr.mxu0 0.0
  %3398 = vmatpush1.xpose.msra.mxu0 %v3381
  %3399 = vmatprep.subr.mxu0 0.0
  %3400 = vmatpush1.xpose.msra.mxu0 %v3383
  %3401 = vmatprep.subr.mxu0 0.0
  %3402 = vmatpush1.xpose.msra.mxu0 %v3385
  %3403 = vmatprep.subr.mxu0 0.0
  %3404 = vmatpush1.xpose.msra.mxu0 0.0
  %3405 = vmatprep.subr.mxu0 0.0
  %3406 = vmatpush1.xpose.msra.mxu0 0.0
  %3407 = vmatprep.subr.mxu0 0.0
  %3408 = vmatpush1.xpose.msra.mxu0 0.0
  %3409 = vmatprep.subr.mxu0 0.0
  %3410 = vmatpush1.xpose.msra.mxu0 0.0
  %3411 = vmatprep.subr.mxu0 0.0
  %3412 = vmatpush1.xpose.msra.mxu0 0.0
  %3413 = vmatprep.subr.mxu0 0.0
  %3414 = vmatpush1.xpose.msra.mxu0 0.0
  %3415 = vmatprep.subr.mxu0 0.0
  %3416 = vmatpush1.xpose.msra.mxu0 0.0
  %3417 = vmatprep.subr.mxu0 0.0
  %3418 = vmatpush1.xpose.msra.mxu0 0.0
  %3419 = vmatprep.subr.mxu0 0.0
  %3420 = vmatpush1.xpose.msra.mxu0 0.0
  %3421 = vmatprep.subr.mxu0 0.0
  %3422 = vmatpush1.xpose.msra.mxu0 0.0
  %3423 = vmatprep.subr.mxu0 0.0
  %3424 = vmatpush1.xpose.msra.mxu0 0.0
  %3425 = vmatprep.subr.mxu0 0.0
  %3426 = vmatpush1.xpose.msra.mxu0 0.0
  %3427 = vmatprep.subr.mxu0 0.0
  %3428 = vmatpush1.xpose.msra.mxu0 0.0
  %3429 = vmatprep.subr.mxu0 0.0
  %3430 = vmatpush1.xpose.msra.mxu0 0.0
  %3431 = vmatprep.subr.mxu0 0.0
  %3432 = vmatpush1.xpose.msra.mxu0 0.0
  %3433 = vmatprep.subr.mxu0 0.0
  %3434 = vmatpush1.xpose.msra.mxu0 0.0
  %3435 = vmatprep.subr.mxu0 0.0
  %3436 = vmatpush1.xpose.msra.mxu0 0.0
  %3437 = vmatprep.subr.mxu0 0.0
  %3438 = vmatpush1.xpose.msra.mxu0 0.0
  %3439 = vmatprep.subr.mxu0 0.0
  %3440 = vmatpush1.xpose.msra.mxu0 0.0
  %3441 = vmatprep.subr.mxu0 0.0
  %3442 = vmatpush1.xpose.msra.mxu0 0.0
  %3443 = vmatprep.subr.mxu0 0.0
  %3444 = vmatpush1.xpose.msra.mxu0 0.0
  %3445 = vmatprep.subr.mxu0 0.0
  %3446 = vmatpush1.xpose.msra.mxu0 0.0
  %3447 = vmatprep.subr.mxu0 0.0
  %3448 = vmatpush1.xpose.msra.mxu0 0.0
  %3449 = vmatprep.subr.mxu0 0.0
  %3450 = vmatpush1.xpose.msra.mxu0 0.0
  %3451 = vmatprep.mubr.f32.mxu0 0.0
  %3452 = vmatmul.mubr.f32.gmra.mrb[0].mxu0 %v3355
  %v3453 = vpop.f32.mrb[0].mxu0
  %v3454 = vadd.f32 0.0, %v3453
  %v3455 = vpop.f32.mrb[0].mxu0
  %3456 = vmatprep.mubr.f32.mxu0 0.0
  %3457 = vmatmul.mubr.f32.gmra.mrb[0].mxu0 %v3357
  %v3458 = vpop.f32.mrb[0].mxu0
  %v3459 = vadd.f32 0.0, %v3458
  %v3460 = vpop.f32.mrb[0].mxu0
  %3461 = vmatprep.mubr.f32.mxu0 0.0
  %3462 = vmatmul.mubr.f32.gmra.mrb[0].mxu0 %v3359
  %v3463 = vpop.f32.mrb[0].mxu0
  %v3464 = vadd.f32 0.0, %v3463
  %v3465 = vpop.f32.mrb[0].mxu0
  %3466 = vmatprep.mubr.f32.mxu0 0.0
  %3467 = vmatmul.mubr.f32.gmra.mrb[0].mxu0 %v3361
  %v3468 = vpop.f32.mrb[0].mxu0
  %v3469 = vadd.f32 0.0, %v3468
  %v3470 = vpop.f32.mrb[0].mxu0
  %3471 = vmatprep.mubr.f32.mxu0 0.0
  %3472 = vmatmul.mubr.f32.gmra.mrb[0].mxu0 %v3363
  %v3473 = vpop.f32.mrb[0].mxu0
  %v3474 = vadd.f32 0.0, %v3473
  %v3475 = vpop.f32.mrb[0].mxu0
  %3476 = vmatprep.mubr.f32.mxu0 0.0
  %3477 = vmatmul.mubr.f32.gmra.mrb[0].mxu0 %v3365
  %v3478 = vpop.f32.mrb[0].mxu0
  %v3479 = vadd.f32 0.0, %v3478
  %v3480 = vpop.f32.mrb[0].mxu0
  %3481 = vmatprep.mubr.f32.mxu0 0.0
  %3482 = vmatmul.mubr.f32.gmra.mrb[0].mxu0 %v3367
  %v3483 = vpop.f32.mrb[0].mxu0
  %v3484 = vadd.f32 0.0, %v3483
  %v3485 = vpop.f32.mrb[0].mxu0
  %3486 = vmatprep.mubr.f32.mxu0 0.0
  %3487 = vmatmul.mubr.f32.gmra.mrb[0].mxu0 %v3369
  %v3488 = vpop.f32.mrb[0].mxu0
  %v3489 = vadd.f32 0.0, %v3488
  %v3490 = vpop.f32.mrb[0].mxu0
  %3491 = vdwg.mxu0
  %3492 = vrot.lane.b32.xlu0 %v48, 112
  %v3493 = vpop.permute.xlu0 %3492
  %3494 = vrot.lane.b32.xlu0 %v49, 112
  %v3495 = vpop.permute.xlu0 %3494
  %3496 = vrot.lane.b32.xlu0 %v50, 112
  %v3497 = vpop.permute.xlu0 %3496
  %3498 = vrot.lane.b32.xlu0 %v51, 112
  %v3499 = vpop.permute.xlu0 %3498
  %3500 = vrot.lane.b32.xlu0 %v52, 112
  %v3501 = vpop.permute.xlu0 %3500
  %3502 = vrot.lane.b32.xlu0 %v53, 112
  %v3503 = vpop.permute.xlu0 %3502
  %3504 = vrot.lane.b32.xlu0 %v54, 112
  %v3505 = vpop.permute.xlu0 %3504
  %3506 = vrot.lane.b32.xlu0 %v55, 112
  %v3507 = vpop.permute.xlu0 %3506
  %3508 = vrot.lane.b32.xlu0 %v16, 112
  %v3509 = vpop.permute.xlu0 %3508
  %3510 = vrot.lane.b32.xlu0 %v17, 112
  %v3511 = vpop.permute.xlu0 %3510
  %3512 = vrot.lane.b32.xlu0 %v18, 112
  %v3513 = vpop.permute.xlu0 %3512
  %3514 = vrot.lane.b32.xlu0 %v19, 112
  %v3515 = vpop.permute.xlu0 %3514
  %3516 = vrot.lane.b32.xlu0 %v20, 112
  %v3517 = vpop.permute.xlu0 %3516
  %3518 = vrot.lane.b32.xlu0 %v21, 112
  %v3519 = vpop.permute.xlu0 %3518
  %3520 = vrot.lane.b32.xlu0 %v22, 112
  %v3521 = vpop.permute.xlu0 %3520
  %3522 = vrot.lane.b32.xlu0 %v23, 112
  %v3523 = vpop.permute.xlu0 %3522
  %v3524 = vsel %vm72, %v3493, 0
  %v3526 = vsel %vm72, %v3495, 0
  %v3528 = vsel %vm72, %v3497, 0
  %v3530 = vsel %vm72, %v3499, 0
  %v3532 = vsel %vm72, %v3501, 0
  %v3534 = vsel %vm72, %v3503, 0
  %v3536 = vsel %vm72, %v3505, 0
  %v3538 = vsel %vm72, %v3507, 0
  %v3540 = vsel %vm72, %v3509, 0
  %v3542 = vsel %vm72, %v3511, 0
  %v3544 = vsel %vm72, %v3513, 0
  %v3546 = vsel %vm72, %v3515, 0
  %v3548 = vsel %vm72, %v3517, 0
  %v3550 = vsel %vm72, %v3519, 0
  %v3552 = vsel %vm72, %v3521, 0
  %v3554 = vsel %vm72, %v3523, 0
  %3556 = vmatprep.subr.mxu0 0.0
  %3557 = vmatpush1.xpose.msra.mxu0 %v3540
  %3558 = vmatprep.subr.mxu0 0.0
  %3559 = vmatpush1.xpose.msra.mxu0 %v3542
  %3560 = vmatprep.subr.mxu0 0.0
  %3561 = vmatpush1.xpose.msra.mxu0 %v3544
  %3562 = vmatprep.subr.mxu0 0.0
  %3563 = vmatpush1.xpose.msra.mxu0 %v3546
  %3564 = vmatprep.subr.mxu0 0.0
  %3565 = vmatpush1.xpose.msra.mxu0 %v3548
  %3566 = vmatprep.subr.mxu0 0.0
  %3567 = vmatpush1.xpose.msra.mxu0 %v3550
  %3568 = vmatprep.subr.mxu0 0.0
  %3569 = vmatpush1.xpose.msra.mxu0 %v3552
  %3570 = vmatprep.subr.mxu0 0.0
  %3571 = vmatpush1.xpose.msra.mxu0 %v3554
  %3572 = vmatprep.subr.mxu0 0.0
  %3573 = vmatpush1.xpose.msra.mxu0 0.0
  %3574 = vmatprep.subr.mxu0 0.0
  %3575 = vmatpush1.xpose.msra.mxu0 0.0
  %3576 = vmatprep.subr.mxu0 0.0
  %3577 = vmatpush1.xpose.msra.mxu0 0.0
  %3578 = vmatprep.subr.mxu0 0.0
  %3579 = vmatpush1.xpose.msra.mxu0 0.0
  %3580 = vmatprep.subr.mxu0 0.0
  %3581 = vmatpush1.xpose.msra.mxu0 0.0
  %3582 = vmatprep.subr.mxu0 0.0
  %3583 = vmatpush1.xpose.msra.mxu0 0.0
  %3584 = vmatprep.subr.mxu0 0.0
  %3585 = vmatpush1.xpose.msra.mxu0 0.0
  %3586 = vmatprep.subr.mxu0 0.0
  %3587 = vmatpush1.xpose.msra.mxu0 0.0
  %3588 = vmatprep.subr.mxu0 0.0
  %3589 = vmatpush1.xpose.msra.mxu0 0.0
  %3590 = vmatprep.subr.mxu0 0.0
  %3591 = vmatpush1.xpose.msra.mxu0 0.0
  %3592 = vmatprep.subr.mxu0 0.0
  %3593 = vmatpush1.xpose.msra.mxu0 0.0
  %3594 = vmatprep.subr.mxu0 0.0
  %3595 = vmatpush1.xpose.msra.mxu0 0.0
  %3596 = vmatprep.subr.mxu0 0.0
  %3597 = vmatpush1.xpose.msra.mxu0 0.0
  %3598 = vmatprep.subr.mxu0 0.0
  %3599 = vmatpush1.xpose.msra.mxu0 0.0
  %3600 = vmatprep.subr.mxu0 0.0
  %3601 = vmatpush1.xpose.msra.mxu0 0.0
  %3602 = vmatprep.subr.mxu0 0.0
  %3603 = vmatpush1.xpose.msra.mxu0 0.0
  %3604 = vmatprep.subr.mxu0 0.0
  %3605 = vmatpush1.xpose.msra.mxu0 0.0
  %3606 = vmatprep.subr.mxu0 0.0
  %3607 = vmatpush1.xpose.msra.mxu0 0.0
  %3608 = vmatprep.subr.mxu0 0.0
  %3609 = vmatpush1.xpose.msra.mxu0 0.0
  %3610 = vmatprep.subr.mxu0 0.0
  %3611 = vmatpush1.xpose.msra.mxu0 0.0
  %3612 = vmatprep.subr.mxu0 0.0
  %3613 = vmatpush1.xpose.msra.mxu0 0.0
  %3614 = vmatprep.subr.mxu0 0.0
  %3615 = vmatpush1.xpose.msra.mxu0 0.0
  %3616 = vmatprep.subr.mxu0 0.0
  %3617 = vmatpush1.xpose.msra.mxu0 0.0
  %3618 = vmatprep.subr.mxu0 0.0
  %3619 = vmatpush1.xpose.msra.mxu0 0.0
  %3620 = vmatprep.mubr.f32.mxu0 0.0
  %3621 = vmatmul.mubr.f32.gmra.mrb[0].mxu0 %v3524
  %v3622 = vpop.f32.mrb[0].mxu0
  %v3623 = vadd.f32 0.0, %v3622
  %v3624 = vpop.f32.mrb[0].mxu0
  %3625 = vmatprep.mubr.f32.mxu0 0.0
  %3626 = vmatmul.mubr.f32.gmra.mrb[0].mxu0 %v3526
  %v3627 = vpop.f32.mrb[0].mxu0
  %v3628 = vadd.f32 0.0, %v3627
  %v3629 = vpop.f32.mrb[0].mxu0
  %3630 = vmatprep.mubr.f32.mxu0 0.0
  %3631 = vmatmul.mubr.f32.gmra.mrb[0].mxu0 %v3528
  %v3632 = vpop.f32.mrb[0].mxu0
  %v3633 = vadd.f32 0.0, %v3632
  %v3634 = vpop.f32.mrb[0].mxu0
  %3635 = vmatprep.mubr.f32.mxu0 0.0
  %3636 = vmatmul.mubr.f32.gmra.mrb[0].mxu0 %v3530
  %v3637 = vpop.f32.mrb[0].mxu0
  %v3638 = vadd.f32 0.0, %v3637
  %v3639 = vpop.f32.mrb[0].mxu0
  %3640 = vmatprep.mubr.f32.mxu0 0.0
  %3641 = vmatmul.mubr.f32.gmra.mrb[0].mxu0 %v3532
  %v3642 = vpop.f32.mrb[0].mxu0
  %v3643 = vadd.f32 0.0, %v3642
  %v3644 = vpop.f32.mrb[0].mxu0
  %3645 = vmatprep.mubr.f32.mxu0 0.0
  %3646 = vmatmul.mubr.f32.gmra.mrb[0].mxu0 %v3534
  %v3647 = vpop.f32.mrb[0].mxu0
  %v3648 = vadd.f32 0.0, %v3647
  %v3649 = vpop.f32.mrb[0].mxu0
  %3650 = vmatprep.mubr.f32.mxu0 0.0
  %3651 = vmatmul.mubr.f32.gmra.mrb[0].mxu0 %v3536
  %v3652 = vpop.f32.mrb[0].mxu0
  %v3653 = vadd.f32 0.0, %v3652
  %v3654 = vpop.f32.mrb[0].mxu0
  %3655 = vmatprep.mubr.f32.mxu0 0.0
  %3656 = vmatmul.mubr.f32.gmra.mrb[0].mxu0 %v3538
  %v3657 = vpop.f32.mrb[0].mxu0
  %v3658 = vadd.f32 0.0, %v3657
  %v3659 = vpop.f32.mrb[0].mxu0
  %3660 = vdwg.mxu0
  %3661 = vrot.lane.b32.xlu0 %v56, 112
  %v3662 = vpop.permute.xlu0 %3661
  %3663 = vrot.lane.b32.xlu0 %v57, 112
  %v3664 = vpop.permute.xlu0 %3663
  %3665 = vrot.lane.b32.xlu0 %v58, 112
  %v3666 = vpop.permute.xlu0 %3665
  %3667 = vrot.lane.b32.xlu0 %v59, 112
  %v3668 = vpop.permute.xlu0 %3667
  %3669 = vrot.lane.b32.xlu0 %v60, 112
  %v3670 = vpop.permute.xlu0 %3669
  %3671 = vrot.lane.b32.xlu0 %v61, 112
  %v3672 = vpop.permute.xlu0 %3671
  %3673 = vrot.lane.b32.xlu0 %v62, 112
  %v3674 = vpop.permute.xlu0 %3673
  %3675 = vrot.lane.b32.xlu0 %v63, 112
  %v3676 = vpop.permute.xlu0 %3675
  %3677 = vrot.lane.b32.xlu0 %v24, 112
  %v3678 = vpop.permute.xlu0 %3677
  %3679 = vrot.lane.b32.xlu0 %v25, 112
  %v3680 = vpop.permute.xlu0 %3679
  %3681 = vrot.lane.b32.xlu0 %v26, 112
  %v3682 = vpop.permute.xlu0 %3681
  %3683 = vrot.lane.b32.xlu0 %v27, 112
  %v3684 = vpop.permute.xlu0 %3683
  %3685 = vrot.lane.b32.xlu0 %v28, 112
  %v3686 = vpop.permute.xlu0 %3685
  %3687 = vrot.lane.b32.xlu0 %v29, 112
  %v3688 = vpop.permute.xlu0 %3687
  %3689 = vrot.lane.b32.xlu0 %v30, 112
  %v3690 = vpop.permute.xlu0 %3689
  %3691 = vrot.lane.b32.xlu0 %v31, 112
  %v3692 = vpop.permute.xlu0 %3691
  %v3693 = vsel %vm72, %v3662, 0
  %v3695 = vsel %vm72, %v3664, 0
  %v3697 = vsel %vm72, %v3666, 0
  %v3699 = vsel %vm72, %v3668, 0
  %v3701 = vsel %vm72, %v3670, 0
  %v3703 = vsel %vm72, %v3672, 0
  %v3705 = vsel %vm72, %v3674, 0
  %v3707 = vsel %vm72, %v3676, 0
  %v3709 = vsel %vm72, %v3678, 0
  %v3711 = vsel %vm72, %v3680, 0
  %v3713 = vsel %vm72, %v3682, 0
  %v3715 = vsel %vm72, %v3684, 0
  %v3717 = vsel %vm72, %v3686, 0
  %v3719 = vsel %vm72, %v3688, 0
  %v3721 = vsel %vm72, %v3690, 0
  %v3723 = vsel %vm72, %v3692, 0
  %3725 = vmatprep.subr.mxu0 0.0
  %3726 = vmatpush1.xpose.msra.mxu0 %v3709
  %3727 = vmatprep.subr.mxu0 0.0
  %3728 = vmatpush1.xpose.msra.mxu0 %v3711
  %3729 = vmatprep.subr.mxu0 0.0
  %3730 = vmatpush1.xpose.msra.mxu0 %v3713
  %3731 = vmatprep.subr.mxu0 0.0
  %3732 = vmatpush1.xpose.msra.mxu0 %v3715
  %3733 = vmatprep.subr.mxu0 0.0
  %3734 = vmatpush1.xpose.msra.mxu0 %v3717
  %3735 = vmatprep.subr.mxu0 0.0
  %3736 = vmatpush1.xpose.msra.mxu0 %v3719
  %3737 = vmatprep.subr.mxu0 0.0
  %3738 = vmatpush1.xpose.msra.mxu0 %v3721
  %3739 = vmatprep.subr.mxu0 0.0
  %3740 = vmatpush1.xpose.msra.mxu0 %v3723
  %3741 = vmatprep.subr.mxu0 0.0
  %3742 = vmatpush1.xpose.msra.mxu0 0.0
  %3743 = vmatprep.subr.mxu0 0.0
  %3744 = vmatpush1.xpose.msra.mxu0 0.0
  %3745 = vmatprep.subr.mxu0 0.0
  %3746 = vmatpush1.xpose.msra.mxu0 0.0
  %3747 = vmatprep.subr.mxu0 0.0
  %3748 = vmatpush1.xpose.msra.mxu0 0.0
  %3749 = vmatprep.subr.mxu0 0.0
  %3750 = vmatpush1.xpose.msra.mxu0 0.0
  %3751 = vmatprep.subr.mxu0 0.0
  %3752 = vmatpush1.xpose.msra.mxu0 0.0
  %3753 = vmatprep.subr.mxu0 0.0
  %3754 = vmatpush1.xpose.msra.mxu0 0.0
  %3755 = vmatprep.subr.mxu0 0.0
  %3756 = vmatpush1.xpose.msra.mxu0 0.0
  %3757 = vmatprep.subr.mxu0 0.0
  %3758 = vmatpush1.xpose.msra.mxu0 0.0
  %3759 = vmatprep.subr.mxu0 0.0
  %3760 = vmatpush1.xpose.msra.mxu0 0.0
  %3761 = vmatprep.subr.mxu0 0.0
  %3762 = vmatpush1.xpose.msra.mxu0 0.0
  %3763 = vmatprep.subr.mxu0 0.0
  %3764 = vmatpush1.xpose.msra.mxu0 0.0
  %3765 = vmatprep.subr.mxu0 0.0
  %3766 = vmatpush1.xpose.msra.mxu0 0.0
  %3767 = vmatprep.subr.mxu0 0.0
  %3768 = vmatpush1.xpose.msra.mxu0 0.0
  %3769 = vmatprep.subr.mxu0 0.0
  %3770 = vmatpush1.xpose.msra.mxu0 0.0
  %3771 = vmatprep.subr.mxu0 0.0
  %3772 = vmatpush1.xpose.msra.mxu0 0.0
  %3773 = vmatprep.subr.mxu0 0.0
  %3774 = vmatpush1.xpose.msra.mxu0 0.0
  %3775 = vmatprep.subr.mxu0 0.0
  %3776 = vmatpush1.xpose.msra.mxu0 0.0
  %3777 = vmatprep.subr.mxu0 0.0
  %3778 = vmatpush1.xpose.msra.mxu0 0.0
  %3779 = vmatprep.subr.mxu0 0.0
  %3780 = vmatpush1.xpose.msra.mxu0 0.0
  %3781 = vmatprep.subr.mxu0 0.0
  %3782 = vmatpush1.xpose.msra.mxu0 0.0
  %3783 = vmatprep.subr.mxu0 0.0
  %3784 = vmatpush1.xpose.msra.mxu0 0.0
  %3785 = vmatprep.subr.mxu0 0.0
  %3786 = vmatpush1.xpose.msra.mxu0 0.0
  %3787 = vmatprep.subr.mxu0 0.0
  %3788 = vmatpush1.xpose.msra.mxu0 0.0
  %3789 = vmatprep.mubr.f32.mxu0 0.0
  %3790 = vmatmul.mubr.f32.gmra.mrb[0].mxu0 %v3693
  %v3791 = vpop.f32.mrb[0].mxu0
  %v3792 = vadd.f32 0.0, %v3791
  %v3793 = vpop.f32.mrb[0].mxu0
  %3794 = vmatprep.mubr.f32.mxu0 0.0
  %3795 = vmatmul.mubr.f32.gmra.mrb[0].mxu0 %v3695
  %v3796 = vpop.f32.mrb[0].mxu0
  %v3797 = vadd.f32 0.0, %v3796
  %v3798 = vpop.f32.mrb[0].mxu0
  %3799 = vmatprep.mubr.f32.mxu0 0.0
  %3800 = vmatmul.mubr.f32.gmra.mrb[0].mxu0 %v3697
  %v3801 = vpop.f32.mrb[0].mxu0
  %v3802 = vadd.f32 0.0, %v3801
  %v3803 = vpop.f32.mrb[0].mxu0
  %3804 = vmatprep.mubr.f32.mxu0 0.0
  %3805 = vmatmul.mubr.f32.gmra.mrb[0].mxu0 %v3699
  %v3806 = vpop.f32.mrb[0].mxu0
  %v3807 = vadd.f32 0.0, %v3806
  %v3808 = vpop.f32.mrb[0].mxu0
  %3809 = vmatprep.mubr.f32.mxu0 0.0
  %3810 = vmatmul.mubr.f32.gmra.mrb[0].mxu0 %v3701
  %v3811 = vpop.f32.mrb[0].mxu0
  %v3812 = vadd.f32 0.0, %v3811
  %v3813 = vpop.f32.mrb[0].mxu0
  %3814 = vmatprep.mubr.f32.mxu0 0.0
  %3815 = vmatmul.mubr.f32.gmra.mrb[0].mxu0 %v3703
  %v3816 = vpop.f32.mrb[0].mxu0
  %v3817 = vadd.f32 0.0, %v3816
  %v3818 = vpop.f32.mrb[0].mxu0
  %3819 = vmatprep.mubr.f32.mxu0 0.0
  %3820 = vmatmul.mubr.f32.gmra.mrb[0].mxu0 %v3705
  %v3821 = vpop.f32.mrb[0].mxu0
  %v3822 = vadd.f32 0.0, %v3821
  %v3823 = vpop.f32.mrb[0].mxu0
  %3824 = vmatprep.mubr.f32.mxu0 0.0
  %3825 = vmatmul.mubr.f32.gmra.mrb[0].mxu0 %v3707
  %v3826 = vpop.f32.mrb[0].mxu0
  %v3827 = vadd.f32 0.0, %v3826
  %v3828 = vpop.f32.mrb[0].mxu0
  %3829 = vdwg.mxu0
  %3830 = vrot.lane.b32.xlu0 %v64, 112
  %v3831 = vpop.permute.xlu0 %3830
  %3832 = vrot.lane.b32.xlu0 %v65, 112
  %v3833 = vpop.permute.xlu0 %3832
  %3834 = vrot.lane.b32.xlu0 %v66, 112
  %v3835 = vpop.permute.xlu0 %3834
  %3836 = vrot.lane.b32.xlu0 %v67, 112
  %v3837 = vpop.permute.xlu0 %3836
  %3838 = vrot.lane.b32.xlu0 %v68, 112
  %v3839 = vpop.permute.xlu0 %3838
  %3840 = vrot.lane.b32.xlu0 %v69, 112
  %v3841 = vpop.permute.xlu0 %3840
  %3842 = vrot.lane.b32.xlu0 %v70, 112
  %v3843 = vpop.permute.xlu0 %3842
  %3844 = vrot.lane.b32.xlu0 %v71, 112
  %v3845 = vpop.permute.xlu0 %3844
  %3846 = vrot.lane.b32.xlu0 %v32, 112
  %v3847 = vpop.permute.xlu0 %3846
  %3848 = vrot.lane.b32.xlu0 %v33, 112
  %v3849 = vpop.permute.xlu0 %3848
  %3850 = vrot.lane.b32.xlu0 %v34, 112
  %v3851 = vpop.permute.xlu0 %3850
  %3852 = vrot.lane.b32.xlu0 %v35, 112
  %v3853 = vpop.permute.xlu0 %3852
  %3854 = vrot.lane.b32.xlu0 %v36, 112
  %v3855 = vpop.permute.xlu0 %3854
  %3856 = vrot.lane.b32.xlu0 %v37, 112
  %v3857 = vpop.permute.xlu0 %3856
  %3858 = vrot.lane.b32.xlu0 %v38, 112
  %v3859 = vpop.permute.xlu0 %3858
  %3860 = vrot.lane.b32.xlu0 %v39, 112
  %v3861 = vpop.permute.xlu0 %3860
  %v3862 = vsel %vm72, %v3831, 0
  %v3864 = vsel %vm72, %v3833, 0
  %v3866 = vsel %vm72, %v3835, 0
  %v3868 = vsel %vm72, %v3837, 0
  %v3870 = vsel %vm72, %v3839, 0
  %v3872 = vsel %vm72, %v3841, 0
  %v3874 = vsel %vm72, %v3843, 0
  %v3876 = vsel %vm72, %v3845, 0
  %v3878 = vsel %vm72, %v3847, 0
  %v3880 = vsel %vm72, %v3849, 0
  %v3882 = vsel %vm72, %v3851, 0
  %v3884 = vsel %vm72, %v3853, 0
  %v3886 = vsel %vm72, %v3855, 0
  %v3888 = vsel %vm72, %v3857, 0
  %v3890 = vsel %vm72, %v3859, 0
  %v3892 = vsel %vm72, %v3861, 0
  %3894 = vmatprep.subr.mxu0 0.0
  %3895 = vmatpush1.xpose.msra.mxu0 %v3878
  %3896 = vmatprep.subr.mxu0 0.0
  %3897 = vmatpush1.xpose.msra.mxu0 %v3880
  %3898 = vmatprep.subr.mxu0 0.0
  %3899 = vmatpush1.xpose.msra.mxu0 %v3882
  %3900 = vmatprep.subr.mxu0 0.0
  %3901 = vmatpush1.xpose.msra.mxu0 %v3884
  %3902 = vmatprep.subr.mxu0 0.0
  %3903 = vmatpush1.xpose.msra.mxu0 %v3886
  %3904 = vmatprep.subr.mxu0 0.0
  %3905 = vmatpush1.xpose.msra.mxu0 %v3888
  %3906 = vmatprep.subr.mxu0 0.0
  %3907 = vmatpush1.xpose.msra.mxu0 %v3890
  %3908 = vmatprep.subr.mxu0 0.0
  %3909 = vmatpush1.xpose.msra.mxu0 %v3892
  %3910 = vmatprep.subr.mxu0 0.0
  %3911 = vmatpush1.xpose.msra.mxu0 0.0
  %3912 = vmatprep.subr.mxu0 0.0
  %3913 = vmatpush1.xpose.msra.mxu0 0.0
  %3914 = vmatprep.subr.mxu0 0.0
  %3915 = vmatpush1.xpose.msra.mxu0 0.0
  %3916 = vmatprep.subr.mxu0 0.0
  %3917 = vmatpush1.xpose.msra.mxu0 0.0
  %3918 = vmatprep.subr.mxu0 0.0
  %3919 = vmatpush1.xpose.msra.mxu0 0.0
  %3920 = vmatprep.subr.mxu0 0.0
  %3921 = vmatpush1.xpose.msra.mxu0 0.0
  %3922 = vmatprep.subr.mxu0 0.0
  %3923 = vmatpush1.xpose.msra.mxu0 0.0
  %3924 = vmatprep.subr.mxu0 0.0
  %3925 = vmatpush1.xpose.msra.mxu0 0.0
  %3926 = vmatprep.subr.mxu0 0.0
  %3927 = vmatpush1.xpose.msra.mxu0 0.0
  %3928 = vmatprep.subr.mxu0 0.0
  %3929 = vmatpush1.xpose.msra.mxu0 0.0
  %3930 = vmatprep.subr.mxu0 0.0
  %3931 = vmatpush1.xpose.msra.mxu0 0.0
  %3932 = vmatprep.subr.mxu0 0.0
  %3933 = vmatpush1.xpose.msra.mxu0 0.0
  %3934 = vmatprep.subr.mxu0 0.0
  %3935 = vmatpush1.xpose.msra.mxu0 0.0
  %3936 = vmatprep.subr.mxu0 0.0
  %3937 = vmatpush1.xpose.msra.mxu0 0.0
  %3938 = vmatprep.subr.mxu0 0.0
  %3939 = vmatpush1.xpose.msra.mxu0 0.0
  %3940 = vmatprep.subr.mxu0 0.0
  %3941 = vmatpush1.xpose.msra.mxu0 0.0
  %3942 = vmatprep.subr.mxu0 0.0
  %3943 = vmatpush1.xpose.msra.mxu0 0.0
  %3944 = vmatprep.subr.mxu0 0.0
  %3945 = vmatpush1.xpose.msra.mxu0 0.0
  %3946 = vmatprep.subr.mxu0 0.0
  %3947 = vmatpush1.xpose.msra.mxu0 0.0
  %3948 = vmatprep.subr.mxu0 0.0
  %3949 = vmatpush1.xpose.msra.mxu0 0.0
  %3950 = vmatprep.subr.mxu0 0.0
  %3951 = vmatpush1.xpose.msra.mxu0 0.0
  %3952 = vmatprep.subr.mxu0 0.0
  %3953 = vmatpush1.xpose.msra.mxu0 0.0
  %3954 = vmatprep.subr.mxu0 0.0
  %3955 = vmatpush1.xpose.msra.mxu0 0.0
  %3956 = vmatprep.subr.mxu0 0.0
  %3957 = vmatpush1.xpose.msra.mxu0 0.0
  %3958 = vmatprep.mubr.f32.mxu0 0.0
  %3959 = vmatmul.mubr.f32.gmra.mrb[0].mxu0 %v3862
  %v3960 = vpop.f32.mrb[0].mxu0
  %v3961 = vadd.f32 0.0, %v3960
  %v3962 = vpop.f32.mrb[0].mxu0
  %3963 = vmatprep.mubr.f32.mxu0 0.0
  %3964 = vmatmul.mubr.f32.gmra.mrb[0].mxu0 %v3864
  %v3965 = vpop.f32.mrb[0].mxu0
  %v3966 = vadd.f32 0.0, %v3965
  %v3967 = vpop.f32.mrb[0].mxu0
  %3968 = vmatprep.mubr.f32.mxu0 0.0
  %3969 = vmatmul.mubr.f32.gmra.mrb[0].mxu0 %v3866
  %v3970 = vpop.f32.mrb[0].mxu0
  %v3971 = vadd.f32 0.0, %v3970
  %v3972 = vpop.f32.mrb[0].mxu0
  %3973 = vmatprep.mubr.f32.mxu0 0.0
  %3974 = vmatmul.mubr.f32.gmra.mrb[0].mxu0 %v3868
  %v3975 = vpop.f32.mrb[0].mxu0
  %v3976 = vadd.f32 0.0, %v3975
  %v3977 = vpop.f32.mrb[0].mxu0
  %3978 = vmatprep.mubr.f32.mxu0 0.0
  %3979 = vmatmul.mubr.f32.gmra.mrb[0].mxu0 %v3870
  %v3980 = vpop.f32.mrb[0].mxu0
  %v3981 = vadd.f32 0.0, %v3980
  %v3982 = vpop.f32.mrb[0].mxu0
  %3983 = vmatprep.mubr.f32.mxu0 0.0
  %3984 = vmatmul.mubr.f32.gmra.mrb[0].mxu0 %v3872
  %v3985 = vpop.f32.mrb[0].mxu0
  %v3986 = vadd.f32 0.0, %v3985
  %v3987 = vpop.f32.mrb[0].mxu0
  %3988 = vmatprep.mubr.f32.mxu0 0.0
  %3989 = vmatmul.mubr.f32.gmra.mrb[0].mxu0 %v3874
  %v3990 = vpop.f32.mrb[0].mxu0
  %v3991 = vadd.f32 0.0, %v3990
  %v3992 = vpop.f32.mrb[0].mxu0
  %3993 = vmatprep.mubr.f32.mxu0 0.0
  %3994 = vmatmul.mubr.f32.gmra.mrb[0].mxu0 %v3876
  %v3995 = vpop.f32.mrb[0].mxu0
  %v3996 = vadd.f32 0.0, %v3995
  %v3997 = vpop.f32.mrb[0].mxu0
  %3998 = vdwg.mxu0
  %v3999 = vsel %vm685, %v3454, -inf
  %4000 = vmax.xlane.f32.xlu0 %v3999
  %v4001 = vpop.xlane.xlu0 %4000
  %v4002 = vsel %vm685, %v3459, -inf
  %4003 = vmax.xlane.f32.xlu0 %v4002
  %v4004 = vpop.xlane.xlu0 %4003
  %v4005 = vsel %vm685, %v3464, -inf
  %4006 = vmax.xlane.f32.xlu0 %v4005
  %v4007 = vpop.xlane.xlu0 %4006
  %v4008 = vsel %vm685, %v3469, -inf
  %4009 = vmax.xlane.f32.xlu0 %v4008
  %v4010 = vpop.xlane.xlu0 %4009
  %v4011 = vsel %vm685, %v3474, -inf
  %4012 = vmax.xlane.f32.xlu0 %v4011
  %v4013 = vpop.xlane.xlu0 %4012
  %v4014 = vsel %vm685, %v3479, -inf
  %4015 = vmax.xlane.f32.xlu0 %v4014
  %v4016 = vpop.xlane.xlu0 %4015
  %v4017 = vsel %vm685, %v3484, -inf
  %4018 = vmax.xlane.f32.xlu0 %v4017
  %v4019 = vpop.xlane.xlu0 %4018
  %v4020 = vsel %vm685, %v3489, -inf
  %4021 = vmax.xlane.f32.xlu0 %v4020
  %v4022 = vpop.xlane.xlu0 %4021
  %v4023 = vsel %vm685, %v3623, -inf
  %4024 = vmax.xlane.f32.xlu0 %v4023
  %v4025 = vpop.xlane.xlu0 %4024
  %v4026 = vsel %vm685, %v3628, -inf
  %4027 = vmax.xlane.f32.xlu0 %v4026
  %v4028 = vpop.xlane.xlu0 %4027
  %v4029 = vsel %vm685, %v3633, -inf
  %4030 = vmax.xlane.f32.xlu0 %v4029
  %v4031 = vpop.xlane.xlu0 %4030
  %v4032 = vsel %vm685, %v3638, -inf
  %4033 = vmax.xlane.f32.xlu0 %v4032
  %v4034 = vpop.xlane.xlu0 %4033
  %v4035 = vsel %vm685, %v3643, -inf
  %4036 = vmax.xlane.f32.xlu0 %v4035
  %v4037 = vpop.xlane.xlu0 %4036
  %v4038 = vsel %vm685, %v3648, -inf
  %4039 = vmax.xlane.f32.xlu0 %v4038
  %v4040 = vpop.xlane.xlu0 %4039
  %v4041 = vsel %vm685, %v3653, -inf
  %4042 = vmax.xlane.f32.xlu0 %v4041
  %v4043 = vpop.xlane.xlu0 %4042
  %v4044 = vsel %vm685, %v3658, -inf
  %4045 = vmax.xlane.f32.xlu0 %v4044
  %v4046 = vpop.xlane.xlu0 %4045
  %v4047 = vsel %vm685, %v3792, -inf
  %4048 = vmax.xlane.f32.xlu0 %v4047
  %v4049 = vpop.xlane.xlu0 %4048
  %v4050 = vsel %vm685, %v3797, -inf
  %4051 = vmax.xlane.f32.xlu0 %v4050
  %v4052 = vpop.xlane.xlu0 %4051
  %v4053 = vsel %vm685, %v3802, -inf
  %4054 = vmax.xlane.f32.xlu0 %v4053
  %v4055 = vpop.xlane.xlu0 %4054
  %v4056 = vsel %vm685, %v3807, -inf
  %4057 = vmax.xlane.f32.xlu0 %v4056
  %v4058 = vpop.xlane.xlu0 %4057
  %v4059 = vsel %vm685, %v3812, -inf
  %4060 = vmax.xlane.f32.xlu0 %v4059
  %v4061 = vpop.xlane.xlu0 %4060
  %v4062 = vsel %vm685, %v3817, -inf
  %4063 = vmax.xlane.f32.xlu0 %v4062
  %v4064 = vpop.xlane.xlu0 %4063
  %v4065 = vsel %vm685, %v3822, -inf
  %4066 = vmax.xlane.f32.xlu0 %v4065
  %v4067 = vpop.xlane.xlu0 %4066
  %v4068 = vsel %vm685, %v3827, -inf
  %4069 = vmax.xlane.f32.xlu0 %v4068
  %v4070 = vpop.xlane.xlu0 %4069
  %v4071 = vsel %vm685, %v3961, -inf
  %4072 = vmax.xlane.f32.xlu0 %v4071
  %v4073 = vpop.xlane.xlu0 %4072
  %v4074 = vsel %vm685, %v3966, -inf
  %4075 = vmax.xlane.f32.xlu0 %v4074
  %v4076 = vpop.xlane.xlu0 %4075
  %v4077 = vsel %vm685, %v3971, -inf
  %4078 = vmax.xlane.f32.xlu0 %v4077
  %v4079 = vpop.xlane.xlu0 %4078
  %v4080 = vsel %vm685, %v3976, -inf
  %4081 = vmax.xlane.f32.xlu0 %v4080
  %v4082 = vpop.xlane.xlu0 %4081
  %v4083 = vsel %vm685, %v3981, -inf
  %4084 = vmax.xlane.f32.xlu0 %v4083
  %v4085 = vpop.xlane.xlu0 %4084
  %v4086 = vsel %vm685, %v3986, -inf
  %4087 = vmax.xlane.f32.xlu0 %v4086
  %v4088 = vpop.xlane.xlu0 %4087
  %v4089 = vsel %vm685, %v3991, -inf
  %4090 = vmax.xlane.f32.xlu0 %v4089
  %v4091 = vpop.xlane.xlu0 %4090
  %v4092 = vsel %vm685, %v3996, -inf
  %4093 = vmax.xlane.f32.xlu0 %v4092
  %v4094 = vpop.xlane.xlu0 %4093
  %v4095 = vsub.f32 %v3454, %v4001
  %v4096 = vsub.f32 %v3459, %v4004
  %v4097 = vsub.f32 %v3464, %v4007
  %v4098 = vsub.f32 %v3469, %v4010
  %v4099 = vsub.f32 %v3474, %v4013
  %v4100 = vsub.f32 %v3479, %v4016
  %v4101 = vsub.f32 %v3484, %v4019
  %v4102 = vsub.f32 %v3489, %v4022
  %v4103 = vsub.f32 %v3623, %v4025
  %v4104 = vsub.f32 %v3628, %v4028
  %v4105 = vsub.f32 %v3633, %v4031
  %v4106 = vsub.f32 %v3638, %v4034
  %v4107 = vsub.f32 %v3643, %v4037
  %v4108 = vsub.f32 %v3648, %v4040
  %v4109 = vsub.f32 %v3653, %v4043
  %v4110 = vsub.f32 %v3658, %v4046
  %v4111 = vsub.f32 %v3792, %v4049
  %v4112 = vsub.f32 %v3797, %v4052
  %v4113 = vsub.f32 %v3802, %v4055
  %v4114 = vsub.f32 %v3807, %v4058
  %v4115 = vsub.f32 %v3812, %v4061
  %v4116 = vsub.f32 %v3817, %v4064
  %v4117 = vsub.f32 %v3822, %v4067
  %v4118 = vsub.f32 %v3827, %v4070
  %v4119 = vsub.f32 %v3961, %v4073
  %v4120 = vsub.f32 %v3966, %v4076
  %v4121 = vsub.f32 %v3971, %v4079
  %v4122 = vsub.f32 %v3976, %v4082
  %v4123 = vsub.f32 %v3981, %v4085
  %v4124 = vsub.f32 %v3986, %v4088
  %v4125 = vsub.f32 %v3991, %v4091
  %v4126 = vsub.f32 %v3996, %v4094
  %v4127 = vmul.f32 %v4095, 1.442695
  %v4128 = vpow.pop %v4127
  %v4129 = vmul.f32 %v4096, 1.442695
  %v4130 = vpow.pop %v4129
  %v4131 = vmul.f32 %v4097, 1.442695
  %v4132 = vpow.pop %v4131
  %v4133 = vmul.f32 %v4098, 1.442695
  %v4134 = vpow.pop %v4133
  %v4135 = vmul.f32 %v4099, 1.442695
  %v4136 = vpow.pop %v4135
  %v4137 = vmul.f32 %v4100, 1.442695
  %v4138 = vpow.pop %v4137
  %v4139 = vmul.f32 %v4101, 1.442695
  %v4140 = vpow.pop %v4139
  %v4141 = vmul.f32 %v4102, 1.442695
  %v4142 = vpow.pop %v4141
  %v4143 = vmul.f32 %v4103, 1.442695
  %v4144 = vpow.pop %v4143
  %v4145 = vmul.f32 %v4104, 1.442695
  %v4146 = vpow.pop %v4145
  %v4147 = vmul.f32 %v4105, 1.442695
  %v4148 = vpow.pop %v4147
  %v4149 = vmul.f32 %v4106, 1.442695
  %v4150 = vpow.pop %v4149
  %v4151 = vmul.f32 %v4107, 1.442695
  %v4152 = vpow.pop %v4151
  %v4153 = vmul.f32 %v4108, 1.442695
  %v4154 = vpow.pop %v4153
  %v4155 = vmul.f32 %v4109, 1.442695
  %v4156 = vpow.pop %v4155
  %v4157 = vmul.f32 %v4110, 1.442695
  %v4158 = vpow.pop %v4157
  %v4159 = vmul.f32 %v4111, 1.442695
  %v4160 = vpow.pop %v4159
  %v4161 = vmul.f32 %v4112, 1.442695
  %v4162 = vpow.pop %v4161
  %v4163 = vmul.f32 %v4113, 1.442695
  %v4164 = vpow.pop %v4163
  %v4165 = vmul.f32 %v4114, 1.442695
  %v4166 = vpow.pop %v4165
  %v4167 = vmul.f32 %v4115, 1.442695
  %v4168 = vpow.pop %v4167
  %v4169 = vmul.f32 %v4116, 1.442695
  %v4170 = vpow.pop %v4169
  %v4171 = vmul.f32 %v4117, 1.442695
  %v4172 = vpow.pop %v4171
  %v4173 = vmul.f32 %v4118, 1.442695
  %v4174 = vpow.pop %v4173
  %v4175 = vmul.f32 %v4119, 1.442695
  %v4176 = vpow.pop %v4175
  %v4177 = vmul.f32 %v4120, 1.442695
  %v4178 = vpow.pop %v4177
  %v4179 = vmul.f32 %v4121, 1.442695
  %v4180 = vpow.pop %v4179
  %v4181 = vmul.f32 %v4122, 1.442695
  %v4182 = vpow.pop %v4181
  %v4183 = vmul.f32 %v4123, 1.442695
  %v4184 = vpow.pop %v4183
  %v4185 = vmul.f32 %v4124, 1.442695
  %v4186 = vpow.pop %v4185
  %v4187 = vmul.f32 %v4125, 1.442695
  %v4188 = vpow.pop %v4187
  %v4189 = vmul.f32 %v4126, 1.442695
  %v4190 = vpow.pop %v4189
  %v4191 = vsel %vm685, %v4128, 0.0
  %4192 = vadd.xlane.f32.xlu0 %v4191
  %v4193 = vpop.xlane.xlu0 %4192
  %v4194 = vsel %vm685, %v4130, 0.0
  %4195 = vadd.xlane.f32.xlu0 %v4194
  %v4196 = vpop.xlane.xlu0 %4195
  %v4197 = vsel %vm685, %v4132, 0.0
  %4198 = vadd.xlane.f32.xlu0 %v4197
  %v4199 = vpop.xlane.xlu0 %4198
  %v4200 = vsel %vm685, %v4134, 0.0
  %4201 = vadd.xlane.f32.xlu0 %v4200
  %v4202 = vpop.xlane.xlu0 %4201
  %v4203 = vsel %vm685, %v4136, 0.0
  %4204 = vadd.xlane.f32.xlu0 %v4203
  %v4205 = vpop.xlane.xlu0 %4204
  %v4206 = vsel %vm685, %v4138, 0.0
  %4207 = vadd.xlane.f32.xlu0 %v4206
  %v4208 = vpop.xlane.xlu0 %4207
  %v4209 = vsel %vm685, %v4140, 0.0
  %4210 = vadd.xlane.f32.xlu0 %v4209
  %v4211 = vpop.xlane.xlu0 %4210
  %v4212 = vsel %vm685, %v4142, 0.0
  %4213 = vadd.xlane.f32.xlu0 %v4212
  %v4214 = vpop.xlane.xlu0 %4213
  %v4215 = vsel %vm685, %v4144, 0.0
  %4216 = vadd.xlane.f32.xlu0 %v4215
  %v4217 = vpop.xlane.xlu0 %4216
  %v4218 = vsel %vm685, %v4146, 0.0
  %4219 = vadd.xlane.f32.xlu0 %v4218
  %v4220 = vpop.xlane.xlu0 %4219
  %v4221 = vsel %vm685, %v4148, 0.0
  %4222 = vadd.xlane.f32.xlu0 %v4221
  %v4223 = vpop.xlane.xlu0 %4222
  %v4224 = vsel %vm685, %v4150, 0.0
  %4225 = vadd.xlane.f32.xlu0 %v4224
  %v4226 = vpop.xlane.xlu0 %4225
  %v4227 = vsel %vm685, %v4152, 0.0
  %4228 = vadd.xlane.f32.xlu0 %v4227
  %v4229 = vpop.xlane.xlu0 %4228
  %v4230 = vsel %vm685, %v4154, 0.0
  %4231 = vadd.xlane.f32.xlu0 %v4230
  %v4232 = vpop.xlane.xlu0 %4231
  %v4233 = vsel %vm685, %v4156, 0.0
  %4234 = vadd.xlane.f32.xlu0 %v4233
  %v4235 = vpop.xlane.xlu0 %4234
  %v4236 = vsel %vm685, %v4158, 0.0
  %4237 = vadd.xlane.f32.xlu0 %v4236
  %v4238 = vpop.xlane.xlu0 %4237
  %v4239 = vsel %vm685, %v4160, 0.0
  %4240 = vadd.xlane.f32.xlu0 %v4239
  %v4241 = vpop.xlane.xlu0 %4240
  %v4242 = vsel %vm685, %v4162, 0.0
  %4243 = vadd.xlane.f32.xlu0 %v4242
  %v4244 = vpop.xlane.xlu0 %4243
  %v4245 = vsel %vm685, %v4164, 0.0
  %4246 = vadd.xlane.f32.xlu0 %v4245
  %v4247 = vpop.xlane.xlu0 %4246
  %v4248 = vsel %vm685, %v4166, 0.0
  %4249 = vadd.xlane.f32.xlu0 %v4248
  %v4250 = vpop.xlane.xlu0 %4249
  %v4251 = vsel %vm685, %v4168, 0.0
  %4252 = vadd.xlane.f32.xlu0 %v4251
  %v4253 = vpop.xlane.xlu0 %4252
  %v4254 = vsel %vm685, %v4170, 0.0
  %4255 = vadd.xlane.f32.xlu0 %v4254
  %v4256 = vpop.xlane.xlu0 %4255
  %v4257 = vsel %vm685, %v4172, 0.0
  %4258 = vadd.xlane.f32.xlu0 %v4257
  %v4259 = vpop.xlane.xlu0 %4258
  %v4260 = vsel %vm685, %v4174, 0.0
  %4261 = vadd.xlane.f32.xlu0 %v4260
  %v4262 = vpop.xlane.xlu0 %4261
  %v4263 = vsel %vm685, %v4176, 0.0
  %4264 = vadd.xlane.f32.xlu0 %v4263
  %v4265 = vpop.xlane.xlu0 %4264
  %v4266 = vsel %vm685, %v4178, 0.0
  %4267 = vadd.xlane.f32.xlu0 %v4266
  %v4268 = vpop.xlane.xlu0 %4267
  %v4269 = vsel %vm685, %v4180, 0.0
  %4270 = vadd.xlane.f32.xlu0 %v4269
  %v4271 = vpop.xlane.xlu0 %4270
  %v4272 = vsel %vm685, %v4182, 0.0
  %4273 = vadd.xlane.f32.xlu0 %v4272
  %v4274 = vpop.xlane.xlu0 %4273
  %v4275 = vsel %vm685, %v4184, 0.0
  %4276 = vadd.xlane.f32.xlu0 %v4275
  %v4277 = vpop.xlane.xlu0 %4276
  %v4278 = vsel %vm685, %v4186, 0.0
  %4279 = vadd.xlane.f32.xlu0 %v4278
  %v4280 = vpop.xlane.xlu0 %4279
  %v4281 = vsel %vm685, %v4188, 0.0
  %4282 = vadd.xlane.f32.xlu0 %v4281
  %v4283 = vpop.xlane.xlu0 %4282
  %v4284 = vsel %vm685, %v4190, 0.0
  %4285 = vadd.xlane.f32.xlu0 %v4284
  %v4286 = vpop.xlane.xlu0 %4285
  %v4296 = vsel %vm685, %v4128, 0
  %v4299 = vsel %vm685, %v4130, 0
  %v4302 = vsel %vm685, %v4132, 0
  %v4305 = vsel %vm685, %v4134, 0
  %v4308 = vsel %vm685, %v4136, 0
  %v4311 = vsel %vm685, %v4138, 0
  %v4314 = vsel %vm685, %v4140, 0
  %v4317 = vsel %vm685, %v4142, 0
  %4319 = vmatprep.subr.mxu0 0.0
  %4320 = vmatpush1.msra.mxu0 %v3340
  %4321 = vmatprep.subr.mxu0 0.0
  %4322 = vmatpush1.msra.mxu0 %v3342
  %4323 = vmatprep.subr.mxu0 0.0
  %4324 = vmatpush1.msra.mxu0 %v3344
  %4325 = vmatprep.subr.mxu0 0.0
  %4326 = vmatpush1.msra.mxu0 %v3346
  %4327 = vmatprep.subr.mxu0 0.0
  %4328 = vmatpush1.msra.mxu0 %v3348
  %4329 = vmatprep.subr.mxu0 0.0
  %4330 = vmatpush1.msra.mxu0 %v3350
  %4331 = vmatprep.subr.mxu0 0.0
  %4332 = vmatpush1.msra.mxu0 %v3352
  %4333 = vmatprep.subr.mxu0 0.0
  %4334 = vmatpush1.msra.mxu0 %v3354
  %4335 = vmatprep.subr.mxu0 0.0
  %4336 = vmatpush1.msra.mxu0 0.0
  %4337 = vmatprep.subr.mxu0 0.0
  %4338 = vmatpush1.msra.mxu0 0.0
  %4339 = vmatprep.subr.mxu0 0.0
  %4340 = vmatpush1.msra.mxu0 0.0
  %4341 = vmatprep.subr.mxu0 0.0
  %4342 = vmatpush1.msra.mxu0 0.0
  %4343 = vmatprep.subr.mxu0 0.0
  %4344 = vmatpush1.msra.mxu0 0.0
  %4345 = vmatprep.subr.mxu0 0.0
  %4346 = vmatpush1.msra.mxu0 0.0
  %4347 = vmatprep.subr.mxu0 0.0
  %4348 = vmatpush1.msra.mxu0 0.0
  %4349 = vmatprep.subr.mxu0 0.0
  %4350 = vmatpush1.msra.mxu0 0.0
  %4351 = vmatprep.subr.mxu0 0.0
  %4352 = vmatpush1.msra.mxu0 0.0
  %4353 = vmatprep.subr.mxu0 0.0
  %4354 = vmatpush1.msra.mxu0 0.0
  %4355 = vmatprep.subr.mxu0 0.0
  %4356 = vmatpush1.msra.mxu0 0.0
  %4357 = vmatprep.subr.mxu0 0.0
  %4358 = vmatpush1.msra.mxu0 0.0
  %4359 = vmatprep.subr.mxu0 0.0
  %4360 = vmatpush1.msra.mxu0 0.0
  %4361 = vmatprep.subr.mxu0 0.0
  %4362 = vmatpush1.msra.mxu0 0.0
  %4363 = vmatprep.subr.mxu0 0.0
  %4364 = vmatpush1.msra.mxu0 0.0
  %4365 = vmatprep.subr.mxu0 0.0
  %4366 = vmatpush1.msra.mxu0 0.0
  %4367 = vmatprep.subr.mxu0 0.0
  %4368 = vmatpush1.msra.mxu0 0.0
  %4369 = vmatprep.subr.mxu0 0.0
  %4370 = vmatpush1.msra.mxu0 0.0
  %4371 = vmatprep.subr.mxu0 0.0
  %4372 = vmatpush1.msra.mxu0 0.0
  %4373 = vmatprep.subr.mxu0 0.0
  %4374 = vmatpush1.msra.mxu0 0.0
  %4375 = vmatprep.subr.mxu0 0.0
  %4376 = vmatpush1.msra.mxu0 0.0
  %4377 = vmatprep.subr.mxu0 0.0
  %4378 = vmatpush1.msra.mxu0 0.0
  %4379 = vmatprep.subr.mxu0 0.0
  %4380 = vmatpush1.msra.mxu0 0.0
  %4381 = vmatprep.subr.mxu0 0.0
  %4382 = vmatpush1.msra.mxu0 0.0
  %4383 = vmatprep.mubr.f32.mxu0 0.0
  %4384 = vmatmul.mubr.f32.gmra.mrb[0].mxu0 %v4296
  %v4385 = vpop.f32.mrb[0].mxu0
  %v4386 = vadd.f32 0.0, %v4385
  %v4387 = vpop.f32.mrb[0].mxu0
  %4388 = vmatprep.mubr.f32.mxu0 0.0
  %4389 = vmatmul.mubr.f32.gmra.mrb[0].mxu0 %v4299
  %v4390 = vpop.f32.mrb[0].mxu0
  %v4391 = vadd.f32 0.0, %v4390
  %v4392 = vpop.f32.mrb[0].mxu0
  %4393 = vmatprep.mubr.f32.mxu0 0.0
  %4394 = vmatmul.mubr.f32.gmra.mrb[0].mxu0 %v4302
  %v4395 = vpop.f32.mrb[0].mxu0
  %v4396 = vadd.f32 0.0, %v4395
  %v4397 = vpop.f32.mrb[0].mxu0
  %4398 = vmatprep.mubr.f32.mxu0 0.0
  %4399 = vmatmul.mubr.f32.gmra.mrb[0].mxu0 %v4305
  %v4400 = vpop.f32.mrb[0].mxu0
  %v4401 = vadd.f32 0.0, %v4400
  %v4402 = vpop.f32.mrb[0].mxu0
  %4403 = vmatprep.mubr.f32.mxu0 0.0
  %4404 = vmatmul.mubr.f32.gmra.mrb[0].mxu0 %v4308
  %v4405 = vpop.f32.mrb[0].mxu0
  %v4406 = vadd.f32 0.0, %v4405
  %v4407 = vpop.f32.mrb[0].mxu0
  %4408 = vmatprep.mubr.f32.mxu0 0.0
  %4409 = vmatmul.mubr.f32.gmra.mrb[0].mxu0 %v4311
  %v4410 = vpop.f32.mrb[0].mxu0
  %v4411 = vadd.f32 0.0, %v4410
  %v4412 = vpop.f32.mrb[0].mxu0
  %4413 = vmatprep.mubr.f32.mxu0 0.0
  %4414 = vmatmul.mubr.f32.gmra.mrb[0].mxu0 %v4314
  %v4415 = vpop.f32.mrb[0].mxu0
  %v4416 = vadd.f32 0.0, %v4415
  %v4417 = vpop.f32.mrb[0].mxu0
  %4418 = vmatprep.mubr.f32.mxu0 0.0
  %4419 = vmatmul.mubr.f32.gmra.mrb[0].mxu0 %v4317
  %v4420 = vpop.f32.mrb[0].mxu0
  %v4421 = vadd.f32 0.0, %v4420
  %v4422 = vpop.f32.mrb[0].mxu0
  %4423 = vdwg.mxu0
  %v4433 = vsel %vm685, %v4144, 0
  %v4436 = vsel %vm685, %v4146, 0
  %v4439 = vsel %vm685, %v4148, 0
  %v4442 = vsel %vm685, %v4150, 0
  %v4445 = vsel %vm685, %v4152, 0
  %v4448 = vsel %vm685, %v4154, 0
  %v4451 = vsel %vm685, %v4156, 0
  %v4454 = vsel %vm685, %v4158, 0
  %4456 = vmatprep.subr.mxu0 0.0
  %4457 = vmatpush1.msra.mxu0 %v3509
  %4458 = vmatprep.subr.mxu0 0.0
  %4459 = vmatpush1.msra.mxu0 %v3511
  %4460 = vmatprep.subr.mxu0 0.0
  %4461 = vmatpush1.msra.mxu0 %v3513
  %4462 = vmatprep.subr.mxu0 0.0
  %4463 = vmatpush1.msra.mxu0 %v3515
  %4464 = vmatprep.subr.mxu0 0.0
  %4465 = vmatpush1.msra.mxu0 %v3517
  %4466 = vmatprep.subr.mxu0 0.0
  %4467 = vmatpush1.msra.mxu0 %v3519
  %4468 = vmatprep.subr.mxu0 0.0
  %4469 = vmatpush1.msra.mxu0 %v3521
  %4470 = vmatprep.subr.mxu0 0.0
  %4471 = vmatpush1.msra.mxu0 %v3523
  %4472 = vmatprep.subr.mxu0 0.0
  %4473 = vmatpush1.msra.mxu0 0.0
  %4474 = vmatprep.subr.mxu0 0.0
  %4475 = vmatpush1.msra.mxu0 0.0
  %4476 = vmatprep.subr.mxu0 0.0
  %4477 = vmatpush1.msra.mxu0 0.0
  %4478 = vmatprep.subr.mxu0 0.0
  %4479 = vmatpush1.msra.mxu0 0.0
  %4480 = vmatprep.subr.mxu0 0.0
  %4481 = vmatpush1.msra.mxu0 0.0
  %4482 = vmatprep.subr.mxu0 0.0
  %4483 = vmatpush1.msra.mxu0 0.0
  %4484 = vmatprep.subr.mxu0 0.0
  %4485 = vmatpush1.msra.mxu0 0.0
  %4486 = vmatprep.subr.mxu0 0.0
  %4487 = vmatpush1.msra.mxu0 0.0
  %4488 = vmatprep.subr.mxu0 0.0
  %4489 = vmatpush1.msra.mxu0 0.0
  %4490 = vmatprep.subr.mxu0 0.0
  %4491 = vmatpush1.msra.mxu0 0.0
  %4492 = vmatprep.subr.mxu0 0.0
  %4493 = vmatpush1.msra.mxu0 0.0
  %4494 = vmatprep.subr.mxu0 0.0
  %4495 = vmatpush1.msra.mxu0 0.0
  %4496 = vmatprep.subr.mxu0 0.0
  %4497 = vmatpush1.msra.mxu0 0.0
  %4498 = vmatprep.subr.mxu0 0.0
  %4499 = vmatpush1.msra.mxu0 0.0
  %4500 = vmatprep.subr.mxu0 0.0
  %4501 = vmatpush1.msra.mxu0 0.0
  %4502 = vmatprep.subr.mxu0 0.0
  %4503 = vmatpush1.msra.mxu0 0.0
  %4504 = vmatprep.subr.mxu0 0.0
  %4505 = vmatpush1.msra.mxu0 0.0
  %4506 = vmatprep.subr.mxu0 0.0
  %4507 = vmatpush1.msra.mxu0 0.0
  %4508 = vmatprep.subr.mxu0 0.0
  %4509 = vmatpush1.msra.mxu0 0.0
  %4510 = vmatprep.subr.mxu0 0.0
  %4511 = vmatpush1.msra.mxu0 0.0
  %4512 = vmatprep.subr.mxu0 0.0
  %4513 = vmatpush1.msra.mxu0 0.0
  %4514 = vmatprep.subr.mxu0 0.0
  %4515 = vmatpush1.msra.mxu0 0.0
  %4516 = vmatprep.subr.mxu0 0.0
  %4517 = vmatpush1.msra.mxu0 0.0
  %4518 = vmatprep.subr.mxu0 0.0
  %4519 = vmatpush1.msra.mxu0 0.0
  %4520 = vmatprep.mubr.f32.mxu0 0.0
  %4521 = vmatmul.mubr.f32.gmra.mrb[0].mxu0 %v4433
  %v4522 = vpop.f32.mrb[0].mxu0
  %v4523 = vadd.f32 0.0, %v4522
  %v4524 = vpop.f32.mrb[0].mxu0
  %4525 = vmatprep.mubr.f32.mxu0 0.0
  %4526 = vmatmul.mubr.f32.gmra.mrb[0].mxu0 %v4436
  %v4527 = vpop.f32.mrb[0].mxu0
  %v4528 = vadd.f32 0.0, %v4527
  %v4529 = vpop.f32.mrb[0].mxu0
  %4530 = vmatprep.mubr.f32.mxu0 0.0
  %4531 = vmatmul.mubr.f32.gmra.mrb[0].mxu0 %v4439
  %v4532 = vpop.f32.mrb[0].mxu0
  %v4533 = vadd.f32 0.0, %v4532
  %v4534 = vpop.f32.mrb[0].mxu0
  %4535 = vmatprep.mubr.f32.mxu0 0.0
  %4536 = vmatmul.mubr.f32.gmra.mrb[0].mxu0 %v4442
  %v4537 = vpop.f32.mrb[0].mxu0
  %v4538 = vadd.f32 0.0, %v4537
  %v4539 = vpop.f32.mrb[0].mxu0
  %4540 = vmatprep.mubr.f32.mxu0 0.0
  %4541 = vmatmul.mubr.f32.gmra.mrb[0].mxu0 %v4445
  %v4542 = vpop.f32.mrb[0].mxu0
  %v4543 = vadd.f32 0.0, %v4542
  %v4544 = vpop.f32.mrb[0].mxu0
  %4545 = vmatprep.mubr.f32.mxu0 0.0
  %4546 = vmatmul.mubr.f32.gmra.mrb[0].mxu0 %v4448
  %v4547 = vpop.f32.mrb[0].mxu0
  %v4548 = vadd.f32 0.0, %v4547
  %v4549 = vpop.f32.mrb[0].mxu0
  %4550 = vmatprep.mubr.f32.mxu0 0.0
  %4551 = vmatmul.mubr.f32.gmra.mrb[0].mxu0 %v4451
  %v4552 = vpop.f32.mrb[0].mxu0
  %v4553 = vadd.f32 0.0, %v4552
  %v4554 = vpop.f32.mrb[0].mxu0
  %4555 = vmatprep.mubr.f32.mxu0 0.0
  %4556 = vmatmul.mubr.f32.gmra.mrb[0].mxu0 %v4454
  %v4557 = vpop.f32.mrb[0].mxu0
  %v4558 = vadd.f32 0.0, %v4557
  %v4559 = vpop.f32.mrb[0].mxu0
  %4560 = vdwg.mxu0
  %v4570 = vsel %vm685, %v4160, 0
  %v4573 = vsel %vm685, %v4162, 0
  %v4576 = vsel %vm685, %v4164, 0
  %v4579 = vsel %vm685, %v4166, 0
  %v4582 = vsel %vm685, %v4168, 0
  %v4585 = vsel %vm685, %v4170, 0
  %v4588 = vsel %vm685, %v4172, 0
  %v4591 = vsel %vm685, %v4174, 0
  %4593 = vmatprep.subr.mxu0 0.0
  %4594 = vmatpush1.msra.mxu0 %v3678
  %4595 = vmatprep.subr.mxu0 0.0
  %4596 = vmatpush1.msra.mxu0 %v3680
  %4597 = vmatprep.subr.mxu0 0.0
  %4598 = vmatpush1.msra.mxu0 %v3682
  %4599 = vmatprep.subr.mxu0 0.0
  %4600 = vmatpush1.msra.mxu0 %v3684
  %4601 = vmatprep.subr.mxu0 0.0
  %4602 = vmatpush1.msra.mxu0 %v3686
  %4603 = vmatprep.subr.mxu0 0.0
  %4604 = vmatpush1.msra.mxu0 %v3688
  %4605 = vmatprep.subr.mxu0 0.0
  %4606 = vmatpush1.msra.mxu0 %v3690
  %4607 = vmatprep.subr.mxu0 0.0
  %4608 = vmatpush1.msra.mxu0 %v3692
  %4609 = vmatprep.subr.mxu0 0.0
  %4610 = vmatpush1.msra.mxu0 0.0
  %4611 = vmatprep.subr.mxu0 0.0
  %4612 = vmatpush1.msra.mxu0 0.0
  %4613 = vmatprep.subr.mxu0 0.0
  %4614 = vmatpush1.msra.mxu0 0.0
  %4615 = vmatprep.subr.mxu0 0.0
  %4616 = vmatpush1.msra.mxu0 0.0
  %4617 = vmatprep.subr.mxu0 0.0
  %4618 = vmatpush1.msra.mxu0 0.0
  %4619 = vmatprep.subr.mxu0 0.0
  %4620 = vmatpush1.msra.mxu0 0.0
  %4621 = vmatprep.subr.mxu0 0.0
  %4622 = vmatpush1.msra.mxu0 0.0
  %4623 = vmatprep.subr.mxu0 0.0
  %4624 = vmatpush1.msra.mxu0 0.0
  %4625 = vmatprep.subr.mxu0 0.0
  %4626 = vmatpush1.msra.mxu0 0.0
  %4627 = vmatprep.subr.mxu0 0.0
  %4628 = vmatpush1.msra.mxu0 0.0
  %4629 = vmatprep.subr.mxu0 0.0
  %4630 = vmatpush1.msra.mxu0 0.0
  %4631 = vmatprep.subr.mxu0 0.0
  %4632 = vmatpush1.msra.mxu0 0.0
  %4633 = vmatprep.subr.mxu0 0.0
  %4634 = vmatpush1.msra.mxu0 0.0
  %4635 = vmatprep.subr.mxu0 0.0
  %4636 = vmatpush1.msra.mxu0 0.0
  %4637 = vmatprep.subr.mxu0 0.0
  %4638 = vmatpush1.msra.mxu0 0.0
  %4639 = vmatprep.subr.mxu0 0.0
  %4640 = vmatpush1.msra.mxu0 0.0
  %4641 = vmatprep.subr.mxu0 0.0
  %4642 = vmatpush1.msra.mxu0 0.0
  %4643 = vmatprep.subr.mxu0 0.0
  %4644 = vmatpush1.msra.mxu0 0.0
  %4645 = vmatprep.subr.mxu0 0.0
  %4646 = vmatpush1.msra.mxu0 0.0
  %4647 = vmatprep.subr.mxu0 0.0
  %4648 = vmatpush1.msra.mxu0 0.0
  %4649 = vmatprep.subr.mxu0 0.0
  %4650 = vmatpush1.msra.mxu0 0.0
  %4651 = vmatprep.subr.mxu0 0.0
  %4652 = vmatpush1.msra.mxu0 0.0
  %4653 = vmatprep.subr.mxu0 0.0
  %4654 = vmatpush1.msra.mxu0 0.0
  %4655 = vmatprep.subr.mxu0 0.0
  %4656 = vmatpush1.msra.mxu0 0.0
  %4657 = vmatprep.mubr.f32.mxu0 0.0
  %4658 = vmatmul.mubr.f32.gmra.mrb[0].mxu0 %v4570
  %v4659 = vpop.f32.mrb[0].mxu0
  %v4660 = vadd.f32 0.0, %v4659
  %v4661 = vpop.f32.mrb[0].mxu0
  %4662 = vmatprep.mubr.f32.mxu0 0.0
  %4663 = vmatmul.mubr.f32.gmra.mrb[0].mxu0 %v4573
  %v4664 = vpop.f32.mrb[0].mxu0
  %v4665 = vadd.f32 0.0, %v4664
  %v4666 = vpop.f32.mrb[0].mxu0
  %4667 = vmatprep.mubr.f32.mxu0 0.0
  %4668 = vmatmul.mubr.f32.gmra.mrb[0].mxu0 %v4576
  %v4669 = vpop.f32.mrb[0].mxu0
  %v4670 = vadd.f32 0.0, %v4669
  %v4671 = vpop.f32.mrb[0].mxu0
  %4672 = vmatprep.mubr.f32.mxu0 0.0
  %4673 = vmatmul.mubr.f32.gmra.mrb[0].mxu0 %v4579
  %v4674 = vpop.f32.mrb[0].mxu0
  %v4675 = vadd.f32 0.0, %v4674
  %v4676 = vpop.f32.mrb[0].mxu0
  %4677 = vmatprep.mubr.f32.mxu0 0.0
  %4678 = vmatmul.mubr.f32.gmra.mrb[0].mxu0 %v4582
  %v4679 = vpop.f32.mrb[0].mxu0
  %v4680 = vadd.f32 0.0, %v4679
  %v4681 = vpop.f32.mrb[0].mxu0
  %4682 = vmatprep.mubr.f32.mxu0 0.0
  %4683 = vmatmul.mubr.f32.gmra.mrb[0].mxu0 %v4585
  %v4684 = vpop.f32.mrb[0].mxu0
  %v4685 = vadd.f32 0.0, %v4684
  %v4686 = vpop.f32.mrb[0].mxu0
  %4687 = vmatprep.mubr.f32.mxu0 0.0
  %4688 = vmatmul.mubr.f32.gmra.mrb[0].mxu0 %v4588
  %v4689 = vpop.f32.mrb[0].mxu0
  %v4690 = vadd.f32 0.0, %v4689
  %v4691 = vpop.f32.mrb[0].mxu0
  %4692 = vmatprep.mubr.f32.mxu0 0.0
  %4693 = vmatmul.mubr.f32.gmra.mrb[0].mxu0 %v4591
  %v4694 = vpop.f32.mrb[0].mxu0
  %v4695 = vadd.f32 0.0, %v4694
  %v4696 = vpop.f32.mrb[0].mxu0
  %4697 = vdwg.mxu0
  %v4707 = vsel %vm685, %v4176, 0
  %v4710 = vsel %vm685, %v4178, 0
  %v4713 = vsel %vm685, %v4180, 0
  %v4716 = vsel %vm685, %v4182, 0
  %v4719 = vsel %vm685, %v4184, 0
  %v4722 = vsel %vm685, %v4186, 0
  %v4725 = vsel %vm685, %v4188, 0
  %v4728 = vsel %vm685, %v4190, 0
  %4730 = vmatprep.subr.mxu0 0.0
  %4731 = vmatpush1.msra.mxu0 %v3847
  %4732 = vmatprep.subr.mxu0 0.0
  %4733 = vmatpush1.msra.mxu0 %v3849
  %4734 = vmatprep.subr.mxu0 0.0
  %4735 = vmatpush1.msra.mxu0 %v3851
  %4736 = vmatprep.subr.mxu0 0.0
  %4737 = vmatpush1.msra.mxu0 %v3853
  %4738 = vmatprep.subr.mxu0 0.0
  %4739 = vmatpush1.msra.mxu0 %v3855
  %4740 = vmatprep.subr.mxu0 0.0
  %4741 = vmatpush1.msra.mxu0 %v3857
  %4742 = vmatprep.subr.mxu0 0.0
  %4743 = vmatpush1.msra.mxu0 %v3859
  %4744 = vmatprep.subr.mxu0 0.0
  %4745 = vmatpush1.msra.mxu0 %v3861
  %4746 = vmatprep.subr.mxu0 0.0
  %4747 = vmatpush1.msra.mxu0 0.0
  %4748 = vmatprep.subr.mxu0 0.0
  %4749 = vmatpush1.msra.mxu0 0.0
  %4750 = vmatprep.subr.mxu0 0.0
  %4751 = vmatpush1.msra.mxu0 0.0
  %4752 = vmatprep.subr.mxu0 0.0
  %4753 = vmatpush1.msra.mxu0 0.0
  %4754 = vmatprep.subr.mxu0 0.0
  %4755 = vmatpush1.msra.mxu0 0.0
  %4756 = vmatprep.subr.mxu0 0.0
  %4757 = vmatpush1.msra.mxu0 0.0
  %4758 = vmatprep.subr.mxu0 0.0
  %4759 = vmatpush1.msra.mxu0 0.0
  %4760 = vmatprep.subr.mxu0 0.0
  %4761 = vmatpush1.msra.mxu0 0.0
  %4762 = vmatprep.subr.mxu0 0.0
  %4763 = vmatpush1.msra.mxu0 0.0
  %4764 = vmatprep.subr.mxu0 0.0
  %4765 = vmatpush1.msra.mxu0 0.0
  %4766 = vmatprep.subr.mxu0 0.0
  %4767 = vmatpush1.msra.mxu0 0.0
  %4768 = vmatprep.subr.mxu0 0.0
  %4769 = vmatpush1.msra.mxu0 0.0
  %4770 = vmatprep.subr.mxu0 0.0
  %4771 = vmatpush1.msra.mxu0 0.0
  %4772 = vmatprep.subr.mxu0 0.0
  %4773 = vmatpush1.msra.mxu0 0.0
  %4774 = vmatprep.subr.mxu0 0.0
  %4775 = vmatpush1.msra.mxu0 0.0
  %4776 = vmatprep.subr.mxu0 0.0
  %4777 = vmatpush1.msra.mxu0 0.0
  %4778 = vmatprep.subr.mxu0 0.0
  %4779 = vmatpush1.msra.mxu0 0.0
  %4780 = vmatprep.subr.mxu0 0.0
  %4781 = vmatpush1.msra.mxu0 0.0
  %4782 = vmatprep.subr.mxu0 0.0
  %4783 = vmatpush1.msra.mxu0 0.0
  %4784 = vmatprep.subr.mxu0 0.0
  %4785 = vmatpush1.msra.mxu0 0.0
  %4786 = vmatprep.subr.mxu0 0.0
  %4787 = vmatpush1.msra.mxu0 0.0
  %4788 = vmatprep.subr.mxu0 0.0
  %4789 = vmatpush1.msra.mxu0 0.0
  %4790 = vmatprep.subr.mxu0 0.0
  %4791 = vmatpush1.msra.mxu0 0.0
  %4792 = vmatprep.subr.mxu0 0.0
  %4793 = vmatpush1.msra.mxu0 0.0
  %4794 = vmatprep.mubr.f32.mxu0 0.0
  %4795 = vmatmul.mubr.f32.gmra.mrb[0].mxu0 %v4707
  %v4796 = vpop.f32.mrb[0].mxu0
  %v4797 = vadd.f32 0.0, %v4796
  %v4798 = vpop.f32.mrb[0].mxu0
  %4799 = vmatprep.mubr.f32.mxu0 0.0
  %4800 = vmatmul.mubr.f32.gmra.mrb[0].mxu0 %v4710
  %v4801 = vpop.f32.mrb[0].mxu0
  %v4802 = vadd.f32 0.0, %v4801
  %v4803 = vpop.f32.mrb[0].mxu0
  %4804 = vmatprep.mubr.f32.mxu0 0.0
  %4805 = vmatmul.mubr.f32.gmra.mrb[0].mxu0 %v4713
  %v4806 = vpop.f32.mrb[0].mxu0
  %v4807 = vadd.f32 0.0, %v4806
  %v4808 = vpop.f32.mrb[0].mxu0
  %4809 = vmatprep.mubr.f32.mxu0 0.0
  %4810 = vmatmul.mubr.f32.gmra.mrb[0].mxu0 %v4716
  %v4811 = vpop.f32.mrb[0].mxu0
  %v4812 = vadd.f32 0.0, %v4811
  %v4813 = vpop.f32.mrb[0].mxu0
  %4814 = vmatprep.mubr.f32.mxu0 0.0
  %4815 = vmatmul.mubr.f32.gmra.mrb[0].mxu0 %v4719
  %v4816 = vpop.f32.mrb[0].mxu0
  %v4817 = vadd.f32 0.0, %v4816
  %v4818 = vpop.f32.mrb[0].mxu0
  %4819 = vmatprep.mubr.f32.mxu0 0.0
  %4820 = vmatmul.mubr.f32.gmra.mrb[0].mxu0 %v4722
  %v4821 = vpop.f32.mrb[0].mxu0
  %v4822 = vadd.f32 0.0, %v4821
  %v4823 = vpop.f32.mrb[0].mxu0
  %4824 = vmatprep.mubr.f32.mxu0 0.0
  %4825 = vmatmul.mubr.f32.gmra.mrb[0].mxu0 %v4725
  %v4826 = vpop.f32.mrb[0].mxu0
  %v4827 = vadd.f32 0.0, %v4826
  %v4828 = vpop.f32.mrb[0].mxu0
  %4829 = vmatprep.mubr.f32.mxu0 0.0
  %4830 = vmatmul.mubr.f32.gmra.mrb[0].mxu0 %v4728
  %v4831 = vpop.f32.mrb[0].mxu0
  %v4832 = vadd.f32 0.0, %v4831
  %v4833 = vpop.f32.mrb[0].mxu0
  %4834 = vdwg.mxu0
  %v4835 = vrcp.pop %v4193
  %v4836 = vrcp.pop %v4196
  %v4837 = vrcp.pop %v4199
  %v4838 = vrcp.pop %v4202
  %v4839 = vrcp.pop %v4205
  %v4840 = vrcp.pop %v4208
  %v4841 = vrcp.pop %v4211
  %v4842 = vrcp.pop %v4214
  %v4843 = vrcp.pop %v4217
  %v4844 = vrcp.pop %v4220
  %v4845 = vrcp.pop %v4223
  %v4846 = vrcp.pop %v4226
  %v4847 = vrcp.pop %v4229
  %v4848 = vrcp.pop %v4232
  %v4849 = vrcp.pop %v4235
  %v4850 = vrcp.pop %v4238
  %v4851 = vrcp.pop %v4241
  %v4852 = vrcp.pop %v4244
  %v4853 = vrcp.pop %v4247
  %v4854 = vrcp.pop %v4250
  %v4855 = vrcp.pop %v4253
  %v4856 = vrcp.pop %v4256
  %v4857 = vrcp.pop %v4259
  %v4858 = vrcp.pop %v4262
  %v4859 = vrcp.pop %v4265
  %v4860 = vrcp.pop %v4268
  %v4861 = vrcp.pop %v4271
  %v4862 = vrcp.pop %v4274
  %v4863 = vrcp.pop %v4277
  %v4864 = vrcp.pop %v4280
  %v4865 = vrcp.pop %v4283
  %v4866 = vrcp.pop %v4286
  %v4867 = vmul.f32 %v4386, %v4835
  %v4868 = vmul.f32 %v4391, %v4836
  %v4869 = vmul.f32 %v4396, %v4837
  %v4870 = vmul.f32 %v4401, %v4838
  %v4871 = vmul.f32 %v4406, %v4839
  %v4872 = vmul.f32 %v4411, %v4840
  %v4873 = vmul.f32 %v4416, %v4841
  %v4874 = vmul.f32 %v4421, %v4842
  %v4875 = vmul.f32 %v4523, %v4843
  %v4876 = vmul.f32 %v4528, %v4844
  %v4877 = vmul.f32 %v4533, %v4845
  %v4878 = vmul.f32 %v4538, %v4846
  %v4879 = vmul.f32 %v4543, %v4847
  %v4880 = vmul.f32 %v4548, %v4848
  %v4881 = vmul.f32 %v4553, %v4849
  %v4882 = vmul.f32 %v4558, %v4850
  %v4883 = vmul.f32 %v4660, %v4851
  %v4884 = vmul.f32 %v4665, %v4852
  %v4885 = vmul.f32 %v4670, %v4853
  %v4886 = vmul.f32 %v4675, %v4854
  %v4887 = vmul.f32 %v4680, %v4855
  %v4888 = vmul.f32 %v4685, %v4856
  %v4889 = vmul.f32 %v4690, %v4857
  %v4890 = vmul.f32 %v4695, %v4858
  %v4891 = vmul.f32 %v4797, %v4859
  %v4892 = vmul.f32 %v4802, %v4860
  %v4893 = vmul.f32 %v4807, %v4861
  %v4894 = vmul.f32 %v4812, %v4862
  %v4895 = vmul.f32 %v4817, %v4863
  %v4896 = vmul.f32 %v4822, %v4864
  %v4897 = vmul.f32 %v4827, %v4865
  %v4898 = vmul.f32 %v4832, %v4866
  %4931 = vrot.lane.b32.xlu0 %v4867, 16
  %v4932 = vpop.permute.xlu0 %4931
  %4933 = vrot.lane.b32.xlu0 %v4868, 16
  %v4934 = vpop.permute.xlu0 %4933
  %4935 = vrot.lane.b32.xlu0 %v4869, 16
  %v4936 = vpop.permute.xlu0 %4935
  %4937 = vrot.lane.b32.xlu0 %v4870, 16
  %v4938 = vpop.permute.xlu0 %4937
  %4939 = vrot.lane.b32.xlu0 %v4871, 16
  %v4940 = vpop.permute.xlu0 %4939
  %4941 = vrot.lane.b32.xlu0 %v4872, 16
  %v4942 = vpop.permute.xlu0 %4941
  %4943 = vrot.lane.b32.xlu0 %v4873, 16
  %v4944 = vpop.permute.xlu0 %4943
  %4945 = vrot.lane.b32.xlu0 %v4874, 16
  %v4946 = vpop.permute.xlu0 %4945
  %4947 = vrot.lane.b32.xlu0 %v4875, 16
  %v4948 = vpop.permute.xlu0 %4947
  %4949 = vrot.lane.b32.xlu0 %v4876, 16
  %v4950 = vpop.permute.xlu0 %4949
  %4951 = vrot.lane.b32.xlu0 %v4877, 16
  %v4952 = vpop.permute.xlu0 %4951
  %4953 = vrot.lane.b32.xlu0 %v4878, 16
  %v4954 = vpop.permute.xlu0 %4953
  %4955 = vrot.lane.b32.xlu0 %v4879, 16
  %v4956 = vpop.permute.xlu0 %4955
  %4957 = vrot.lane.b32.xlu0 %v4880, 16
  %v4958 = vpop.permute.xlu0 %4957
  %4959 = vrot.lane.b32.xlu0 %v4881, 16
  %v4960 = vpop.permute.xlu0 %4959
  %4961 = vrot.lane.b32.xlu0 %v4882, 16
  %v4962 = vpop.permute.xlu0 %4961
  %4963 = vrot.lane.b32.xlu0 %v4883, 16
  %v4964 = vpop.permute.xlu0 %4963
  %4965 = vrot.lane.b32.xlu0 %v4884, 16
  %v4966 = vpop.permute.xlu0 %4965
  %4967 = vrot.lane.b32.xlu0 %v4885, 16
  %v4968 = vpop.permute.xlu0 %4967
  %4969 = vrot.lane.b32.xlu0 %v4886, 16
  %v4970 = vpop.permute.xlu0 %4969
  %4971 = vrot.lane.b32.xlu0 %v4887, 16
  %v4972 = vpop.permute.xlu0 %4971
  %4973 = vrot.lane.b32.xlu0 %v4888, 16
  %v4974 = vpop.permute.xlu0 %4973
  %4975 = vrot.lane.b32.xlu0 %v4889, 16
  %v4976 = vpop.permute.xlu0 %4975
  %4977 = vrot.lane.b32.xlu0 %v4890, 16
  %v4978 = vpop.permute.xlu0 %4977
  %4979 = vrot.lane.b32.xlu0 %v4891, 16
  %v4980 = vpop.permute.xlu0 %4979
  %4981 = vrot.lane.b32.xlu0 %v4892, 16
  %v4982 = vpop.permute.xlu0 %4981
  %4983 = vrot.lane.b32.xlu0 %v4893, 16
  %v4984 = vpop.permute.xlu0 %4983
  %4985 = vrot.lane.b32.xlu0 %v4894, 16
  %v4986 = vpop.permute.xlu0 %4985
  %4987 = vrot.lane.b32.xlu0 %v4895, 16
  %v4988 = vpop.permute.xlu0 %4987
  %4989 = vrot.lane.b32.xlu0 %v4896, 16
  %v4990 = vpop.permute.xlu0 %4989
  %4991 = vrot.lane.b32.xlu0 %v4897, 16
  %v4992 = vpop.permute.xlu0 %4991
  %4993 = vrot.lane.b32.xlu0 %v4898, 16
  %v4994 = vpop.permute.xlu0 %4993
  %vm5027 = vcmask 195712
  %5028 = vst.msk [vmem:[%s1] sm:$0xff] %vm5027, %v4932
  %5029 = vst.msk [vmem:[%s1 + $0x8] sm:$0xff] %vm5027, %v4934
  %5030 = vst.msk [vmem:[%s1 + $0x10] sm:$0xff] %vm5027, %v4936
  %5031 = vst.msk [vmem:[%s1 + $0x18] sm:$0xff] %vm5027, %v4938
  %5032 = vst.msk [vmem:[%s1 + $0x20] sm:$0xff] %vm5027, %v4940
  %5033 = vst.msk [vmem:[%s1 + $0x28] sm:$0xff] %vm5027, %v4942
  %5034 = vst.msk [vmem:[%s1 + $0x30] sm:$0xff] %vm5027, %v4944
  %5035 = vst.msk [vmem:[%s1 + $0x38] sm:$0xff] %vm5027, %v4946
  %5036 = vst.msk [vmem:[%s1 + $0x40] sm:$0xff] %vm5027, %v4948
  %5037 = vst.msk [vmem:[%s1 + $0x48] sm:$0xff] %vm5027, %v4950
  %5038 = vst.msk [vmem:[%s1 + $0x50] sm:$0xff] %vm5027, %v4952
  %5039 = vst.msk [vmem:[%s1 + $0x58] sm:$0xff] %vm5027, %v4954
  %5040 = vst.msk [vmem:[%s1 + $0x60] sm:$0xff] %vm5027, %v4956
  %5041 = vst.msk [vmem:[%s1 + $0x68] sm:$0xff] %vm5027, %v4958
  %5042 = vst.msk [vmem:[%s1 + $0x70] sm:$0xff] %vm5027, %v4960
  %5043 = vst.msk [vmem:[%s1 + $0x78] sm:$0xff] %vm5027, %v4962
  %5044 = vst.msk [vmem:[%s1 + $0x80] sm:$0xff] %vm5027, %v4964
  %5045 = vst.msk [vmem:[%s1 + $0x88] sm:$0xff] %vm5027, %v4966
  %5046 = vst.msk [vmem:[%s1 + $0x90] sm:$0xff] %vm5027, %v4968
  %5047 = vst.msk [vmem:[%s1 + $0x98] sm:$0xff] %vm5027, %v4970
  %5048 = vst.msk [vmem:[%s1 + $0xa0] sm:$0xff] %vm5027, %v4972
  %5049 = vst.msk [vmem:[%s1 + $0xa8] sm:$0xff] %vm5027, %v4974
  %5050 = vst.msk [vmem:[%s1 + $0xb0] sm:$0xff] %vm5027, %v4976
  %5051 = vst.msk [vmem:[%s1 + $0xb8] sm:$0xff] %vm5027, %v4978
  %5052 = vst.msk [vmem:[%s1 + $0xc0] sm:$0xff] %vm5027, %v4980
  %5053 = vst.msk [vmem:[%s1 + $0xc8] sm:$0xff] %vm5027, %v4982
  %5054 = vst.msk [vmem:[%s1 + $0xd0] sm:$0xff] %vm5027, %v4984
  %5055 = vst.msk [vmem:[%s1 + $0xd8] sm:$0xff] %vm5027, %v4986
  %5056 = vst.msk [vmem:[%s1 + $0xe0] sm:$0xff] %vm5027, %v4988
  %5057 = vst.msk [vmem:[%s1 + $0xe8] sm:$0xff] %vm5027, %v4990
  %5058 = vst.msk [vmem:[%s1 + $0xf0] sm:$0xff] %vm5027, %v4992
  %5059 = vst.msk [vmem:[%s1 + $0xf8] sm:$0xff] %vm5027, %v4994
  %5060 = vrot.lane.b32.xlu0 %v40, 104
  %v5061 = vpop.permute.xlu0 %5060
  %5062 = vrot.lane.b32.xlu0 %v41, 104
  %v5063 = vpop.permute.xlu0 %5062
  %5064 = vrot.lane.b32.xlu0 %v42, 104
  %v5065 = vpop.permute.xlu0 %5064
  %5066 = vrot.lane.b32.xlu0 %v43, 104
  %v5067 = vpop.permute.xlu0 %5066
  %5068 = vrot.lane.b32.xlu0 %v44, 104
  %v5069 = vpop.permute.xlu0 %5068
  %5070 = vrot.lane.b32.xlu0 %v45, 104
  %v5071 = vpop.permute.xlu0 %5070
  %5072 = vrot.lane.b32.xlu0 %v46, 104
  %v5073 = vpop.permute.xlu0 %5072
  %5074 = vrot.lane.b32.xlu0 %v47, 104
  %v5075 = vpop.permute.xlu0 %5074
  %5076 = vrot.lane.b32.xlu0 %v8, 104
  %v5077 = vpop.permute.xlu0 %5076
  %5078 = vrot.lane.b32.xlu0 %v9, 104
  %v5079 = vpop.permute.xlu0 %5078
  %5080 = vrot.lane.b32.xlu0 %v10, 104
  %v5081 = vpop.permute.xlu0 %5080
  %5082 = vrot.lane.b32.xlu0 %v11, 104
  %v5083 = vpop.permute.xlu0 %5082
  %5084 = vrot.lane.b32.xlu0 %v12, 104
  %v5085 = vpop.permute.xlu0 %5084
  %5086 = vrot.lane.b32.xlu0 %v13, 104
  %v5087 = vpop.permute.xlu0 %5086
  %5088 = vrot.lane.b32.xlu0 %v14, 104
  %v5089 = vpop.permute.xlu0 %5088
  %5090 = vrot.lane.b32.xlu0 %v15, 104
  %v5091 = vpop.permute.xlu0 %5090
  %v5092 = vsel %vm72, %v5061, 0
  %v5094 = vsel %vm72, %v5063, 0
  %v5096 = vsel %vm72, %v5065, 0
  %v5098 = vsel %vm72, %v5067, 0
  %v5100 = vsel %vm72, %v5069, 0
  %v5102 = vsel %vm72, %v5071, 0
  %v5104 = vsel %vm72, %v5073, 0
  %v5106 = vsel %vm72, %v5075, 0
  %v5108 = vsel %vm72, %v5077, 0
  %v5110 = vsel %vm72, %v5079, 0
  %v5112 = vsel %vm72, %v5081, 0
  %v5114 = vsel %vm72, %v5083, 0
  %v5116 = vsel %vm72, %v5085, 0
  %v5118 = vsel %vm72, %v5087, 0
  %v5120 = vsel %vm72, %v5089, 0
  %v5122 = vsel %vm72, %v5091, 0
  %5124 = vmatprep.subr.mxu0 0.0
  %5125 = vmatpush1.xpose.msra.mxu0 %v5108
  %5126 = vmatprep.subr.mxu0 0.0
  %5127 = vmatpush1.xpose.msra.mxu0 %v5110
  %5128 = vmatprep.subr.mxu0 0.0
  %5129 = vmatpush1.xpose.msra.mxu0 %v5112
  %5130 = vmatprep.subr.mxu0 0.0
  %5131 = vmatpush1.xpose.msra.mxu0 %v5114
  %5132 = vmatprep.subr.mxu0 0.0
  %5133 = vmatpush1.xpose.msra.mxu0 %v5116
  %5134 = vmatprep.subr.mxu0 0.0
  %5135 = vmatpush1.xpose.msra.mxu0 %v5118
  %5136 = vmatprep.subr.mxu0 0.0
  %5137 = vmatpush1.xpose.msra.mxu0 %v5120
  %5138 = vmatprep.subr.mxu0 0.0
  %5139 = vmatpush1.xpose.msra.mxu0 %v5122
  %5140 = vmatprep.subr.mxu0 0.0
  %5141 = vmatpush1.xpose.msra.mxu0 0.0
  %5142 = vmatprep.subr.mxu0 0.0
  %5143 = vmatpush1.xpose.msra.mxu0 0.0
  %5144 = vmatprep.subr.mxu0 0.0
  %5145 = vmatpush1.xpose.msra.mxu0 0.0
  %5146 = vmatprep.subr.mxu0 0.0
  %5147 = vmatpush1.xpose.msra.mxu0 0.0
  %5148 = vmatprep.subr.mxu0 0.0
  %5149 = vmatpush1.xpose.msra.mxu0 0.0
  %5150 = vmatprep.subr.mxu0 0.0
  %5151 = vmatpush1.xpose.msra.mxu0 0.0
  %5152 = vmatprep.subr.mxu0 0.0
  %5153 = vmatpush1.xpose.msra.mxu0 0.0
  %5154 = vmatprep.subr.mxu0 0.0
  %5155 = vmatpush1.xpose.msra.mxu0 0.0
  %5156 = vmatprep.subr.mxu0 0.0
  %5157 = vmatpush1.xpose.msra.mxu0 0.0
  %5158 = vmatprep.subr.mxu0 0.0
  %5159 = vmatpush1.xpose.msra.mxu0 0.0
  %5160 = vmatprep.subr.mxu0 0.0
  %5161 = vmatpush1.xpose.msra.mxu0 0.0
  %5162 = vmatprep.subr.mxu0 0.0
  %5163 = vmatpush1.xpose.msra.mxu0 0.0
  %5164 = vmatprep.subr.mxu0 0.0
  %5165 = vmatpush1.xpose.msra.mxu0 0.0
  %5166 = vmatprep.subr.mxu0 0.0
  %5167 = vmatpush1.xpose.msra.mxu0 0.0
  %5168 = vmatprep.subr.mxu0 0.0
  %5169 = vmatpush1.xpose.msra.mxu0 0.0
  %5170 = vmatprep.subr.mxu0 0.0
  %5171 = vmatpush1.xpose.msra.mxu0 0.0
  %5172 = vmatprep.subr.mxu0 0.0
  %5173 = vmatpush1.xpose.msra.mxu0 0.0
  %5174 = vmatprep.subr.mxu0 0.0
  %5175 = vmatpush1.xpose.msra.mxu0 0.0
  %5176 = vmatprep.subr.mxu0 0.0
  %5177 = vmatpush1.xpose.msra.mxu0 0.0
  %5178 = vmatprep.subr.mxu0 0.0
  %5179 = vmatpush1.xpose.msra.mxu0 0.0
  %5180 = vmatprep.subr.mxu0 0.0
  %5181 = vmatpush1.xpose.msra.mxu0 0.0
  %5182 = vmatprep.subr.mxu0 0.0
  %5183 = vmatpush1.xpose.msra.mxu0 0.0
  %5184 = vmatprep.subr.mxu0 0.0
  %5185 = vmatpush1.xpose.msra.mxu0 0.0
  %5186 = vmatprep.subr.mxu0 0.0
  %5187 = vmatpush1.xpose.msra.mxu0 0.0
  %5188 = vmatprep.mubr.f32.mxu0 0.0
  %5189 = vmatmul.mubr.f32.gmra.mrb[0].mxu0 %v5092
  %v5190 = vpop.f32.mrb[0].mxu0
  %v5191 = vadd.f32 0.0, %v5190
  %v5192 = vpop.f32.mrb[0].mxu0
  %5193 = vmatprep.mubr.f32.mxu0 0.0
  %5194 = vmatmul.mubr.f32.gmra.mrb[0].mxu0 %v5094
  %v5195 = vpop.f32.mrb[0].mxu0
  %v5196 = vadd.f32 0.0, %v5195
  %v5197 = vpop.f32.mrb[0].mxu0
  %5198 = vmatprep.mubr.f32.mxu0 0.0
  %5199 = vmatmul.mubr.f32.gmra.mrb[0].mxu0 %v5096
  %v5200 = vpop.f32.mrb[0].mxu0
  %v5201 = vadd.f32 0.0, %v5200
  %v5202 = vpop.f32.mrb[0].mxu0
  %5203 = vmatprep.mubr.f32.mxu0 0.0
  %5204 = vmatmul.mubr.f32.gmra.mrb[0].mxu0 %v5098
  %v5205 = vpop.f32.mrb[0].mxu0
  %v5206 = vadd.f32 0.0, %v5205
  %v5207 = vpop.f32.mrb[0].mxu0
  %5208 = vmatprep.mubr.f32.mxu0 0.0
  %5209 = vmatmul.mubr.f32.gmra.mrb[0].mxu0 %v5100
  %v5210 = vpop.f32.mrb[0].mxu0
  %v5211 = vadd.f32 0.0, %v5210
  %v5212 = vpop.f32.mrb[0].mxu0
  %5213 = vmatprep.mubr.f32.mxu0 0.0
  %5214 = vmatmul.mubr.f32.gmra.mrb[0].mxu0 %v5102
  %v5215 = vpop.f32.mrb[0].mxu0
  %v5216 = vadd.f32 0.0, %v5215
  %v5217 = vpop.f32.mrb[0].mxu0
  %5218 = vmatprep.mubr.f32.mxu0 0.0
  %5219 = vmatmul.mubr.f32.gmra.mrb[0].mxu0 %v5104
  %v5220 = vpop.f32.mrb[0].mxu0
  %v5221 = vadd.f32 0.0, %v5220
  %v5222 = vpop.f32.mrb[0].mxu0
  %5223 = vmatprep.mubr.f32.mxu0 0.0
  %5224 = vmatmul.mubr.f32.gmra.mrb[0].mxu0 %v5106
  %v5225 = vpop.f32.mrb[0].mxu0
  %v5226 = vadd.f32 0.0, %v5225
  %v5227 = vpop.f32.mrb[0].mxu0
  %5228 = vdwg.mxu0
  %5229 = vrot.lane.b32.xlu0 %v48, 104
  %v5230 = vpop.permute.xlu0 %5229
  %5231 = vrot.lane.b32.xlu0 %v49, 104
  %v5232 = vpop.permute.xlu0 %5231
  %5233 = vrot.lane.b32.xlu0 %v50, 104
  %v5234 = vpop.permute.xlu0 %5233
  %5235 = vrot.lane.b32.xlu0 %v51, 104
  %v5236 = vpop.permute.xlu0 %5235
  %5237 = vrot.lane.b32.xlu0 %v52, 104
  %v5238 = vpop.permute.xlu0 %5237
  %5239 = vrot.lane.b32.xlu0 %v53, 104
  %v5240 = vpop.permute.xlu0 %5239
  %5241 = vrot.lane.b32.xlu0 %v54, 104
  %v5242 = vpop.permute.xlu0 %5241
  %5243 = vrot.lane.b32.xlu0 %v55, 104
  %v5244 = vpop.permute.xlu0 %5243
  %5245 = vrot.lane.b32.xlu0 %v16, 104
  %v5246 = vpop.permute.xlu0 %5245
  %5247 = vrot.lane.b32.xlu0 %v17, 104
  %v5248 = vpop.permute.xlu0 %5247
  %5249 = vrot.lane.b32.xlu0 %v18, 104
  %v5250 = vpop.permute.xlu0 %5249
  %5251 = vrot.lane.b32.xlu0 %v19, 104
  %v5252 = vpop.permute.xlu0 %5251
  %5253 = vrot.lane.b32.xlu0 %v20, 104
  %v5254 = vpop.permute.xlu0 %5253
  %5255 = vrot.lane.b32.xlu0 %v21, 104
  %v5256 = vpop.permute.xlu0 %5255
  %5257 = vrot.lane.b32.xlu0 %v22, 104
  %v5258 = vpop.permute.xlu0 %5257
  %5259 = vrot.lane.b32.xlu0 %v23, 104
  %v5260 = vpop.permute.xlu0 %5259
  %v5261 = vsel %vm72, %v5230, 0
  %v5263 = vsel %vm72, %v5232, 0
  %v5265 = vsel %vm72, %v5234, 0
  %v5267 = vsel %vm72, %v5236, 0
  %v5269 = vsel %vm72, %v5238, 0
  %v5271 = vsel %vm72, %v5240, 0
  %v5273 = vsel %vm72, %v5242, 0
  %v5275 = vsel %vm72, %v5244, 0
  %v5277 = vsel %vm72, %v5246, 0
  %v5279 = vsel %vm72, %v5248, 0
  %v5281 = vsel %vm72, %v5250, 0
  %v5283 = vsel %vm72, %v5252, 0
  %v5285 = vsel %vm72, %v5254, 0
  %v5287 = vsel %vm72, %v5256, 0
  %v5289 = vsel %vm72, %v5258, 0
  %v5291 = vsel %vm72, %v5260, 0
  %5293 = vmatprep.subr.mxu0 0.0
  %5294 = vmatpush1.xpose.msra.mxu0 %v5277
  %5295 = vmatprep.subr.mxu0 0.0
  %5296 = vmatpush1.xpose.msra.mxu0 %v5279
  %5297 = vmatprep.subr.mxu0 0.0
  %5298 = vmatpush1.xpose.msra.mxu0 %v5281
  %5299 = vmatprep.subr.mxu0 0.0
  %5300 = vmatpush1.xpose.msra.mxu0 %v5283
  %5301 = vmatprep.subr.mxu0 0.0
  %5302 = vmatpush1.xpose.msra.mxu0 %v5285
  %5303 = vmatprep.subr.mxu0 0.0
  %5304 = vmatpush1.xpose.msra.mxu0 %v5287
  %5305 = vmatprep.subr.mxu0 0.0
  %5306 = vmatpush1.xpose.msra.mxu0 %v5289
  %5307 = vmatprep.subr.mxu0 0.0
  %5308 = vmatpush1.xpose.msra.mxu0 %v5291
  %5309 = vmatprep.subr.mxu0 0.0
  %5310 = vmatpush1.xpose.msra.mxu0 0.0
  %5311 = vmatprep.subr.mxu0 0.0
  %5312 = vmatpush1.xpose.msra.mxu0 0.0
  %5313 = vmatprep.subr.mxu0 0.0
  %5314 = vmatpush1.xpose.msra.mxu0 0.0
  %5315 = vmatprep.subr.mxu0 0.0
  %5316 = vmatpush1.xpose.msra.mxu0 0.0
  %5317 = vmatprep.subr.mxu0 0.0
  %5318 = vmatpush1.xpose.msra.mxu0 0.0
  %5319 = vmatprep.subr.mxu0 0.0
  %5320 = vmatpush1.xpose.msra.mxu0 0.0
  %5321 = vmatprep.subr.mxu0 0.0
  %5322 = vmatpush1.xpose.msra.mxu0 0.0
  %5323 = vmatprep.subr.mxu0 0.0
  %5324 = vmatpush1.xpose.msra.mxu0 0.0
  %5325 = vmatprep.subr.mxu0 0.0
  %5326 = vmatpush1.xpose.msra.mxu0 0.0
  %5327 = vmatprep.subr.mxu0 0.0
  %5328 = vmatpush1.xpose.msra.mxu0 0.0
  %5329 = vmatprep.subr.mxu0 0.0
  %5330 = vmatpush1.xpose.msra.mxu0 0.0
  %5331 = vmatprep.subr.mxu0 0.0
  %5332 = vmatpush1.xpose.msra.mxu0 0.0
  %5333 = vmatprep.subr.mxu0 0.0
  %5334 = vmatpush1.xpose.msra.mxu0 0.0
  %5335 = vmatprep.subr.mxu0 0.0
  %5336 = vmatpush1.xpose.msra.mxu0 0.0
  %5337 = vmatprep.subr.mxu0 0.0
  %5338 = vmatpush1.xpose.msra.mxu0 0.0
  %5339 = vmatprep.subr.mxu0 0.0
  %5340 = vmatpush1.xpose.msra.mxu0 0.0
  %5341 = vmatprep.subr.mxu0 0.0
  %5342 = vmatpush1.xpose.msra.mxu0 0.0
  %5343 = vmatprep.subr.mxu0 0.0
  %5344 = vmatpush1.xpose.msra.mxu0 0.0
  %5345 = vmatprep.subr.mxu0 0.0
  %5346 = vmatpush1.xpose.msra.mxu0 0.0
  %5347 = vmatprep.subr.mxu0 0.0
  %5348 = vmatpush1.xpose.msra.mxu0 0.0
  %5349 = vmatprep.subr.mxu0 0.0
  %5350 = vmatpush1.xpose.msra.mxu0 0.0
  %5351 = vmatprep.subr.mxu0 0.0
  %5352 = vmatpush1.xpose.msra.mxu0 0.0
  %5353 = vmatprep.subr.mxu0 0.0
  %5354 = vmatpush1.xpose.msra.mxu0 0.0
  %5355 = vmatprep.subr.mxu0 0.0
  %5356 = vmatpush1.xpose.msra.mxu0 0.0
  %5357 = vmatprep.mubr.f32.mxu0 0.0
  %5358 = vmatmul.mubr.f32.gmra.mrb[0].mxu0 %v5261
  %v5359 = vpop.f32.mrb[0].mxu0
  %v5360 = vadd.f32 0.0, %v5359
  %v5361 = vpop.f32.mrb[0].mxu0
  %5362 = vmatprep.mubr.f32.mxu0 0.0
  %5363 = vmatmul.mubr.f32.gmra.mrb[0].mxu0 %v5263
  %v5364 = vpop.f32.mrb[0].mxu0
  %v5365 = vadd.f32 0.0, %v5364
  %v5366 = vpop.f32.mrb[0].mxu0
  %5367 = vmatprep.mubr.f32.mxu0 0.0
  %5368 = vmatmul.mubr.f32.gmra.mrb[0].mxu0 %v5265
  %v5369 = vpop.f32.mrb[0].mxu0
  %v5370 = vadd.f32 0.0, %v5369
  %v5371 = vpop.f32.mrb[0].mxu0
  %5372 = vmatprep.mubr.f32.mxu0 0.0
  %5373 = vmatmul.mubr.f32.gmra.mrb[0].mxu0 %v5267
  %v5374 = vpop.f32.mrb[0].mxu0
  %v5375 = vadd.f32 0.0, %v5374
  %v5376 = vpop.f32.mrb[0].mxu0
  %5377 = vmatprep.mubr.f32.mxu0 0.0
  %5378 = vmatmul.mubr.f32.gmra.mrb[0].mxu0 %v5269
  %v5379 = vpop.f32.mrb[0].mxu0
  %v5380 = vadd.f32 0.0, %v5379
  %v5381 = vpop.f32.mrb[0].mxu0
  %5382 = vmatprep.mubr.f32.mxu0 0.0
  %5383 = vmatmul.mubr.f32.gmra.mrb[0].mxu0 %v5271
  %v5384 = vpop.f32.mrb[0].mxu0
  %v5385 = vadd.f32 0.0, %v5384
  %v5386 = vpop.f32.mrb[0].mxu0
  %5387 = vmatprep.mubr.f32.mxu0 0.0
  %5388 = vmatmul.mubr.f32.gmra.mrb[0].mxu0 %v5273
  %v5389 = vpop.f32.mrb[0].mxu0
  %v5390 = vadd.f32 0.0, %v5389
  %v5391 = vpop.f32.mrb[0].mxu0
  %5392 = vmatprep.mubr.f32.mxu0 0.0
  %5393 = vmatmul.mubr.f32.gmra.mrb[0].mxu0 %v5275
  %v5394 = vpop.f32.mrb[0].mxu0
  %v5395 = vadd.f32 0.0, %v5394
  %v5396 = vpop.f32.mrb[0].mxu0
  %5397 = vdwg.mxu0
  %5398 = vrot.lane.b32.xlu0 %v56, 104
  %v5399 = vpop.permute.xlu0 %5398
  %5400 = vrot.lane.b32.xlu0 %v57, 104
  %v5401 = vpop.permute.xlu0 %5400
  %5402 = vrot.lane.b32.xlu0 %v58, 104
  %v5403 = vpop.permute.xlu0 %5402
  %5404 = vrot.lane.b32.xlu0 %v59, 104
  %v5405 = vpop.permute.xlu0 %5404
  %5406 = vrot.lane.b32.xlu0 %v60, 104
  %v5407 = vpop.permute.xlu0 %5406
  %5408 = vrot.lane.b32.xlu0 %v61, 104
  %v5409 = vpop.permute.xlu0 %5408
  %5410 = vrot.lane.b32.xlu0 %v62, 104
  %v5411 = vpop.permute.xlu0 %5410
  %5412 = vrot.lane.b32.xlu0 %v63, 104
  %v5413 = vpop.permute.xlu0 %5412
  %5414 = vrot.lane.b32.xlu0 %v24, 104
  %v5415 = vpop.permute.xlu0 %5414
  %5416 = vrot.lane.b32.xlu0 %v25, 104
  %v5417 = vpop.permute.xlu0 %5416
  %5418 = vrot.lane.b32.xlu0 %v26, 104
  %v5419 = vpop.permute.xlu0 %5418
  %5420 = vrot.lane.b32.xlu0 %v27, 104
  %v5421 = vpop.permute.xlu0 %5420
  %5422 = vrot.lane.b32.xlu0 %v28, 104
  %v5423 = vpop.permute.xlu0 %5422
  %5424 = vrot.lane.b32.xlu0 %v29, 104
  %v5425 = vpop.permute.xlu0 %5424
  %5426 = vrot.lane.b32.xlu0 %v30, 104
  %v5427 = vpop.permute.xlu0 %5426
  %5428 = vrot.lane.b32.xlu0 %v31, 104
  %v5429 = vpop.permute.xlu0 %5428
  %v5430 = vsel %vm72, %v5399, 0
  %v5432 = vsel %vm72, %v5401, 0
  %v5434 = vsel %vm72, %v5403, 0
  %v5436 = vsel %vm72, %v5405, 0
  %v5438 = vsel %vm72, %v5407, 0
  %v5440 = vsel %vm72, %v5409, 0
  %v5442 = vsel %vm72, %v5411, 0
  %v5444 = vsel %vm72, %v5413, 0
  %v5446 = vsel %vm72, %v5415, 0
  %v5448 = vsel %vm72, %v5417, 0
  %v5450 = vsel %vm72, %v5419, 0
  %v5452 = vsel %vm72, %v5421, 0
  %v5454 = vsel %vm72, %v5423, 0
  %v5456 = vsel %vm72, %v5425, 0
  %v5458 = vsel %vm72, %v5427, 0
  %v5460 = vsel %vm72, %v5429, 0
  %5462 = vmatprep.subr.mxu0 0.0
  %5463 = vmatpush1.xpose.msra.mxu0 %v5446
  %5464 = vmatprep.subr.mxu0 0.0
  %5465 = vmatpush1.xpose.msra.mxu0 %v5448
  %5466 = vmatprep.subr.mxu0 0.0
  %5467 = vmatpush1.xpose.msra.mxu0 %v5450
  %5468 = vmatprep.subr.mxu0 0.0
  %5469 = vmatpush1.xpose.msra.mxu0 %v5452
  %5470 = vmatprep.subr.mxu0 0.0
  %5471 = vmatpush1.xpose.msra.mxu0 %v5454
  %5472 = vmatprep.subr.mxu0 0.0
  %5473 = vmatpush1.xpose.msra.mxu0 %v5456
  %5474 = vmatprep.subr.mxu0 0.0
  %5475 = vmatpush1.xpose.msra.mxu0 %v5458
  %5476 = vmatprep.subr.mxu0 0.0
  %5477 = vmatpush1.xpose.msra.mxu0 %v5460
  %5478 = vmatprep.subr.mxu0 0.0
  %5479 = vmatpush1.xpose.msra.mxu0 0.0
  %5480 = vmatprep.subr.mxu0 0.0
  %5481 = vmatpush1.xpose.msra.mxu0 0.0
  %5482 = vmatprep.subr.mxu0 0.0
  %5483 = vmatpush1.xpose.msra.mxu0 0.0
  %5484 = vmatprep.subr.mxu0 0.0
  %5485 = vmatpush1.xpose.msra.mxu0 0.0
  %5486 = vmatprep.subr.mxu0 0.0
  %5487 = vmatpush1.xpose.msra.mxu0 0.0
  %5488 = vmatprep.subr.mxu0 0.0
  %5489 = vmatpush1.xpose.msra.mxu0 0.0
  %5490 = vmatprep.subr.mxu0 0.0
  %5491 = vmatpush1.xpose.msra.mxu0 0.0
  %5492 = vmatprep.subr.mxu0 0.0
  %5493 = vmatpush1.xpose.msra.mxu0 0.0
  %5494 = vmatprep.subr.mxu0 0.0
  %5495 = vmatpush1.xpose.msra.mxu0 0.0
  %5496 = vmatprep.subr.mxu0 0.0
  %5497 = vmatpush1.xpose.msra.mxu0 0.0
  %5498 = vmatprep.subr.mxu0 0.0
  %5499 = vmatpush1.xpose.msra.mxu0 0.0
  %5500 = vmatprep.subr.mxu0 0.0
  %5501 = vmatpush1.xpose.msra.mxu0 0.0
  %5502 = vmatprep.subr.mxu0 0.0
  %5503 = vmatpush1.xpose.msra.mxu0 0.0
  %5504 = vmatprep.subr.mxu0 0.0
  %5505 = vmatpush1.xpose.msra.mxu0 0.0
  %5506 = vmatprep.subr.mxu0 0.0
  %5507 = vmatpush1.xpose.msra.mxu0 0.0
  %5508 = vmatprep.subr.mxu0 0.0
  %5509 = vmatpush1.xpose.msra.mxu0 0.0
  %5510 = vmatprep.subr.mxu0 0.0
  %5511 = vmatpush1.xpose.msra.mxu0 0.0
  %5512 = vmatprep.subr.mxu0 0.0
  %5513 = vmatpush1.xpose.msra.mxu0 0.0
  %5514 = vmatprep.subr.mxu0 0.0
  %5515 = vmatpush1.xpose.msra.mxu0 0.0
  %5516 = vmatprep.subr.mxu0 0.0
  %5517 = vmatpush1.xpose.msra.mxu0 0.0
  %5518 = vmatprep.subr.mxu0 0.0
  %5519 = vmatpush1.xpose.msra.mxu0 0.0
  %5520 = vmatprep.subr.mxu0 0.0
  %5521 = vmatpush1.xpose.msra.mxu0 0.0
  %5522 = vmatprep.subr.mxu0 0.0
  %5523 = vmatpush1.xpose.msra.mxu0 0.0
  %5524 = vmatprep.subr.mxu0 0.0
  %5525 = vmatpush1.xpose.msra.mxu0 0.0
  %5526 = vmatprep.mubr.f32.mxu0 0.0
  %5527 = vmatmul.mubr.f32.gmra.mrb[0].mxu0 %v5430
  %v5528 = vpop.f32.mrb[0].mxu0
  %v5529 = vadd.f32 0.0, %v5528
  %v5530 = vpop.f32.mrb[0].mxu0
  %5531 = vmatprep.mubr.f32.mxu0 0.0
  %5532 = vmatmul.mubr.f32.gmra.mrb[0].mxu0 %v5432
  %v5533 = vpop.f32.mrb[0].mxu0
  %v5534 = vadd.f32 0.0, %v5533
  %v5535 = vpop.f32.mrb[0].mxu0
  %5536 = vmatprep.mubr.f32.mxu0 0.0
  %5537 = vmatmul.mubr.f32.gmra.mrb[0].mxu0 %v5434
  %v5538 = vpop.f32.mrb[0].mxu0
  %v5539 = vadd.f32 0.0, %v5538
  %v5540 = vpop.f32.mrb[0].mxu0
  %5541 = vmatprep.mubr.f32.mxu0 0.0
  %5542 = vmatmul.mubr.f32.gmra.mrb[0].mxu0 %v5436
  %v5543 = vpop.f32.mrb[0].mxu0
  %v5544 = vadd.f32 0.0, %v5543
  %v5545 = vpop.f32.mrb[0].mxu0
  %5546 = vmatprep.mubr.f32.mxu0 0.0
  %5547 = vmatmul.mubr.f32.gmra.mrb[0].mxu0 %v5438
  %v5548 = vpop.f32.mrb[0].mxu0
  %v5549 = vadd.f32 0.0, %v5548
  %v5550 = vpop.f32.mrb[0].mxu0
  %5551 = vmatprep.mubr.f32.mxu0 0.0
  %5552 = vmatmul.mubr.f32.gmra.mrb[0].mxu0 %v5440
  %v5553 = vpop.f32.mrb[0].mxu0
  %v5554 = vadd.f32 0.0, %v5553
  %v5555 = vpop.f32.mrb[0].mxu0
  %5556 = vmatprep.mubr.f32.mxu0 0.0
  %5557 = vmatmul.mubr.f32.gmra.mrb[0].mxu0 %v5442
  %v5558 = vpop.f32.mrb[0].mxu0
  %v5559 = vadd.f32 0.0, %v5558
  %v5560 = vpop.f32.mrb[0].mxu0
  %5561 = vmatprep.mubr.f32.mxu0 0.0
  %5562 = vmatmul.mubr.f32.gmra.mrb[0].mxu0 %v5444
  %v5563 = vpop.f32.mrb[0].mxu0
  %v5564 = vadd.f32 0.0, %v5563
  %v5565 = vpop.f32.mrb[0].mxu0
  %5566 = vdwg.mxu0
  %5567 = vrot.lane.b32.xlu0 %v64, 104
  %v5568 = vpop.permute.xlu0 %5567
  %5569 = vrot.lane.b32.xlu0 %v65, 104
  %v5570 = vpop.permute.xlu0 %5569
  %5571 = vrot.lane.b32.xlu0 %v66, 104
  %v5572 = vpop.permute.xlu0 %5571
  %5573 = vrot.lane.b32.xlu0 %v67, 104
  %v5574 = vpop.permute.xlu0 %5573
  %5575 = vrot.lane.b32.xlu0 %v68, 104
  %v5576 = vpop.permute.xlu0 %5575
  %5577 = vrot.lane.b32.xlu0 %v69, 104
  %v5578 = vpop.permute.xlu0 %5577
  %5579 = vrot.lane.b32.xlu0 %v70, 104
  %v5580 = vpop.permute.xlu0 %5579
  %5581 = vrot.lane.b32.xlu0 %v71, 104
  %v5582 = vpop.permute.xlu0 %5581
  %5583 = vrot.lane.b32.xlu0 %v32, 104
  %v5584 = vpop.permute.xlu0 %5583
  %5585 = vrot.lane.b32.xlu0 %v33, 104
  %v5586 = vpop.permute.xlu0 %5585
  %5587 = vrot.lane.b32.xlu0 %v34, 104
  %v5588 = vpop.permute.xlu0 %5587
  %5589 = vrot.lane.b32.xlu0 %v35, 104
  %v5590 = vpop.permute.xlu0 %5589
  %5591 = vrot.lane.b32.xlu0 %v36, 104
  %v5592 = vpop.permute.xlu0 %5591
  %5593 = vrot.lane.b32.xlu0 %v37, 104
  %v5594 = vpop.permute.xlu0 %5593
  %5595 = vrot.lane.b32.xlu0 %v38, 104
  %v5596 = vpop.permute.xlu0 %5595
  %5597 = vrot.lane.b32.xlu0 %v39, 104
  %v5598 = vpop.permute.xlu0 %5597
  %v5599 = vsel %vm72, %v5568, 0
  %v5601 = vsel %vm72, %v5570, 0
  %v5603 = vsel %vm72, %v5572, 0
  %v5605 = vsel %vm72, %v5574, 0
  %v5607 = vsel %vm72, %v5576, 0
  %v5609 = vsel %vm72, %v5578, 0
  %v5611 = vsel %vm72, %v5580, 0
  %v5613 = vsel %vm72, %v5582, 0
  %v5615 = vsel %vm72, %v5584, 0
  %v5617 = vsel %vm72, %v5586, 0
  %v5619 = vsel %vm72, %v5588, 0
  %v5621 = vsel %vm72, %v5590, 0
  %v5623 = vsel %vm72, %v5592, 0
  %v5625 = vsel %vm72, %v5594, 0
  %v5627 = vsel %vm72, %v5596, 0
  %v5629 = vsel %vm72, %v5598, 0
  %5631 = vmatprep.subr.mxu0 0.0
  %5632 = vmatpush1.xpose.msra.mxu0 %v5615
  %5633 = vmatprep.subr.mxu0 0.0
  %5634 = vmatpush1.xpose.msra.mxu0 %v5617
  %5635 = vmatprep.subr.mxu0 0.0
  %5636 = vmatpush1.xpose.msra.mxu0 %v5619
  %5637 = vmatprep.subr.mxu0 0.0
  %5638 = vmatpush1.xpose.msra.mxu0 %v5621
  %5639 = vmatprep.subr.mxu0 0.0
  %5640 = vmatpush1.xpose.msra.mxu0 %v5623
  %5641 = vmatprep.subr.mxu0 0.0
  %5642 = vmatpush1.xpose.msra.mxu0 %v5625
  %5643 = vmatprep.subr.mxu0 0.0
  %5644 = vmatpush1.xpose.msra.mxu0 %v5627
  %5645 = vmatprep.subr.mxu0 0.0
  %5646 = vmatpush1.xpose.msra.mxu0 %v5629
  %5647 = vmatprep.subr.mxu0 0.0
  %5648 = vmatpush1.xpose.msra.mxu0 0.0
  %5649 = vmatprep.subr.mxu0 0.0
  %5650 = vmatpush1.xpose.msra.mxu0 0.0
  %5651 = vmatprep.subr.mxu0 0.0
  %5652 = vmatpush1.xpose.msra.mxu0 0.0
  %5653 = vmatprep.subr.mxu0 0.0
  %5654 = vmatpush1.xpose.msra.mxu0 0.0
  %5655 = vmatprep.subr.mxu0 0.0
  %5656 = vmatpush1.xpose.msra.mxu0 0.0
  %5657 = vmatprep.subr.mxu0 0.0
  %5658 = vmatpush1.xpose.msra.mxu0 0.0
  %5659 = vmatprep.subr.mxu0 0.0
  %5660 = vmatpush1.xpose.msra.mxu0 0.0
  %5661 = vmatprep.subr.mxu0 0.0
  %5662 = vmatpush1.xpose.msra.mxu0 0.0
  %5663 = vmatprep.subr.mxu0 0.0
  %5664 = vmatpush1.xpose.msra.mxu0 0.0
  %5665 = vmatprep.subr.mxu0 0.0
  %5666 = vmatpush1.xpose.msra.mxu0 0.0
  %5667 = vmatprep.subr.mxu0 0.0
  %5668 = vmatpush1.xpose.msra.mxu0 0.0
  %5669 = vmatprep.subr.mxu0 0.0
  %5670 = vmatpush1.xpose.msra.mxu0 0.0
  %5671 = vmatprep.subr.mxu0 0.0
  %5672 = vmatpush1.xpose.msra.mxu0 0.0
  %5673 = vmatprep.subr.mxu0 0.0
  %5674 = vmatpush1.xpose.msra.mxu0 0.0
  %5675 = vmatprep.subr.mxu0 0.0
  %5676 = vmatpush1.xpose.msra.mxu0 0.0
  %5677 = vmatprep.subr.mxu0 0.0
  %5678 = vmatpush1.xpose.msra.mxu0 0.0
  %5679 = vmatprep.subr.mxu0 0.0
  %5680 = vmatpush1.xpose.msra.mxu0 0.0
  %5681 = vmatprep.subr.mxu0 0.0
  %5682 = vmatpush1.xpose.msra.mxu0 0.0
  %5683 = vmatprep.subr.mxu0 0.0
  %5684 = vmatpush1.xpose.msra.mxu0 0.0
  %5685 = vmatprep.subr.mxu0 0.0
  %5686 = vmatpush1.xpose.msra.mxu0 0.0
  %5687 = vmatprep.subr.mxu0 0.0
  %5688 = vmatpush1.xpose.msra.mxu0 0.0
  %5689 = vmatprep.subr.mxu0 0.0
  %5690 = vmatpush1.xpose.msra.mxu0 0.0
  %5691 = vmatprep.subr.mxu0 0.0
  %5692 = vmatpush1.xpose.msra.mxu0 0.0
  %5693 = vmatprep.subr.mxu0 0.0
  %5694 = vmatpush1.xpose.msra.mxu0 0.0
  %5695 = vmatprep.mubr.f32.mxu0 0.0
  %5696 = vmatmul.mubr.f32.gmra.mrb[0].mxu0 %v5599
  %v5697 = vpop.f32.mrb[0].mxu0
  %v5698 = vadd.f32 0.0, %v5697
  %v5699 = vpop.f32.mrb[0].mxu0
  %5700 = vmatprep.mubr.f32.mxu0 0.0
  %5701 = vmatmul.mubr.f32.gmra.mrb[0].mxu0 %v5601
  %v5702 = vpop.f32.mrb[0].mxu0
  %v5703 = vadd.f32 0.0, %v5702
  %v5704 = vpop.f32.mrb[0].mxu0
  %5705 = vmatprep.mubr.f32.mxu0 0.0
  %5706 = vmatmul.mubr.f32.gmra.mrb[0].mxu0 %v5603
  %v5707 = vpop.f32.mrb[0].mxu0
  %v5708 = vadd.f32 0.0, %v5707
  %v5709 = vpop.f32.mrb[0].mxu0
  %5710 = vmatprep.mubr.f32.mxu0 0.0
  %5711 = vmatmul.mubr.f32.gmra.mrb[0].mxu0 %v5605
  %v5712 = vpop.f32.mrb[0].mxu0
  %v5713 = vadd.f32 0.0, %v5712
  %v5714 = vpop.f32.mrb[0].mxu0
  %5715 = vmatprep.mubr.f32.mxu0 0.0
  %5716 = vmatmul.mubr.f32.gmra.mrb[0].mxu0 %v5607
  %v5717 = vpop.f32.mrb[0].mxu0
  %v5718 = vadd.f32 0.0, %v5717
  %v5719 = vpop.f32.mrb[0].mxu0
  %5720 = vmatprep.mubr.f32.mxu0 0.0
  %5721 = vmatmul.mubr.f32.gmra.mrb[0].mxu0 %v5609
  %v5722 = vpop.f32.mrb[0].mxu0
  %v5723 = vadd.f32 0.0, %v5722
  %v5724 = vpop.f32.mrb[0].mxu0
  %5725 = vmatprep.mubr.f32.mxu0 0.0
  %5726 = vmatmul.mubr.f32.gmra.mrb[0].mxu0 %v5611
  %v5727 = vpop.f32.mrb[0].mxu0
  %v5728 = vadd.f32 0.0, %v5727
  %v5729 = vpop.f32.mrb[0].mxu0
  %5730 = vmatprep.mubr.f32.mxu0 0.0
  %5731 = vmatmul.mubr.f32.gmra.mrb[0].mxu0 %v5613
  %v5732 = vpop.f32.mrb[0].mxu0
  %v5733 = vadd.f32 0.0, %v5732
  %v5734 = vpop.f32.mrb[0].mxu0
  %5735 = vdwg.mxu0
  %v5736 = vsel %vm685, %v5191, -inf
  %5737 = vmax.xlane.f32.xlu0 %v5736
  %v5738 = vpop.xlane.xlu0 %5737
  %v5739 = vsel %vm685, %v5196, -inf
  %5740 = vmax.xlane.f32.xlu0 %v5739
  %v5741 = vpop.xlane.xlu0 %5740
  %v5742 = vsel %vm685, %v5201, -inf
  %5743 = vmax.xlane.f32.xlu0 %v5742
  %v5744 = vpop.xlane.xlu0 %5743
  %v5745 = vsel %vm685, %v5206, -inf
  %5746 = vmax.xlane.f32.xlu0 %v5745
  %v5747 = vpop.xlane.xlu0 %5746
  %v5748 = vsel %vm685, %v5211, -inf
  %5749 = vmax.xlane.f32.xlu0 %v5748
  %v5750 = vpop.xlane.xlu0 %5749
  %v5751 = vsel %vm685, %v5216, -inf
  %5752 = vmax.xlane.f32.xlu0 %v5751
  %v5753 = vpop.xlane.xlu0 %5752
  %v5754 = vsel %vm685, %v5221, -inf
  %5755 = vmax.xlane.f32.xlu0 %v5754
  %v5756 = vpop.xlane.xlu0 %5755
  %v5757 = vsel %vm685, %v5226, -inf
  %5758 = vmax.xlane.f32.xlu0 %v5757
  %v5759 = vpop.xlane.xlu0 %5758
  %v5760 = vsel %vm685, %v5360, -inf
  %5761 = vmax.xlane.f32.xlu0 %v5760
  %v5762 = vpop.xlane.xlu0 %5761
  %v5763 = vsel %vm685, %v5365, -inf
  %5764 = vmax.xlane.f32.xlu0 %v5763
  %v5765 = vpop.xlane.xlu0 %5764
  %v5766 = vsel %vm685, %v5370, -inf
  %5767 = vmax.xlane.f32.xlu0 %v5766
  %v5768 = vpop.xlane.xlu0 %5767
  %v5769 = vsel %vm685, %v5375, -inf
  %5770 = vmax.xlane.f32.xlu0 %v5769
  %v5771 = vpop.xlane.xlu0 %5770
  %v5772 = vsel %vm685, %v5380, -inf
  %5773 = vmax.xlane.f32.xlu0 %v5772
  %v5774 = vpop.xlane.xlu0 %5773
  %v5775 = vsel %vm685, %v5385, -inf
  %5776 = vmax.xlane.f32.xlu0 %v5775
  %v5777 = vpop.xlane.xlu0 %5776
  %v5778 = vsel %vm685, %v5390, -inf
  %5779 = vmax.xlane.f32.xlu0 %v5778
  %v5780 = vpop.xlane.xlu0 %5779
  %v5781 = vsel %vm685, %v5395, -inf
  %5782 = vmax.xlane.f32.xlu0 %v5781
  %v5783 = vpop.xlane.xlu0 %5782
  %v5784 = vsel %vm685, %v5529, -inf
  %5785 = vmax.xlane.f32.xlu0 %v5784
  %v5786 = vpop.xlane.xlu0 %5785
  %v5787 = vsel %vm685, %v5534, -inf
  %5788 = vmax.xlane.f32.xlu0 %v5787
  %v5789 = vpop.xlane.xlu0 %5788
  %v5790 = vsel %vm685, %v5539, -inf
  %5791 = vmax.xlane.f32.xlu0 %v5790
  %v5792 = vpop.xlane.xlu0 %5791
  %v5793 = vsel %vm685, %v5544, -inf
  %5794 = vmax.xlane.f32.xlu0 %v5793
  %v5795 = vpop.xlane.xlu0 %5794
  %v5796 = vsel %vm685, %v5549, -inf
  %5797 = vmax.xlane.f32.xlu0 %v5796
  %v5798 = vpop.xlane.xlu0 %5797
  %v5799 = vsel %vm685, %v5554, -inf
  %5800 = vmax.xlane.f32.xlu0 %v5799
  %v5801 = vpop.xlane.xlu0 %5800
  %v5802 = vsel %vm685, %v5559, -inf
  %5803 = vmax.xlane.f32.xlu0 %v5802
  %v5804 = vpop.xlane.xlu0 %5803
  %v5805 = vsel %vm685, %v5564, -inf
  %5806 = vmax.xlane.f32.xlu0 %v5805
  %v5807 = vpop.xlane.xlu0 %5806
  %v5808 = vsel %vm685, %v5698, -inf
  %5809 = vmax.xlane.f32.xlu0 %v5808
  %v5810 = vpop.xlane.xlu0 %5809
  %v5811 = vsel %vm685, %v5703, -inf
  %5812 = vmax.xlane.f32.xlu0 %v5811
  %v5813 = vpop.xlane.xlu0 %5812
  %v5814 = vsel %vm685, %v5708, -inf
  %5815 = vmax.xlane.f32.xlu0 %v5814
  %v5816 = vpop.xlane.xlu0 %5815
  %v5817 = vsel %vm685, %v5713, -inf
  %5818 = vmax.xlane.f32.xlu0 %v5817
  %v5819 = vpop.xlane.xlu0 %5818
  %v5820 = vsel %vm685, %v5718, -inf
  %5821 = vmax.xlane.f32.xlu0 %v5820
  %v5822 = vpop.xlane.xlu0 %5821
  %v5823 = vsel %vm685, %v5723, -inf
  %5824 = vmax.xlane.f32.xlu0 %v5823
  %v5825 = vpop.xlane.xlu0 %5824
  %v5826 = vsel %vm685, %v5728, -inf
  %5827 = vmax.xlane.f32.xlu0 %v5826
  %v5828 = vpop.xlane.xlu0 %5827
  %v5829 = vsel %vm685, %v5733, -inf
  %5830 = vmax.xlane.f32.xlu0 %v5829
  %v5831 = vpop.xlane.xlu0 %5830
  %v5832 = vsub.f32 %v5191, %v5738
  %v5833 = vsub.f32 %v5196, %v5741
  %v5834 = vsub.f32 %v5201, %v5744
  %v5835 = vsub.f32 %v5206, %v5747
  %v5836 = vsub.f32 %v5211, %v5750
  %v5837 = vsub.f32 %v5216, %v5753
  %v5838 = vsub.f32 %v5221, %v5756
  %v5839 = vsub.f32 %v5226, %v5759
  %v5840 = vsub.f32 %v5360, %v5762
  %v5841 = vsub.f32 %v5365, %v5765
  %v5842 = vsub.f32 %v5370, %v5768
  %v5843 = vsub.f32 %v5375, %v5771
  %v5844 = vsub.f32 %v5380, %v5774
  %v5845 = vsub.f32 %v5385, %v5777
  %v5846 = vsub.f32 %v5390, %v5780
  %v5847 = vsub.f32 %v5395, %v5783
  %v5848 = vsub.f32 %v5529, %v5786
  %v5849 = vsub.f32 %v5534, %v5789
  %v5850 = vsub.f32 %v5539, %v5792
  %v5851 = vsub.f32 %v5544, %v5795
  %v5852 = vsub.f32 %v5549, %v5798
  %v5853 = vsub.f32 %v5554, %v5801
  %v5854 = vsub.f32 %v5559, %v5804
  %v5855 = vsub.f32 %v5564, %v5807
  %v5856 = vsub.f32 %v5698, %v5810
  %v5857 = vsub.f32 %v5703, %v5813
  %v5858 = vsub.f32 %v5708, %v5816
  %v5859 = vsub.f32 %v5713, %v5819
  %v5860 = vsub.f32 %v5718, %v5822
  %v5861 = vsub.f32 %v5723, %v5825
  %v5862 = vsub.f32 %v5728, %v5828
  %v5863 = vsub.f32 %v5733, %v5831
  %v5864 = vmul.f32 %v5832, 1.442695
  %v5865 = vpow.pop %v5864
  %v5866 = vmul.f32 %v5833, 1.442695
  %v5867 = vpow.pop %v5866
  %v5868 = vmul.f32 %v5834, 1.442695
  %v5869 = vpow.pop %v5868
  %v5870 = vmul.f32 %v5835, 1.442695
  %v5871 = vpow.pop %v5870
  %v5872 = vmul.f32 %v5836, 1.442695
  %v5873 = vpow.pop %v5872
  %v5874 = vmul.f32 %v5837, 1.442695
  %v5875 = vpow.pop %v5874
  %v5876 = vmul.f32 %v5838, 1.442695
  %v5877 = vpow.pop %v5876
  %v5878 = vmul.f32 %v5839, 1.442695
  %v5879 = vpow.pop %v5878
  %v5880 = vmul.f32 %v5840, 1.442695
  %v5881 = vpow.pop %v5880
  %v5882 = vmul.f32 %v5841, 1.442695
  %v5883 = vpow.pop %v5882
  %v5884 = vmul.f32 %v5842, 1.442695
  %v5885 = vpow.pop %v5884
  %v5886 = vmul.f32 %v5843, 1.442695
  %v5887 = vpow.pop %v5886
  %v5888 = vmul.f32 %v5844, 1.442695
  %v5889 = vpow.pop %v5888
  %v5890 = vmul.f32 %v5845, 1.442695
  %v5891 = vpow.pop %v5890
  %v5892 = vmul.f32 %v5846, 1.442695
  %v5893 = vpow.pop %v5892
  %v5894 = vmul.f32 %v5847, 1.442695
  %v5895 = vpow.pop %v5894
  %v5896 = vmul.f32 %v5848, 1.442695
  %v5897 = vpow.pop %v5896
  %v5898 = vmul.f32 %v5849, 1.442695
  %v5899 = vpow.pop %v5898
  %v5900 = vmul.f32 %v5850, 1.442695
  %v5901 = vpow.pop %v5900
  %v5902 = vmul.f32 %v5851, 1.442695
  %v5903 = vpow.pop %v5902
  %v5904 = vmul.f32 %v5852, 1.442695
  %v5905 = vpow.pop %v5904
  %v5906 = vmul.f32 %v5853, 1.442695
  %v5907 = vpow.pop %v5906
  %v5908 = vmul.f32 %v5854, 1.442695
  %v5909 = vpow.pop %v5908
  %v5910 = vmul.f32 %v5855, 1.442695
  %v5911 = vpow.pop %v5910
  %v5912 = vmul.f32 %v5856, 1.442695
  %v5913 = vpow.pop %v5912
  %v5914 = vmul.f32 %v5857, 1.442695
  %v5915 = vpow.pop %v5914
  %v5916 = vmul.f32 %v5858, 1.442695
  %v5917 = vpow.pop %v5916
  %v5918 = vmul.f32 %v5859, 1.442695
  %v5919 = vpow.pop %v5918
  %v5920 = vmul.f32 %v5860, 1.442695
  %v5921 = vpow.pop %v5920
  %v5922 = vmul.f32 %v5861, 1.442695
  %v5923 = vpow.pop %v5922
  %v5924 = vmul.f32 %v5862, 1.442695
  %v5925 = vpow.pop %v5924
  %v5926 = vmul.f32 %v5863, 1.442695
  %v5927 = vpow.pop %v5926
  %v5928 = vsel %vm685, %v5865, 0.0
  %5929 = vadd.xlane.f32.xlu0 %v5928
  %v5930 = vpop.xlane.xlu0 %5929
  %v5931 = vsel %vm685, %v5867, 0.0
  %5932 = vadd.xlane.f32.xlu0 %v5931
  %v5933 = vpop.xlane.xlu0 %5932
  %v5934 = vsel %vm685, %v5869, 0.0
  %5935 = vadd.xlane.f32.xlu0 %v5934
  %v5936 = vpop.xlane.xlu0 %5935
  %v5937 = vsel %vm685, %v5871, 0.0
  %5938 = vadd.xlane.f32.xlu0 %v5937
  %v5939 = vpop.xlane.xlu0 %5938
  %v5940 = vsel %vm685, %v5873, 0.0
  %5941 = vadd.xlane.f32.xlu0 %v5940
  %v5942 = vpop.xlane.xlu0 %5941
  %v5943 = vsel %vm685, %v5875, 0.0
  %5944 = vadd.xlane.f32.xlu0 %v5943
  %v5945 = vpop.xlane.xlu0 %5944
  %v5946 = vsel %vm685, %v5877, 0.0
  %5947 = vadd.xlane.f32.xlu0 %v5946
  %v5948 = vpop.xlane.xlu0 %5947
  %v5949 = vsel %vm685, %v5879, 0.0
  %5950 = vadd.xlane.f32.xlu0 %v5949
  %v5951 = vpop.xlane.xlu0 %5950
  %v5952 = vsel %vm685, %v5881, 0.0
  %5953 = vadd.xlane.f32.xlu0 %v5952
  %v5954 = vpop.xlane.xlu0 %5953
  %v5955 = vsel %vm685, %v5883, 0.0
  %5956 = vadd.xlane.f32.xlu0 %v5955
  %v5957 = vpop.xlane.xlu0 %5956
  %v5958 = vsel %vm685, %v5885, 0.0
  %5959 = vadd.xlane.f32.xlu0 %v5958
  %v5960 = vpop.xlane.xlu0 %5959
  %v5961 = vsel %vm685, %v5887, 0.0
  %5962 = vadd.xlane.f32.xlu0 %v5961
  %v5963 = vpop.xlane.xlu0 %5962
  %v5964 = vsel %vm685, %v5889, 0.0
  %5965 = vadd.xlane.f32.xlu0 %v5964
  %v5966 = vpop.xlane.xlu0 %5965
  %v5967 = vsel %vm685, %v5891, 0.0
  %5968 = vadd.xlane.f32.xlu0 %v5967
  %v5969 = vpop.xlane.xlu0 %5968
  %v5970 = vsel %vm685, %v5893, 0.0
  %5971 = vadd.xlane.f32.xlu0 %v5970
  %v5972 = vpop.xlane.xlu0 %5971
  %v5973 = vsel %vm685, %v5895, 0.0
  %5974 = vadd.xlane.f32.xlu0 %v5973
  %v5975 = vpop.xlane.xlu0 %5974
  %v5976 = vsel %vm685, %v5897, 0.0
  %5977 = vadd.xlane.f32.xlu0 %v5976
  %v5978 = vpop.xlane.xlu0 %5977
  %v5979 = vsel %vm685, %v5899, 0.0
  %5980 = vadd.xlane.f32.xlu0 %v5979
  %v5981 = vpop.xlane.xlu0 %5980
  %v5982 = vsel %vm685, %v5901, 0.0
  %5983 = vadd.xlane.f32.xlu0 %v5982
  %v5984 = vpop.xlane.xlu0 %5983
  %v5985 = vsel %vm685, %v5903, 0.0
  %5986 = vadd.xlane.f32.xlu0 %v5985
  %v5987 = vpop.xlane.xlu0 %5986
  %v5988 = vsel %vm685, %v5905, 0.0
  %5989 = vadd.xlane.f32.xlu0 %v5988
  %v5990 = vpop.xlane.xlu0 %5989
  %v5991 = vsel %vm685, %v5907, 0.0
  %5992 = vadd.xlane.f32.xlu0 %v5991
  %v5993 = vpop.xlane.xlu0 %5992
  %v5994 = vsel %vm685, %v5909, 0.0
  %5995 = vadd.xlane.f32.xlu0 %v5994
  %v5996 = vpop.xlane.xlu0 %5995
  %v5997 = vsel %vm685, %v5911, 0.0
  %5998 = vadd.xlane.f32.xlu0 %v5997
  %v5999 = vpop.xlane.xlu0 %5998
  %v6000 = vsel %vm685, %v5913, 0.0
  %6001 = vadd.xlane.f32.xlu0 %v6000
  %v6002 = vpop.xlane.xlu0 %6001
  %v6003 = vsel %vm685, %v5915, 0.0
  %6004 = vadd.xlane.f32.xlu0 %v6003
  %v6005 = vpop.xlane.xlu0 %6004
  %v6006 = vsel %vm685, %v5917, 0.0
  %6007 = vadd.xlane.f32.xlu0 %v6006
  %v6008 = vpop.xlane.xlu0 %6007
  %v6009 = vsel %vm685, %v5919, 0.0
  %6010 = vadd.xlane.f32.xlu0 %v6009
  %v6011 = vpop.xlane.xlu0 %6010
  %v6012 = vsel %vm685, %v5921, 0.0
  %6013 = vadd.xlane.f32.xlu0 %v6012
  %v6014 = vpop.xlane.xlu0 %6013
  %v6015 = vsel %vm685, %v5923, 0.0
  %6016 = vadd.xlane.f32.xlu0 %v6015
  %v6017 = vpop.xlane.xlu0 %6016
  %v6018 = vsel %vm685, %v5925, 0.0
  %6019 = vadd.xlane.f32.xlu0 %v6018
  %v6020 = vpop.xlane.xlu0 %6019
  %v6021 = vsel %vm685, %v5927, 0.0
  %6022 = vadd.xlane.f32.xlu0 %v6021
  %v6023 = vpop.xlane.xlu0 %6022
  %v6033 = vsel %vm685, %v5865, 0
  %v6036 = vsel %vm685, %v5867, 0
  %v6039 = vsel %vm685, %v5869, 0
  %v6042 = vsel %vm685, %v5871, 0
  %v6045 = vsel %vm685, %v5873, 0
  %v6048 = vsel %vm685, %v5875, 0
  %v6051 = vsel %vm685, %v5877, 0
  %v6054 = vsel %vm685, %v5879, 0
  %6056 = vmatprep.subr.mxu0 0.0
  %6057 = vmatpush1.msra.mxu0 %v5077
  %6058 = vmatprep.subr.mxu0 0.0
  %6059 = vmatpush1.msra.mxu0 %v5079
  %6060 = vmatprep.subr.mxu0 0.0
  %6061 = vmatpush1.msra.mxu0 %v5081
  %6062 = vmatprep.subr.mxu0 0.0
  %6063 = vmatpush1.msra.mxu0 %v5083
  %6064 = vmatprep.subr.mxu0 0.0
  %6065 = vmatpush1.msra.mxu0 %v5085
  %6066 = vmatprep.subr.mxu0 0.0
  %6067 = vmatpush1.msra.mxu0 %v5087
  %6068 = vmatprep.subr.mxu0 0.0
  %6069 = vmatpush1.msra.mxu0 %v5089
  %6070 = vmatprep.subr.mxu0 0.0
  %6071 = vmatpush1.msra.mxu0 %v5091
  %6072 = vmatprep.subr.mxu0 0.0
  %6073 = vmatpush1.msra.mxu0 0.0
  %6074 = vmatprep.subr.mxu0 0.0
  %6075 = vmatpush1.msra.mxu0 0.0
  %6076 = vmatprep.subr.mxu0 0.0
  %6077 = vmatpush1.msra.mxu0 0.0
  %6078 = vmatprep.subr.mxu0 0.0
  %6079 = vmatpush1.msra.mxu0 0.0
  %6080 = vmatprep.subr.mxu0 0.0
  %6081 = vmatpush1.msra.mxu0 0.0
  %6082 = vmatprep.subr.mxu0 0.0
  %6083 = vmatpush1.msra.mxu0 0.0
  %6084 = vmatprep.subr.mxu0 0.0
  %6085 = vmatpush1.msra.mxu0 0.0
  %6086 = vmatprep.subr.mxu0 0.0
  %6087 = vmatpush1.msra.mxu0 0.0
  %6088 = vmatprep.subr.mxu0 0.0
  %6089 = vmatpush1.msra.mxu0 0.0
  %6090 = vmatprep.subr.mxu0 0.0
  %6091 = vmatpush1.msra.mxu0 0.0
  %6092 = vmatprep.subr.mxu0 0.0
  %6093 = vmatpush1.msra.mxu0 0.0
  %6094 = vmatprep.subr.mxu0 0.0
  %6095 = vmatpush1.msra.mxu0 0.0
  %6096 = vmatprep.subr.mxu0 0.0
  %6097 = vmatpush1.msra.mxu0 0.0
  %6098 = vmatprep.subr.mxu0 0.0
  %6099 = vmatpush1.msra.mxu0 0.0
  %6100 = vmatprep.subr.mxu0 0.0
  %6101 = vmatpush1.msra.mxu0 0.0
  %6102 = vmatprep.subr.mxu0 0.0
  %6103 = vmatpush1.msra.mxu0 0.0
  %6104 = vmatprep.subr.mxu0 0.0
  %6105 = vmatpush1.msra.mxu0 0.0
  %6106 = vmatprep.subr.mxu0 0.0
  %6107 = vmatpush1.msra.mxu0 0.0
  %6108 = vmatprep.subr.mxu0 0.0
  %6109 = vmatpush1.msra.mxu0 0.0
  %6110 = vmatprep.subr.mxu0 0.0
  %6111 = vmatpush1.msra.mxu0 0.0
  %6112 = vmatprep.subr.mxu0 0.0
  %6113 = vmatpush1.msra.mxu0 0.0
  %6114 = vmatprep.subr.mxu0 0.0
  %6115 = vmatpush1.msra.mxu0 0.0
  %6116 = vmatprep.subr.mxu0 0.0
  %6117 = vmatpush1.msra.mxu0 0.0
  %6118 = vmatprep.subr.mxu0 0.0
  %6119 = vmatpush1.msra.mxu0 0.0
  %6120 = vmatprep.mubr.f32.mxu0 0.0
  %6121 = vmatmul.mubr.f32.gmra.mrb[0].mxu0 %v6033
  %v6122 = vpop.f32.mrb[0].mxu0
  %v6123 = vadd.f32 0.0, %v6122
  %v6124 = vpop.f32.mrb[0].mxu0
  %6125 = vmatprep.mubr.f32.mxu0 0.0
  %6126 = vmatmul.mubr.f32.gmra.mrb[0].mxu0 %v6036
  %v6127 = vpop.f32.mrb[0].mxu0
  %v6128 = vadd.f32 0.0, %v6127
  %v6129 = vpop.f32.mrb[0].mxu0
  %6130 = vmatprep.mubr.f32.mxu0 0.0
  %6131 = vmatmul.mubr.f32.gmra.mrb[0].mxu0 %v6039
  %v6132 = vpop.f32.mrb[0].mxu0
  %v6133 = vadd.f32 0.0, %v6132
  %v6134 = vpop.f32.mrb[0].mxu0
  %6135 = vmatprep.mubr.f32.mxu0 0.0
  %6136 = vmatmul.mubr.f32.gmra.mrb[0].mxu0 %v6042
  %v6137 = vpop.f32.mrb[0].mxu0
  %v6138 = vadd.f32 0.0, %v6137
  %v6139 = vpop.f32.mrb[0].mxu0
  %6140 = vmatprep.mubr.f32.mxu0 0.0
  %6141 = vmatmul.mubr.f32.gmra.mrb[0].mxu0 %v6045
  %v6142 = vpop.f32.mrb[0].mxu0
  %v6143 = vadd.f32 0.0, %v6142
  %v6144 = vpop.f32.mrb[0].mxu0
  %6145 = vmatprep.mubr.f32.mxu0 0.0
  %6146 = vmatmul.mubr.f32.gmra.mrb[0].mxu0 %v6048
  %v6147 = vpop.f32.mrb[0].mxu0
  %v6148 = vadd.f32 0.0, %v6147
  %v6149 = vpop.f32.mrb[0].mxu0
  %6150 = vmatprep.mubr.f32.mxu0 0.0
  %6151 = vmatmul.mubr.f32.gmra.mrb[0].mxu0 %v6051
  %v6152 = vpop.f32.mrb[0].mxu0
  %v6153 = vadd.f32 0.0, %v6152
  %v6154 = vpop.f32.mrb[0].mxu0
  %6155 = vmatprep.mubr.f32.mxu0 0.0
  %6156 = vmatmul.mubr.f32.gmra.mrb[0].mxu0 %v6054
  %v6157 = vpop.f32.mrb[0].mxu0
  %v6158 = vadd.f32 0.0, %v6157
  %v6159 = vpop.f32.mrb[0].mxu0
  %6160 = vdwg.mxu0
  %v6170 = vsel %vm685, %v5881, 0
  %v6173 = vsel %vm685, %v5883, 0
  %v6176 = vsel %vm685, %v5885, 0
  %v6179 = vsel %vm685, %v5887, 0
  %v6182 = vsel %vm685, %v5889, 0
  %v6185 = vsel %vm685, %v5891, 0
  %v6188 = vsel %vm685, %v5893, 0
  %v6191 = vsel %vm685, %v5895, 0
  %6193 = vmatprep.subr.mxu0 0.0
  %6194 = vmatpush1.msra.mxu0 %v5246
  %6195 = vmatprep.subr.mxu0 0.0
  %6196 = vmatpush1.msra.mxu0 %v5248
  %6197 = vmatprep.subr.mxu0 0.0
  %6198 = vmatpush1.msra.mxu0 %v5250
  %6199 = vmatprep.subr.mxu0 0.0
  %6200 = vmatpush1.msra.mxu0 %v5252
  %6201 = vmatprep.subr.mxu0 0.0
  %6202 = vmatpush1.msra.mxu0 %v5254
  %6203 = vmatprep.subr.mxu0 0.0
  %6204 = vmatpush1.msra.mxu0 %v5256
  %6205 = vmatprep.subr.mxu0 0.0
  %6206 = vmatpush1.msra.mxu0 %v5258
  %6207 = vmatprep.subr.mxu0 0.0
  %6208 = vmatpush1.msra.mxu0 %v5260
  %6209 = vmatprep.subr.mxu0 0.0
  %6210 = vmatpush1.msra.mxu0 0.0
  %6211 = vmatprep.subr.mxu0 0.0
  %6212 = vmatpush1.msra.mxu0 0.0
  %6213 = vmatprep.subr.mxu0 0.0
  %6214 = vmatpush1.msra.mxu0 0.0
  %6215 = vmatprep.subr.mxu0 0.0
  %6216 = vmatpush1.msra.mxu0 0.0
  %6217 = vmatprep.subr.mxu0 0.0
  %6218 = vmatpush1.msra.mxu0 0.0
  %6219 = vmatprep.subr.mxu0 0.0
  %6220 = vmatpush1.msra.mxu0 0.0
  %6221 = vmatprep.subr.mxu0 0.0
  %6222 = vmatpush1.msra.mxu0 0.0
  %6223 = vmatprep.subr.mxu0 0.0
  %6224 = vmatpush1.msra.mxu0 0.0
  %6225 = vmatprep.subr.mxu0 0.0
  %6226 = vmatpush1.msra.mxu0 0.0
  %6227 = vmatprep.subr.mxu0 0.0
  %6228 = vmatpush1.msra.mxu0 0.0
  %6229 = vmatprep.subr.mxu0 0.0
  %6230 = vmatpush1.msra.mxu0 0.0
  %6231 = vmatprep.subr.mxu0 0.0
  %6232 = vmatpush1.msra.mxu0 0.0
  %6233 = vmatprep.subr.mxu0 0.0
  %6234 = vmatpush1.msra.mxu0 0.0
  %6235 = vmatprep.subr.mxu0 0.0
  %6236 = vmatpush1.msra.mxu0 0.0
  %6237 = vmatprep.subr.mxu0 0.0
  %6238 = vmatpush1.msra.mxu0 0.0
  %6239 = vmatprep.subr.mxu0 0.0
  %6240 = vmatpush1.msra.mxu0 0.0
  %6241 = vmatprep.subr.mxu0 0.0
  %6242 = vmatpush1.msra.mxu0 0.0
  %6243 = vmatprep.subr.mxu0 0.0
  %6244 = vmatpush1.msra.mxu0 0.0
  %6245 = vmatprep.subr.mxu0 0.0
  %6246 = vmatpush1.msra.mxu0 0.0
  %6247 = vmatprep.subr.mxu0 0.0
  %6248 = vmatpush1.msra.mxu0 0.0
  %6249 = vmatprep.subr.mxu0 0.0
  %6250 = vmatpush1.msra.mxu0 0.0
  %6251 = vmatprep.subr.mxu0 0.0
  %6252 = vmatpush1.msra.mxu0 0.0
  %6253 = vmatprep.subr.mxu0 0.0
  %6254 = vmatpush1.msra.mxu0 0.0
  %6255 = vmatprep.subr.mxu0 0.0
  %6256 = vmatpush1.msra.mxu0 0.0
  %6257 = vmatprep.mubr.f32.mxu0 0.0
  %6258 = vmatmul.mubr.f32.gmra.mrb[0].mxu0 %v6170
  %v6259 = vpop.f32.mrb[0].mxu0
  %v6260 = vadd.f32 0.0, %v6259
  %v6261 = vpop.f32.mrb[0].mxu0
  %6262 = vmatprep.mubr.f32.mxu0 0.0
  %6263 = vmatmul.mubr.f32.gmra.mrb[0].mxu0 %v6173
  %v6264 = vpop.f32.mrb[0].mxu0
  %v6265 = vadd.f32 0.0, %v6264
  %v6266 = vpop.f32.mrb[0].mxu0
  %6267 = vmatprep.mubr.f32.mxu0 0.0
  %6268 = vmatmul.mubr.f32.gmra.mrb[0].mxu0 %v6176
  %v6269 = vpop.f32.mrb[0].mxu0
  %v6270 = vadd.f32 0.0, %v6269
  %v6271 = vpop.f32.mrb[0].mxu0
  %6272 = vmatprep.mubr.f32.mxu0 0.0
  %6273 = vmatmul.mubr.f32.gmra.mrb[0].mxu0 %v6179
  %v6274 = vpop.f32.mrb[0].mxu0
  %v6275 = vadd.f32 0.0, %v6274
  %v6276 = vpop.f32.mrb[0].mxu0
  %6277 = vmatprep.mubr.f32.mxu0 0.0
  %6278 = vmatmul.mubr.f32.gmra.mrb[0].mxu0 %v6182
  %v6279 = vpop.f32.mrb[0].mxu0
  %v6280 = vadd.f32 0.0, %v6279
  %v6281 = vpop.f32.mrb[0].mxu0
  %6282 = vmatprep.mubr.f32.mxu0 0.0
  %6283 = vmatmul.mubr.f32.gmra.mrb[0].mxu0 %v6185
  %v6284 = vpop.f32.mrb[0].mxu0
  %v6285 = vadd.f32 0.0, %v6284
  %v6286 = vpop.f32.mrb[0].mxu0
  %6287 = vmatprep.mubr.f32.mxu0 0.0
  %6288 = vmatmul.mubr.f32.gmra.mrb[0].mxu0 %v6188
  %v6289 = vpop.f32.mrb[0].mxu0
  %v6290 = vadd.f32 0.0, %v6289
  %v6291 = vpop.f32.mrb[0].mxu0
  %6292 = vmatprep.mubr.f32.mxu0 0.0
  %6293 = vmatmul.mubr.f32.gmra.mrb[0].mxu0 %v6191
  %v6294 = vpop.f32.mrb[0].mxu0
  %v6295 = vadd.f32 0.0, %v6294
  %v6296 = vpop.f32.mrb[0].mxu0
  %6297 = vdwg.mxu0
  %v6307 = vsel %vm685, %v5897, 0
  %v6310 = vsel %vm685, %v5899, 0
  %v6313 = vsel %vm685, %v5901, 0
  %v6316 = vsel %vm685, %v5903, 0
  %v6319 = vsel %vm685, %v5905, 0
  %v6322 = vsel %vm685, %v5907, 0
  %v6325 = vsel %vm685, %v5909, 0
  %v6328 = vsel %vm685, %v5911, 0
  %6330 = vmatprep.subr.mxu0 0.0
  %6331 = vmatpush1.msra.mxu0 %v5415
  %6332 = vmatprep.subr.mxu0 0.0
  %6333 = vmatpush1.msra.mxu0 %v5417
  %6334 = vmatprep.subr.mxu0 0.0
  %6335 = vmatpush1.msra.mxu0 %v5419
  %6336 = vmatprep.subr.mxu0 0.0
  %6337 = vmatpush1.msra.mxu0 %v5421
  %6338 = vmatprep.subr.mxu0 0.0
  %6339 = vmatpush1.msra.mxu0 %v5423
  %6340 = vmatprep.subr.mxu0 0.0
  %6341 = vmatpush1.msra.mxu0 %v5425
  %6342 = vmatprep.subr.mxu0 0.0
  %6343 = vmatpush1.msra.mxu0 %v5427
  %6344 = vmatprep.subr.mxu0 0.0
  %6345 = vmatpush1.msra.mxu0 %v5429
  %6346 = vmatprep.subr.mxu0 0.0
  %6347 = vmatpush1.msra.mxu0 0.0
  %6348 = vmatprep.subr.mxu0 0.0
  %6349 = vmatpush1.msra.mxu0 0.0
  %6350 = vmatprep.subr.mxu0 0.0
  %6351 = vmatpush1.msra.mxu0 0.0
  %6352 = vmatprep.subr.mxu0 0.0
  %6353 = vmatpush1.msra.mxu0 0.0
  %6354 = vmatprep.subr.mxu0 0.0
  %6355 = vmatpush1.msra.mxu0 0.0
  %6356 = vmatprep.subr.mxu0 0.0
  %6357 = vmatpush1.msra.mxu0 0.0
  %6358 = vmatprep.subr.mxu0 0.0
  %6359 = vmatpush1.msra.mxu0 0.0
  %6360 = vmatprep.subr.mxu0 0.0
  %6361 = vmatpush1.msra.mxu0 0.0
  %6362 = vmatprep.subr.mxu0 0.0
  %6363 = vmatpush1.msra.mxu0 0.0
  %6364 = vmatprep.subr.mxu0 0.0
  %6365 = vmatpush1.msra.mxu0 0.0
  %6366 = vmatprep.subr.mxu0 0.0
  %6367 = vmatpush1.msra.mxu0 0.0
  %6368 = vmatprep.subr.mxu0 0.0
  %6369 = vmatpush1.msra.mxu0 0.0
  %6370 = vmatprep.subr.mxu0 0.0
  %6371 = vmatpush1.msra.mxu0 0.0
  %6372 = vmatprep.subr.mxu0 0.0
  %6373 = vmatpush1.msra.mxu0 0.0
  %6374 = vmatprep.subr.mxu0 0.0
  %6375 = vmatpush1.msra.mxu0 0.0
  %6376 = vmatprep.subr.mxu0 0.0
  %6377 = vmatpush1.msra.mxu0 0.0
  %6378 = vmatprep.subr.mxu0 0.0
  %6379 = vmatpush1.msra.mxu0 0.0
  %6380 = vmatprep.subr.mxu0 0.0
  %6381 = vmatpush1.msra.mxu0 0.0
  %6382 = vmatprep.subr.mxu0 0.0
  %6383 = vmatpush1.msra.mxu0 0.0
  %6384 = vmatprep.subr.mxu0 0.0
  %6385 = vmatpush1.msra.mxu0 0.0
  %6386 = vmatprep.subr.mxu0 0.0
  %6387 = vmatpush1.msra.mxu0 0.0
  %6388 = vmatprep.subr.mxu0 0.0
  %6389 = vmatpush1.msra.mxu0 0.0
  %6390 = vmatprep.subr.mxu0 0.0
  %6391 = vmatpush1.msra.mxu0 0.0
  %6392 = vmatprep.subr.mxu0 0.0
  %6393 = vmatpush1.msra.mxu0 0.0
  %6394 = vmatprep.mubr.f32.mxu0 0.0
  %6395 = vmatmul.mubr.f32.gmra.mrb[0].mxu0 %v6307
  %v6396 = vpop.f32.mrb[0].mxu0
  %v6397 = vadd.f32 0.0, %v6396
  %v6398 = vpop.f32.mrb[0].mxu0
  %6399 = vmatprep.mubr.f32.mxu0 0.0
  %6400 = vmatmul.mubr.f32.gmra.mrb[0].mxu0 %v6310
  %v6401 = vpop.f32.mrb[0].mxu0
  %v6402 = vadd.f32 0.0, %v6401
  %v6403 = vpop.f32.mrb[0].mxu0
  %6404 = vmatprep.mubr.f32.mxu0 0.0
  %6405 = vmatmul.mubr.f32.gmra.mrb[0].mxu0 %v6313
  %v6406 = vpop.f32.mrb[0].mxu0
  %v6407 = vadd.f32 0.0, %v6406
  %v6408 = vpop.f32.mrb[0].mxu0
  %6409 = vmatprep.mubr.f32.mxu0 0.0
  %6410 = vmatmul.mubr.f32.gmra.mrb[0].mxu0 %v6316
  %v6411 = vpop.f32.mrb[0].mxu0
  %v6412 = vadd.f32 0.0, %v6411
  %v6413 = vpop.f32.mrb[0].mxu0
  %6414 = vmatprep.mubr.f32.mxu0 0.0
  %6415 = vmatmul.mubr.f32.gmra.mrb[0].mxu0 %v6319
  %v6416 = vpop.f32.mrb[0].mxu0
  %v6417 = vadd.f32 0.0, %v6416
  %v6418 = vpop.f32.mrb[0].mxu0
  %6419 = vmatprep.mubr.f32.mxu0 0.0
  %6420 = vmatmul.mubr.f32.gmra.mrb[0].mxu0 %v6322
  %v6421 = vpop.f32.mrb[0].mxu0
  %v6422 = vadd.f32 0.0, %v6421
  %v6423 = vpop.f32.mrb[0].mxu0
  %6424 = vmatprep.mubr.f32.mxu0 0.0
  %6425 = vmatmul.mubr.f32.gmra.mrb[0].mxu0 %v6325
  %v6426 = vpop.f32.mrb[0].mxu0
  %v6427 = vadd.f32 0.0, %v6426
  %v6428 = vpop.f32.mrb[0].mxu0
  %6429 = vmatprep.mubr.f32.mxu0 0.0
  %6430 = vmatmul.mubr.f32.gmra.mrb[0].mxu0 %v6328
  %v6431 = vpop.f32.mrb[0].mxu0
  %v6432 = vadd.f32 0.0, %v6431
  %v6433 = vpop.f32.mrb[0].mxu0
  %6434 = vdwg.mxu0
  %v6444 = vsel %vm685, %v5913, 0
  %v6447 = vsel %vm685, %v5915, 0
  %v6450 = vsel %vm685, %v5917, 0
  %v6453 = vsel %vm685, %v5919, 0
  %v6456 = vsel %vm685, %v5921, 0
  %v6459 = vsel %vm685, %v5923, 0
  %v6462 = vsel %vm685, %v5925, 0
  %v6465 = vsel %vm685, %v5927, 0
  %6467 = vmatprep.subr.mxu0 0.0
  %6468 = vmatpush1.msra.mxu0 %v5584
  %6469 = vmatprep.subr.mxu0 0.0
  %6470 = vmatpush1.msra.mxu0 %v5586
  %6471 = vmatprep.subr.mxu0 0.0
  %6472 = vmatpush1.msra.mxu0 %v5588
  %6473 = vmatprep.subr.mxu0 0.0
  %6474 = vmatpush1.msra.mxu0 %v5590
  %6475 = vmatprep.subr.mxu0 0.0
  %6476 = vmatpush1.msra.mxu0 %v5592
  %6477 = vmatprep.subr.mxu0 0.0
  %6478 = vmatpush1.msra.mxu0 %v5594
  %6479 = vmatprep.subr.mxu0 0.0
  %6480 = vmatpush1.msra.mxu0 %v5596
  %6481 = vmatprep.subr.mxu0 0.0
  %6482 = vmatpush1.msra.mxu0 %v5598
  %6483 = vmatprep.subr.mxu0 0.0
  %6484 = vmatpush1.msra.mxu0 0.0
  %6485 = vmatprep.subr.mxu0 0.0
  %6486 = vmatpush1.msra.mxu0 0.0
  %6487 = vmatprep.subr.mxu0 0.0
  %6488 = vmatpush1.msra.mxu0 0.0
  %6489 = vmatprep.subr.mxu0 0.0
  %6490 = vmatpush1.msra.mxu0 0.0
  %6491 = vmatprep.subr.mxu0 0.0
  %6492 = vmatpush1.msra.mxu0 0.0
  %6493 = vmatprep.subr.mxu0 0.0
  %6494 = vmatpush1.msra.mxu0 0.0
  %6495 = vmatprep.subr.mxu0 0.0
  %6496 = vmatpush1.msra.mxu0 0.0
  %6497 = vmatprep.subr.mxu0 0.0
  %6498 = vmatpush1.msra.mxu0 0.0
  %6499 = vmatprep.subr.mxu0 0.0
  %6500 = vmatpush1.msra.mxu0 0.0
  %6501 = vmatprep.subr.mxu0 0.0
  %6502 = vmatpush1.msra.mxu0 0.0
  %6503 = vmatprep.subr.mxu0 0.0
  %6504 = vmatpush1.msra.mxu0 0.0
  %6505 = vmatprep.subr.mxu0 0.0
  %6506 = vmatpush1.msra.mxu0 0.0
  %6507 = vmatprep.subr.mxu0 0.0
  %6508 = vmatpush1.msra.mxu0 0.0
  %6509 = vmatprep.subr.mxu0 0.0
  %6510 = vmatpush1.msra.mxu0 0.0
  %6511 = vmatprep.subr.mxu0 0.0
  %6512 = vmatpush1.msra.mxu0 0.0
  %6513 = vmatprep.subr.mxu0 0.0
  %6514 = vmatpush1.msra.mxu0 0.0
  %6515 = vmatprep.subr.mxu0 0.0
  %6516 = vmatpush1.msra.mxu0 0.0
  %6517 = vmatprep.subr.mxu0 0.0
  %6518 = vmatpush1.msra.mxu0 0.0
  %6519 = vmatprep.subr.mxu0 0.0
  %6520 = vmatpush1.msra.mxu0 0.0
  %6521 = vmatprep.subr.mxu0 0.0
  %6522 = vmatpush1.msra.mxu0 0.0
  %6523 = vmatprep.subr.mxu0 0.0
  %6524 = vmatpush1.msra.mxu0 0.0
  %6525 = vmatprep.subr.mxu0 0.0
  %6526 = vmatpush1.msra.mxu0 0.0
  %6527 = vmatprep.subr.mxu0 0.0
  %6528 = vmatpush1.msra.mxu0 0.0
  %6529 = vmatprep.subr.mxu0 0.0
  %6530 = vmatpush1.msra.mxu0 0.0
  %6531 = vmatprep.mubr.f32.mxu0 0.0
  %6532 = vmatmul.mubr.f32.gmra.mrb[0].mxu0 %v6444
  %v6533 = vpop.f32.mrb[0].mxu0
  %v6534 = vadd.f32 0.0, %v6533
  %v6535 = vpop.f32.mrb[0].mxu0
  %6536 = vmatprep.mubr.f32.mxu0 0.0
  %6537 = vmatmul.mubr.f32.gmra.mrb[0].mxu0 %v6447
  %v6538 = vpop.f32.mrb[0].mxu0
  %v6539 = vadd.f32 0.0, %v6538
  %v6540 = vpop.f32.mrb[0].mxu0
  %6541 = vmatprep.mubr.f32.mxu0 0.0
  %6542 = vmatmul.mubr.f32.gmra.mrb[0].mxu0 %v6450
  %v6543 = vpop.f32.mrb[0].mxu0
  %v6544 = vadd.f32 0.0, %v6543
  %v6545 = vpop.f32.mrb[0].mxu0
  %6546 = vmatprep.mubr.f32.mxu0 0.0
  %6547 = vmatmul.mubr.f32.gmra.mrb[0].mxu0 %v6453
  %v6548 = vpop.f32.mrb[0].mxu0
  %v6549 = vadd.f32 0.0, %v6548
  %v6550 = vpop.f32.mrb[0].mxu0
  %6551 = vmatprep.mubr.f32.mxu0 0.0
  %6552 = vmatmul.mubr.f32.gmra.mrb[0].mxu0 %v6456
  %v6553 = vpop.f32.mrb[0].mxu0
  %v6554 = vadd.f32 0.0, %v6553
  %v6555 = vpop.f32.mrb[0].mxu0
  %6556 = vmatprep.mubr.f32.mxu0 0.0
  %6557 = vmatmul.mubr.f32.gmra.mrb[0].mxu0 %v6459
  %v6558 = vpop.f32.mrb[0].mxu0
  %v6559 = vadd.f32 0.0, %v6558
  %v6560 = vpop.f32.mrb[0].mxu0
  %6561 = vmatprep.mubr.f32.mxu0 0.0
  %6562 = vmatmul.mubr.f32.gmra.mrb[0].mxu0 %v6462
  %v6563 = vpop.f32.mrb[0].mxu0
  %v6564 = vadd.f32 0.0, %v6563
  %v6565 = vpop.f32.mrb[0].mxu0
  %6566 = vmatprep.mubr.f32.mxu0 0.0
  %6567 = vmatmul.mubr.f32.gmra.mrb[0].mxu0 %v6465
  %v6568 = vpop.f32.mrb[0].mxu0
  %v6569 = vadd.f32 0.0, %v6568
  %v6570 = vpop.f32.mrb[0].mxu0
  %6571 = vdwg.mxu0
  %v6572 = vrcp.pop %v5930
  %v6573 = vrcp.pop %v5933
  %v6574 = vrcp.pop %v5936
  %v6575 = vrcp.pop %v5939
  %v6576 = vrcp.pop %v5942
  %v6577 = vrcp.pop %v5945
  %v6578 = vrcp.pop %v5948
  %v6579 = vrcp.pop %v5951
  %v6580 = vrcp.pop %v5954
  %v6581 = vrcp.pop %v5957
  %v6582 = vrcp.pop %v5960
  %v6583 = vrcp.pop %v5963
  %v6584 = vrcp.pop %v5966
  %v6585 = vrcp.pop %v5969
  %v6586 = vrcp.pop %v5972
  %v6587 = vrcp.pop %v5975
  %v6588 = vrcp.pop %v5978
  %v6589 = vrcp.pop %v5981
  %v6590 = vrcp.pop %v5984
  %v6591 = vrcp.pop %v5987
  %v6592 = vrcp.pop %v5990
  %v6593 = vrcp.pop %v5993
  %v6594 = vrcp.pop %v5996
  %v6595 = vrcp.pop %v5999
  %v6596 = vrcp.pop %v6002
  %v6597 = vrcp.pop %v6005
  %v6598 = vrcp.pop %v6008
  %v6599 = vrcp.pop %v6011
  %v6600 = vrcp.pop %v6014
  %v6601 = vrcp.pop %v6017
  %v6602 = vrcp.pop %v6020
  %v6603 = vrcp.pop %v6023
  %v6604 = vmul.f32 %v6123, %v6572
  %v6605 = vmul.f32 %v6128, %v6573
  %v6606 = vmul.f32 %v6133, %v6574
  %v6607 = vmul.f32 %v6138, %v6575
  %v6608 = vmul.f32 %v6143, %v6576
  %v6609 = vmul.f32 %v6148, %v6577
  %v6610 = vmul.f32 %v6153, %v6578
  %v6611 = vmul.f32 %v6158, %v6579
  %v6612 = vmul.f32 %v6260, %v6580
  %v6613 = vmul.f32 %v6265, %v6581
  %v6614 = vmul.f32 %v6270, %v6582
  %v6615 = vmul.f32 %v6275, %v6583
  %v6616 = vmul.f32 %v6280, %v6584
  %v6617 = vmul.f32 %v6285, %v6585
  %v6618 = vmul.f32 %v6290, %v6586
  %v6619 = vmul.f32 %v6295, %v6587
  %v6620 = vmul.f32 %v6397, %v6588
  %v6621 = vmul.f32 %v6402, %v6589
  %v6622 = vmul.f32 %v6407, %v6590
  %v6623 = vmul.f32 %v6412, %v6591
  %v6624 = vmul.f32 %v6417, %v6592
  %v6625 = vmul.f32 %v6422, %v6593
  %v6626 = vmul.f32 %v6427, %v6594
  %v6627 = vmul.f32 %v6432, %v6595
  %v6628 = vmul.f32 %v6534, %v6596
  %v6629 = vmul.f32 %v6539, %v6597
  %v6630 = vmul.f32 %v6544, %v6598
  %v6631 = vmul.f32 %v6549, %v6599
  %v6632 = vmul.f32 %v6554, %v6600
  %v6633 = vmul.f32 %v6559, %v6601
  %v6634 = vmul.f32 %v6564, %v6602
  %v6635 = vmul.f32 %v6569, %v6603
  %6668 = vrot.lane.b32.xlu0 %v6604, 24
  %v6669 = vpop.permute.xlu0 %6668
  %6670 = vrot.lane.b32.xlu0 %v6605, 24
  %v6671 = vpop.permute.xlu0 %6670
  %6672 = vrot.lane.b32.xlu0 %v6606, 24
  %v6673 = vpop.permute.xlu0 %6672
  %6674 = vrot.lane.b32.xlu0 %v6607, 24
  %v6675 = vpop.permute.xlu0 %6674
  %6676 = vrot.lane.b32.xlu0 %v6608, 24
  %v6677 = vpop.permute.xlu0 %6676
  %6678 = vrot.lane.b32.xlu0 %v6609, 24
  %v6679 = vpop.permute.xlu0 %6678
  %6680 = vrot.lane.b32.xlu0 %v6610, 24
  %v6681 = vpop.permute.xlu0 %6680
  %6682 = vrot.lane.b32.xlu0 %v6611, 24
  %v6683 = vpop.permute.xlu0 %6682
  %6684 = vrot.lane.b32.xlu0 %v6612, 24
  %v6685 = vpop.permute.xlu0 %6684
  %6686 = vrot.lane.b32.xlu0 %v6613, 24
  %v6687 = vpop.permute.xlu0 %6686
  %6688 = vrot.lane.b32.xlu0 %v6614, 24
  %v6689 = vpop.permute.xlu0 %6688
  %6690 = vrot.lane.b32.xlu0 %v6615, 24
  %v6691 = vpop.permute.xlu0 %6690
  %6692 = vrot.lane.b32.xlu0 %v6616, 24
  %v6693 = vpop.permute.xlu0 %6692
  %6694 = vrot.lane.b32.xlu0 %v6617, 24
  %v6695 = vpop.permute.xlu0 %6694
  %6696 = vrot.lane.b32.xlu0 %v6618, 24
  %v6697 = vpop.permute.xlu0 %6696
  %6698 = vrot.lane.b32.xlu0 %v6619, 24
  %v6699 = vpop.permute.xlu0 %6698
  %6700 = vrot.lane.b32.xlu0 %v6620, 24
  %v6701 = vpop.permute.xlu0 %6700
  %6702 = vrot.lane.b32.xlu0 %v6621, 24
  %v6703 = vpop.permute.xlu0 %6702
  %6704 = vrot.lane.b32.xlu0 %v6622, 24
  %v6705 = vpop.permute.xlu0 %6704
  %6706 = vrot.lane.b32.xlu0 %v6623, 24
  %v6707 = vpop.permute.xlu0 %6706
  %6708 = vrot.lane.b32.xlu0 %v6624, 24
  %v6709 = vpop.permute.xlu0 %6708
  %6710 = vrot.lane.b32.xlu0 %v6625, 24
  %v6711 = vpop.permute.xlu0 %6710
  %6712 = vrot.lane.b32.xlu0 %v6626, 24
  %v6713 = vpop.permute.xlu0 %6712
  %6714 = vrot.lane.b32.xlu0 %v6627, 24
  %v6715 = vpop.permute.xlu0 %6714
  %6716 = vrot.lane.b32.xlu0 %v6628, 24
  %v6717 = vpop.permute.xlu0 %6716
  %6718 = vrot.lane.b32.xlu0 %v6629, 24
  %v6719 = vpop.permute.xlu0 %6718
  %6720 = vrot.lane.b32.xlu0 %v6630, 24
  %v6721 = vpop.permute.xlu0 %6720
  %6722 = vrot.lane.b32.xlu0 %v6631, 24
  %v6723 = vpop.permute.xlu0 %6722
  %6724 = vrot.lane.b32.xlu0 %v6632, 24
  %v6725 = vpop.permute.xlu0 %6724
  %6726 = vrot.lane.b32.xlu0 %v6633, 24
  %v6727 = vpop.permute.xlu0 %6726
  %6728 = vrot.lane.b32.xlu0 %v6634, 24
  %v6729 = vpop.permute.xlu0 %6728
  %6730 = vrot.lane.b32.xlu0 %v6635, 24
  %v6731 = vpop.permute.xlu0 %6730
  %vm6764 = vcmask 261312
  %6765 = vst.msk [vmem:[%s1] sm:$0xff] %vm6764, %v6669
  %6766 = vst.msk [vmem:[%s1 + $0x8] sm:$0xff] %vm6764, %v6671
  %6767 = vst.msk [vmem:[%s1 + $0x10] sm:$0xff] %vm6764, %v6673
  %6768 = vst.msk [vmem:[%s1 + $0x18] sm:$0xff] %vm6764, %v6675
  %6769 = vst.msk [vmem:[%s1 + $0x20] sm:$0xff] %vm6764, %v6677
  %6770 = vst.msk [vmem:[%s1 + $0x28] sm:$0xff] %vm6764, %v6679
  %6771 = vst.msk [vmem:[%s1 + $0x30] sm:$0xff] %vm6764, %v6681
  %6772 = vst.msk [vmem:[%s1 + $0x38] sm:$0xff] %vm6764, %v6683
  %6773 = vst.msk [vmem:[%s1 + $0x40] sm:$0xff] %vm6764, %v6685
  %6774 = vst.msk [vmem:[%s1 + $0x48] sm:$0xff] %vm6764, %v6687
  %6775 = vst.msk [vmem:[%s1 + $0x50] sm:$0xff] %vm6764, %v6689
  %6776 = vst.msk [vmem:[%s1 + $0x58] sm:$0xff] %vm6764, %v6691
  %6777 = vst.msk [vmem:[%s1 + $0x60] sm:$0xff] %vm6764, %v6693
  %6778 = vst.msk [vmem:[%s1 + $0x68] sm:$0xff] %vm6764, %v6695
  %6779 = vst.msk [vmem:[%s1 + $0x70] sm:$0xff] %vm6764, %v6697
  %6780 = vst.msk [vmem:[%s1 + $0x78] sm:$0xff] %vm6764, %v6699
  %6781 = vst.msk [vmem:[%s1 + $0x80] sm:$0xff] %vm6764, %v6701
  %6782 = vst.msk [vmem:[%s1 + $0x88] sm:$0xff] %vm6764, %v6703
  %6783 = vst.msk [vmem:[%s1 + $0x90] sm:$0xff] %vm6764, %v6705
  %6784 = vst.msk [vmem:[%s1 + $0x98] sm:$0xff] %vm6764, %v6707
  %6785 = vst.msk [vmem:[%s1 + $0xa0] sm:$0xff] %vm6764, %v6709
  %6786 = vst.msk [vmem:[%s1 + $0xa8] sm:$0xff] %vm6764, %v6711
  %6787 = vst.msk [vmem:[%s1 + $0xb0] sm:$0xff] %vm6764, %v6713
  %6788 = vst.msk [vmem:[%s1 + $0xb8] sm:$0xff] %vm6764, %v6715
  %6789 = vst.msk [vmem:[%s1 + $0xc0] sm:$0xff] %vm6764, %v6717
  %6790 = vst.msk [vmem:[%s1 + $0xc8] sm:$0xff] %vm6764, %v6719
  %6791 = vst.msk [vmem:[%s1 + $0xd0] sm:$0xff] %vm6764, %v6721
  %6792 = vst.msk [vmem:[%s1 + $0xd8] sm:$0xff] %vm6764, %v6723
  %6793 = vst.msk [vmem:[%s1 + $0xe0] sm:$0xff] %vm6764, %v6725
  %6794 = vst.msk [vmem:[%s1 + $0xe8] sm:$0xff] %vm6764, %v6727
  %6795 = vst.msk [vmem:[%s1 + $0xf0] sm:$0xff] %vm6764, %v6729
  %6796 = vst.msk [vmem:[%s1 + $0xf8] sm:$0xff] %vm6764, %v6731
  // Predicated region
  $region6: #{tpu_custom_call.1} parent=0 // pred_check
    _
  $region7: #{tpu_custom_call.1} parent=0 // pred_check_branch
    %6798 = sbr.rel (0) target = $region9
  $region8: #{tpu_custom_call.1} parent=0 // pred_region
    _
  $region9: #{tpu_custom_call.1} parent=0 // pred_fallthru
    _
  // Predicated region
  $region10: #{tpu_custom_call.1} parent=0 // pred_check
    _
  $region11: #{tpu_custom_call.1} parent=0 // pred_check_branch
    %6800 = sbr.rel (0) target = $region13
  $region12: #{tpu_custom_call.1} parent=0 // pred_region
    _
  $region13: #{tpu_custom_call.1} parent=0 // pred_fallthru
    _

</llo_original>
